<compile_context>
chip_gen: v6e
topology: v6e:2x2x1
jax: 0.10.0
libtpu: 0.0.40
codegen_flags: <defaults>
</compile_context>

<pallas_src>
import functools

import jax
import jax.numpy as jnp
from jax.experimental import pallas as pl
from jax.experimental.pallas import tpu as pltpu

LANE = 128                     # TPU lane width; matmul output dims padded to this
_VMEM_LIMIT = 32 * 1024 * 1024  # explicit scoped-VMEM limit (safe on v5e/v6e/v7x)


def _round_up(x, m):
    return (x + m - 1) // m * m


def _compiler_params():
    return pltpu.CompilerParams(
        dimension_semantics=("parallel",),       # shard M across TCs (v7x megacore)
        vmem_limit_bytes=_VMEM_LIMIT,
    )


# ----------------------------------------------------------------------------
# Pallas kernels
# ----------------------------------------------------------------------------
def _matmul_bias_act_kernel(x_ref, w_ref, b_ref, o_ref, *, relu: bool):
    """o = relu?(x @ w + b).  x:(TM,K)  w:(K,Np)  b:(1,Np)  o:(TM,Np); f32 acc."""
    y = jnp.dot(x_ref[...], w_ref[...], preferred_element_type=jnp.float32)
    y = y + b_ref[...]
    if relu:
        y = jnp.maximum(y, 0.0)
    o_ref[...] = y


def _maxpool4_kernel(x_ref, o_ref):
    """x:(TM,4,C) where axis 1 enumerates the 2x2 pooling window; o:(TM,C)."""
    o_ref[...] = jnp.max(x_ref[...], axis=1)


def _fc_fused_kernel(x_ref, w1_ref, b1_ref, w2_ref, b2_ref, w3_ref, b3_ref, o_ref):
    """fc3(relu(fc2(relu(fc1(x))))) in one kernel; intermediates never leave VMEM."""
    h = jnp.dot(x_ref[...], w1_ref[...], preferred_element_type=jnp.float32) + b1_ref[...]
    h = jnp.maximum(h, 0.0)
    h = jnp.dot(h, w2_ref[...], preferred_element_type=jnp.float32) + b2_ref[...]
    h = jnp.maximum(h, 0.0)
    o_ref[...] = jnp.dot(h, w3_ref[...], preferred_element_type=jnp.float32) + b3_ref[...]


# ----------------------------------------------------------------------------
# Pallas wrappers (row-gridded, lane-dense)
# ----------------------------------------------------------------------------
def matmul_bias_act(x, w, b, *, relu: bool, tm: int = 512):
    """relu?(x @ w + b), gridded over rows; w/b stay resident across the grid."""
    M, K = x.shape
    Np = w.shape[1]
    Mp = _round_up(M, 8)
    if Mp != M:
        x = jnp.pad(x, ((0, Mp - M), (0, 0)))
    tm = min(tm, Mp)
    out = pl.pallas_call(
        functools.partial(_matmul_bias_act_kernel, relu=relu),
        out_shape=jax.ShapeDtypeStruct((Mp, Np), jnp.float32),
        grid=(pl.cdiv(Mp, tm),),
        in_specs=[pl.BlockSpec((tm, K), lambda i: (i, 0)),
                  pl.BlockSpec((K, Np), lambda i: (0, 0)),
                  pl.BlockSpec((1, Np), lambda i: (0, 0))],
        out_specs=pl.BlockSpec((tm, Np), lambda i: (i, 0)),
        compiler_params=_compiler_params(),
    )(x, w, b)
    return out[:M] if Mp != M else out


def maxpool4(x, *, tm: int = 256):
    """Max over axis 1 of (M, 4, C): one lane-dense Pallas reduce, gridded over M."""
    M, four, C = x.shape
    Mp = _round_up(M, 8)
    if Mp != M:
        x = jnp.pad(x, ((0, Mp - M), (0, 0), (0, 0)))
    tm = min(tm, Mp)
    out = pl.pallas_call(
        _maxpool4_kernel,
        out_shape=jax.ShapeDtypeStruct((Mp, C), jnp.float32),
        grid=(pl.cdiv(Mp, tm),),
        in_specs=[pl.BlockSpec((tm, four, C), lambda i: (i, 0, 0))],
        out_specs=pl.BlockSpec((tm, C), lambda i: (i, 0)),
        compiler_params=_compiler_params(),
    )(x)
    return out[:M] if Mp != M else out


def fc_fused(x, w1, b1, w2, b2, w3, b3, *, tm: int = 256):
    """All three FC layers in a single pallas_call; only x and logits cross HBM."""
    M, K = x.shape
    Np = w3.shape[1]
    Mp = _round_up(M, 8)
    if Mp != M:
        x = jnp.pad(x, ((0, Mp - M), (0, 0)))
    tm = min(tm, Mp)
    full = lambda i: (0, 0)
    out = pl.pallas_call(
        _fc_fused_kernel,
        out_shape=jax.ShapeDtypeStruct((Mp, Np), jnp.float32),
        grid=(pl.cdiv(Mp, tm),),
        in_specs=[pl.BlockSpec((tm, K), lambda i: (i, 0)),
                  pl.BlockSpec(w1.shape, full), pl.BlockSpec(b1.shape, full),
                  pl.BlockSpec(w2.shape, full), pl.BlockSpec(b2.shape, full),
                  pl.BlockSpec(w3.shape, full), pl.BlockSpec(b3.shape, full)],
        out_specs=pl.BlockSpec((tm, Np), lambda i: (i, 0)),
        compiler_params=_compiler_params(),
    )(x, w1, b1, w2, b2, w3, b3)
    return out[:M] if Mp != M else out


# ----------------------------------------------------------------------------
# Layer glue (reshapes / im2col stay in plain JAX)
# ----------------------------------------------------------------------------
def conv_relu_pool(x_nhwc, w_flat, b_pad, KH=5, KW=5):
    """VALID conv (stride 1) + bias + ReLU + 2x2/stride-2 max pool.

    w_flat: (KH*KW*Cin, 128) bf16, feature order (ky, kx, cin), Cout zero-padded.
    Returns (N, Hp, Wp, 128) with only the first true-Cout channels meaningful.
    """
    N, H, W, Cin = x_nhwc.shape
    Ho, Wo = H - KH + 1, W - KW + 1
    Hp, Wp = Ho // 2, Wo // 2
    CP = w_flat.shape[1]

    # im2col in (ky, kx, cin) feature order -> no transpose of the big patch
    # tensor; the (tiny) weight was pre-transposed to match instead.
    # TODO(synk): fuse the im2col gather into the Pallas kernel (accumulate the
    # KH*KW shifted dots from an NHWC tile held in VMEM) to remove the KH*KW x
    # HBM expansion of the activations entirely.
    xb = x_nhwc.astype(jnp.bfloat16)     # bf16 MXU inputs; f32 accumulate in-kernel
    cols = [xb[:, ky:ky + Ho, kx:kx + Wo, :]
            for ky in range(KH) for kx in range(KW)]
    p = jnp.stack(cols, axis=3).reshape(N * Ho * Wo, KH * KW * Cin)

    y = matmul_bias_act(p, w_flat, b_pad, relu=True)             # (N*Ho*Wo, CP) f32

    # Regroup each 2x2 pooling window onto a trailing axis of 4 (layout glue),
    # then reduce in one lane-dense Pallas kernel.
    y = y.reshape(N, Hp, 2, Wp, 2, CP)
    y = jnp.transpose(y, (0, 1, 3, 2, 4, 5)).reshape(N * Hp * Wp, 4, CP)
    y = maxpool4(y)                                              # (N*Hp*Wp, CP)
    return y.reshape(N, Hp, Wp, CP)


def prepare_params(params):
    """One-time packing of PyTorch-layout weights into kernel-ready tensors."""
    def conv(w, b):
        cout, cin, kh, kw = w.shape
        # OIHW -> (ky, kx, cin, cout) -> flatten K, pad Cout to 128 lanes, bf16.
        wf = jnp.transpose(w, (2, 3, 1, 0)).reshape(kh * kw * cin, cout)
        wf = jnp.pad(wf, ((0, 0), (0, LANE - cout))).astype(jnp.bfloat16)
        bf = jnp.pad(b, (0, LANE - cout)).astype(jnp.float32).reshape(1, LANE)
        return wf, bf

    def fc(w, b, k_pad):
        nout, kin = w.shape
        # Pre-transpose (y = x @ W.T + b), zero-pad K and N to lane-dense sizes.
        wf = jnp.pad(w.T, ((0, k_pad - kin), (0, LANE - nout))).astype(jnp.float32)
        bf = jnp.pad(b, (0, LANE - nout)).astype(jnp.float32).reshape(1, LANE)
        return wf, bf

    prep = {}
    prep["conv1_w"], prep["conv1_b"] = conv(params["conv1_w"], params["conv1_b"])
    prep["conv2_w"], prep["conv2_b"] = conv(params["conv2_w"], params["conv2_b"])
    prep["fc1_w"], prep["fc1_b"] = fc(params["fc1_w"], params["fc1_b"], 512)   # K 400->512
    prep["fc2_w"], prep["fc2_b"] = fc(params["fc2_w"], params["fc2_b"], LANE)  # K 120->128
    prep["fc3_w"], prep["fc3_b"] = fc(params["fc3_w"], params["fc3_b"], LANE)  # K  84->128
    return prep


def convnet_forward(prep, x_nchw):
    """Pallas implementation of ConvNet.forward. x_nchw: (N, 3, 32, 32) f32."""
    N = x_nchw.shape[0]
    x = jnp.transpose(x_nchw, (0, 2, 3, 1))                      # NCHW -> NHWC

    y = conv_relu_pool(x, prep["conv1_w"], prep["conv1_b"])      # (N,14,14,128); ch 0:6 valid
    y = conv_relu_pool(y[..., :6],
                       prep["conv2_w"], prep["conv2_b"])         # (N,5,5,128);  ch 0:16 valid

    # PyTorch's x.view(-1, 16*5*5) flattens in NCHW order.
    y = jnp.transpose(y[..., :16], (0, 3, 1, 2)).reshape(N, 16 * 5 * 5)
    y = jnp.pad(y, ((0, 0), (0, 512 - 400)))                     # lane-pad K for fc1

    y = fc_fused(y,
                 prep["fc1_w"], prep["fc1_b"],
                 prep["fc2_w"], prep["fc2_b"],
                 prep["fc3_w"], prep["fc3_b"])                   # (N, 128)
    return y[:, :10]


# ----------------------------------------------------------------------------
# Pure-JAX reference (for correctness check)
# ----------------------------------------------------------------------------
def reference_forward(params, x):
    hp = jax.lax.Precision.HIGHEST

    def conv(x, w, b):
        dn = jax.lax.conv_dimension_numbers(x.shape, w.shape, ("NCHW", "OIHW", "NCHW"))
        y = jax.lax.conv_general_dilated(x, w, (1, 1), "VALID",
                                         dimension_numbers=dn, precision=hp)
        return jnp.maximum(y + b[None, :, None, None], 0.0)

    def pool(y):
        return jax.lax.reduce_window(y, -jnp.inf, jax.lax.max,
                                     (1, 1, 2, 2), (1, 1, 2, 2), "VALID")

    y = pool(conv(x, params["conv1_w"], params["conv1_b"]))
    y = pool(conv(y, params["conv2_w"], params["conv2_b"]))
    y = y.reshape(x.shape[0], -1)
    y = jnp.maximum(jnp.dot(y, params["fc1_w"].T, precision=hp) + params["fc1_b"], 0.0)
    y = jnp.maximum(jnp.dot(y, params["fc2_w"].T, precision=hp) + params["fc2_b"], 0.0)
    y = jnp.dot(y, params["fc3_w"].T, precision=hp) + params["fc3_b"]
    return y


# ----------------------------------------------------------------------------
# Deterministic parameter init (shapes match the PyTorch module)
# ----------------------------------------------------------------------------
def init_params(key):
    shapes = {
        "conv1_w": (6, 3, 5, 5),   "conv1_b": (6,),
        "conv2_w": (16, 6, 5, 5),  "conv2_b": (16,),
        "fc1_w": (120, 400),       "fc1_b": (120,),
        "fc2_w": (84, 120),        "fc2_b": (84,),
        "fc3_w": (10, 84),         "fc3_b": (10,),
    }
    fan_in = {"conv1": 3 * 25, "conv2": 6 * 25, "fc1": 400, "fc2": 120, "fc3": 84}
    params = {}
    keys = jax.random.split(key, len(shapes))
    for k, (name, shp) in zip(keys, shapes.items()):
        bound = 1.0 / jnp.sqrt(fan_in[name.split("_")[0]])
        params[name] = jax.random.uniform(k, shp, jnp.float32, -bound, bound)
    return params


# ----------------------------------------------------------------------------
if __name__ == "__main__":
    key = jax.random.PRNGKey(0)
    k_param, k_x = jax.random.split(key)
    params = init_params(k_param)
    prep = prepare_params(params)    # one-time weight packing (pre-transpose/pad/cast)

    # Input consistent with fc1 in_features = 16*5*5  =>  32x32 RGB images.
    x = jax.random.normal(k_x, (2, 3, 32, 32), dtype=jnp.float32)

    out = jax.jit(convnet_forward)(prep, x)
    out = jax.block_until_ready(out)
    assert out.shape == (2, 10), out.shape

    ref = jax.jit(reference_forward)(params, x)
    ref = jax.block_until_ready(ref)
    assert jnp.allclose(out, ref, atol=2e-2, rtol=2e-2), (
        "max abs diff", float(jnp.max(jnp.abs(out - ref))))

    print("KERNEL_OK")
</pallas_src>

<mosaic_0001>
module attributes {stable_mosaic.version = 11 : i64} {
  func.func @_matmul_bias_act_kernel(%arg0: i32, %arg1: memref<512x75xbf16, #tpu.memory_space<vmem>>, %arg2: memref<75x128xbf16, #tpu.memory_space<vmem>>, %arg3: memref<1x128xf32, #tpu.memory_space<vmem>>, %arg4: memref<512x128xf32, #tpu.memory_space<vmem>>) attributes {dimension_semantics = [#tpu.dimension_semantics<parallel>], iteration_bounds = array<i64: 4>, scalar_prefetch = 0 : i64, scratch_operands = 0 : i64, tpu.core_type = #tpu.core_type<tc>, window_params = [{transform_indices = @transform_0, window_bounds = array<i64: 512, 75>}, {pipeline_mode = #tpu.pipeline_mode<synchronous>, transform_indices = @transform_1, window_bounds = array<i64: 75, 128>}, {pipeline_mode = #tpu.pipeline_mode<synchronous>, transform_indices = @transform_2, window_bounds = array<i64: 1, 128>}, {transform_indices = @transform_3, window_bounds = array<i64: 512, 128>}]} {
    %c0 = arith.constant 0 : index
    %c0_0 = arith.constant 0 : index
    %0 = vector.load %arg1[%c0, %c0_0] : memref<512x75xbf16, #tpu.memory_space<vmem>>, vector<512x75xbf16>
    %c0_1 = arith.constant 0 : index
    %c0_2 = arith.constant 0 : index
    %1 = vector.load %arg2[%c0_1, %c0_2] : memref<75x128xbf16, #tpu.memory_space<vmem>>, vector<75x128xbf16>
    %cst = arith.constant dense<0.000000e+00> : vector<512x128xf32>
    %2 = tpu.matmul %0, %1, %cst {dimension_numbers = #tpu.dot_dimension_numbers<[1], [0], [0], [1], [0, 0, 1, 1], [], []>} : vector<512x75xbf16>, vector<75x128xbf16>, vector<512x128xf32> -> vector<512x128xf32>
    %c0_3 = arith.constant 0 : index
    %c0_4 = arith.constant 0 : index
    %3 = vector.load %arg3[%c0_3, %c0_4] : memref<1x128xf32, #tpu.memory_space<vmem>>, vector<1x128xf32>
    %4 = vector.broadcast %3 : vector<1x128xf32> to vector<512x128xf32>
    %5 = arith.addf %2, %4 : vector<512x128xf32>
    %cst_5 = arith.constant 0.000000e+00 : f32
    %6 = vector.broadcast %cst_5 : f32 to vector<512x128xf32>
    %7 = arith.maximumf %5, %6 : vector<512x128xf32>
    %c0_6 = arith.constant 0 : index
    %c0_7 = arith.constant 0 : index
    %8 = vector.load %arg4[%c0_6, %c0_7] : memref<512x128xf32, #tpu.memory_space<vmem>>, vector<512x128xf32>
    tpu.vector_store %arg4[%c0_6, %c0_7], %7 {strides = array<i32>} : memref<512x128xf32, #tpu.memory_space<vmem>>, vector<512x128xf32>,
    return
  }
  func.func @transform_0(%arg0: i32) -> (i32, i32) {
    %c0_i32 = arith.constant 0 : i32
    %c0_i32_0 = arith.constant 0 : i32
    return %arg0, %c0_i32 : i32, i32
  }
  func.func @transform_1(%arg0: i32) -> (i32, i32) {
    %c0_i32 = arith.constant 0 : i32
    %c0_i32_0 = arith.constant 0 : i32
    %c0_i32_1 = arith.constant 0 : i32
    return %c0_i32, %c0_i32_0 : i32, i32
  }
  func.func @transform_2(%arg0: i32) -> (i32, i32) {
    %c0_i32 = arith.constant 0 : i32
    %c0_i32_0 = arith.constant 0 : i32
    %c0_i32_1 = arith.constant 0 : i32
    return %c0_i32, %c0_i32_0 : i32, i32
  }
  func.func @transform_3(%arg0: i32) -> (i32, i32) {
    %c0_i32 = arith.constant 0 : i32
    %c0_i32_0 = arith.constant 0 : i32
    return %arg0, %c0_i32 : i32, i32
  }
}

module attributes {stable_mosaic.version = 11 : i64} {
  func.func @_maxpool4_kernel(%arg0: i32, %arg1: memref<256x4x128xf32, #tpu.memory_space<vmem>>, %arg2: memref<256x128xf32, #tpu.memory_space<vmem>>) attributes {dimension_semantics = [#tpu.dimension_semantics<parallel>], iteration_bounds = array<i64: 2>, scalar_prefetch = 0 : i64, scratch_operands = 0 : i64, tpu.core_type = #tpu.core_type<tc>, window_params = [{transform_indices = @transform_0, window_bounds = array<i64: 256, 4, 128>}, {transform_indices = @transform_1, window_bounds = array<i64: 256, 128>}]} {
    %c0 = arith.constant 0 : index
    %c0_0 = arith.constant 0 : index
    %c0_1 = arith.constant 0 : index
    %0 = vector.load %arg1[%c0, %c0_0, %c0_1] : memref<256x4x128xf32, #tpu.memory_space<vmem>>, vector<256x4x128xf32>
    %cst = arith.constant dense<0xFF800000> : vector<256x128xf32>
    %1 = vector.multi_reduction <maximumf>, %0, %cst [1] : vector<256x4x128xf32> to vector<256x128xf32>
    %c0_2 = arith.constant 0 : index
    %c0_3 = arith.constant 0 : index
    %2 = vector.load %arg2[%c0_2, %c0_3] : memref<256x128xf32, #tpu.memory_space<vmem>>, vector<256x128xf32>
    tpu.vector_store %arg2[%c0_2, %c0_3], %1 {strides = array<i32>} : memref<256x128xf32, #tpu.memory_space<vmem>>, vector<256x128xf32>,
    return
  }
  func.func @transform_0(%arg0: i32) -> (i32, i32, i32) {
    %c0_i32 = arith.constant 0 : i32
    %c0_i32_0 = arith.constant 0 : i32
    %c0_i32_1 = arith.constant 0 : i32
    return %arg0, %c0_i32, %c0_i32_0 : i32, i32, i32
  }
  func.func @transform_1(%arg0: i32) -> (i32, i32) {
    %c0_i32 = arith.constant 0 : i32
    %c0_i32_0 = arith.constant 0 : i32
    return %arg0, %c0_i32 : i32, i32
  }
}

module attributes {stable_mosaic.version = 11 : i64} {
  func.func @_matmul_bias_act_kernel(%arg0: i32, %arg1: memref<200x150xbf16, #tpu.memory_space<vmem>>, %arg2: memref<150x128xbf16, #tpu.memory_space<vmem>>, %arg3: memref<1x128xf32, #tpu.memory_space<vmem>>, %arg4: memref<200x128xf32, #tpu.memory_space<vmem>>) attributes {dimension_semantics = [#tpu.dimension_semantics<parallel>], iteration_bounds = array<i64: 1>, scalar_prefetch = 0 : i64, scratch_operands = 0 : i64, tpu.core_type = #tpu.core_type<tc>, window_params = [{transform_indices = @transform_0, window_bounds = array<i64: 200, 150>}, {pipeline_mode = #tpu.pipeline_mode<synchronous>, transform_indices = @transform_1, window_bounds = array<i64: 150, 128>}, {pipeline_mode = #tpu.pipeline_mode<synchronous>, transform_indices = @transform_2, window_bounds = array<i64: 1, 128>}, {transform_indices = @transform_3, window_bounds = array<i64: 200, 128>}]} {
    %c0 = arith.constant 0 : index
    %c0_0 = arith.constant 0 : index
    %0 = vector.load %arg1[%c0, %c0_0] : memref<200x150xbf16, #tpu.memory_space<vmem>>, vector<200x150xbf16>
    %c0_1 = arith.constant 0 : index
    %c0_2 = arith.constant 0 : index
    %1 = vector.load %arg2[%c0_1, %c0_2] : memref<150x128xbf16, #tpu.memory_space<vmem>>, vector<150x128xbf16>
    %cst = arith.constant dense<0.000000e+00> : vector<200x128xf32>
    %2 = tpu.matmul %0, %1, %cst {dimension_numbers = #tpu.dot_dimension_numbers<[1], [0], [0], [1], [0, 0, 1, 1], [], []>} : vector<200x150xbf16>, vector<150x128xbf16>, vector<200x128xf32> -> vector<200x128xf32>
    %c0_3 = arith.constant 0 : index
    %c0_4 = arith.constant 0 : index
    %3 = vector.load %arg3[%c0_3, %c0_4] : memref<1x128xf32, #tpu.memory_space<vmem>>, vector<1x128xf32>
    %4 = vector.broadcast %3 : vector<1x128xf32> to vector<200x128xf32>
    %5 = arith.addf %2, %4 : vector<200x128xf32>
    %cst_5 = arith.constant 0.000000e+00 : f32
    %6 = vector.broadcast %cst_5 : f32 to vector<200x128xf32>
    %7 = arith.maximumf %5, %6 : vector<200x128xf32>
    %c0_6 = arith.constant 0 : index
    %c0_7 = arith.constant 0 : index
    %8 = vector.load %arg4[%c0_6, %c0_7] : memref<200x128xf32, #tpu.memory_space<vmem>>, vector<200x128xf32>
    tpu.vector_store %arg4[%c0_6, %c0_7], %7 {strides = array<i32>} : memref<200x128xf32, #tpu.memory_space<vmem>>, vector<200x128xf32>,
    return
  }
  func.func @transform_0(%arg0: i32) -> (i32, i32) {
    %c0_i32 = arith.constant 0 : i32
    %c0_i32_0 = arith.constant 0 : i32
    return %arg0, %c0_i32 : i32, i32
  }
  func.func @transform_1(%arg0: i32) -> (i32, i32) {
    %c0_i32 = arith.constant 0 : i32
    %c0_i32_0 = arith.constant 0 : i32
    %c0_i32_1 = arith.constant 0 : i32
    return %c0_i32, %c0_i32_0 : i32, i32
  }
  func.func @transform_2(%arg0: i32) -> (i32, i32) {
    %c0_i32 = arith.constant 0 : i32
    %c0_i32_0 = arith.constant 0 : i32
    %c0_i32_1 = arith.constant 0 : i32
    return %c0_i32, %c0_i32_0 : i32, i32
  }
  func.func @transform_3(%arg0: i32) -> (i32, i32) {
    %c0_i32 = arith.constant 0 : i32
    %c0_i32_0 = arith.constant 0 : i32
    return %arg0, %c0_i32 : i32, i32
  }
}

module attributes {stable_mosaic.version = 11 : i64} {
  func.func @_maxpool4_kernel(%arg0: i32, %arg1: memref<56x4x128xf32, #tpu.memory_space<vmem>>, %arg2: memref<56x128xf32, #tpu.memory_space<vmem>>) attributes {dimension_semantics = [#tpu.dimension_semantics<parallel>], iteration_bounds = array<i64: 1>, scalar_prefetch = 0 : i64, scratch_operands = 0 : i64, tpu.core_type = #tpu.core_type<tc>, window_params = [{transform_indices = @transform_0, window_bounds = array<i64: 56, 4, 128>}, {transform_indices = @transform_1, window_bounds = array<i64: 56, 128>}]} {
    %c0 = arith.constant 0 : index
    %c0_0 = arith.constant 0 : index
    %c0_1 = arith.constant 0 : index
    %0 = vector.load %arg1[%c0, %c0_0, %c0_1] : memref<56x4x128xf32, #tpu.memory_space<vmem>>, vector<56x4x128xf32>
    %cst = arith.constant dense<0xFF800000> : vector<56x128xf32>
    %1 = vector.multi_reduction <maximumf>, %0, %cst [1] : vector<56x4x128xf32> to vector<56x128xf32>
    %c0_2 = arith.constant 0 : index
    %c0_3 = arith.constant 0 : index
    %2 = vector.load %arg2[%c0_2, %c0_3] : memref<56x128xf32, #tpu.memory_space<vmem>>, vector<56x128xf32>
    tpu.vector_store %arg2[%c0_2, %c0_3], %1 {strides = array<i32>} : memref<56x128xf32, #tpu.memory_space<vmem>>, vector<56x128xf32>,
    return
  }
  func.func @transform_0(%arg0: i32) -> (i32, i32, i32) {
    %c0_i32 = arith.constant 0 : i32
    %c0_i32_0 = arith.constant 0 : i32
    %c0_i32_1 = arith.constant 0 : i32
    return %arg0, %c0_i32, %c0_i32_0 : i32, i32, i32
  }
  func.func @transform_1(%arg0: i32) -> (i32, i32) {
    %c0_i32 = arith.constant 0 : i32
    %c0_i32_0 = arith.constant 0 : i32
    return %arg0, %c0_i32 : i32, i32
  }
}

module attributes {stable_mosaic.version = 11 : i64} {
  func.func @_fc_fused_kernel(%arg0: i32, %arg1: memref<8x512xf32, #tpu.memory_space<vmem>>, %arg2: memref<512x128xf32, #tpu.memory_space<vmem>>, %arg3: memref<1x128xf32, #tpu.memory_space<vmem>>, %arg4: memref<128x128xf32, #tpu.memory_space<vmem>>, %arg5: memref<1x128xf32, #tpu.memory_space<vmem>>, %arg6: memref<128x128xf32, #tpu.memory_space<vmem>>, %arg7: memref<1x128xf32, #tpu.memory_space<vmem>>, %arg8: memref<8x128xf32, #tpu.memory_space<vmem>>) attributes {dimension_semantics = [#tpu.dimension_semantics<parallel>], iteration_bounds = array<i64: 1>, scalar_prefetch = 0 : i64, scratch_operands = 0 : i64, tpu.core_type = #tpu.core_type<tc>, window_params = [{transform_indices = @transform_0, window_bounds = array<i64: 8, 512>}, {pipeline_mode = #tpu.pipeline_mode<synchronous>, transform_indices = @transform_1, window_bounds = array<i64: 512, 128>}, {pipeline_mode = #tpu.pipeline_mode<synchronous>, transform_indices = @transform_2, window_bounds = array<i64: 1, 128>}, {pipeline_mode = #tpu.pipeline_mode<synchronous>, transform_indices = @transform_3, window_bounds = array<i64: 128, 128>}, {pipeline_mode = #tpu.pipeline_mode<synchronous>, transform_indices = @transform_4, window_bounds = array<i64: 1, 128>}, {pipeline_mode = #tpu.pipeline_mode<synchronous>, transform_indices = @transform_5, window_bounds = array<i64: 128, 128>}, {pipeline_mode = #tpu.pipeline_mode<synchronous>, transform_indices = @transform_6, window_bounds = array<i64: 1, 128>}, {transform_indices = @transform_7, window_bounds = array<i64: 8, 128>}]} {
    %c0 = arith.constant 0 : index
    %c0_0 = arith.constant 0 : index
    %0 = vector.load %arg1[%c0, %c0_0] : memref<8x512xf32, #tpu.memory_space<vmem>>, vector<8x512xf32>
    %c0_1 = arith.constant 0 : index
    %c0_2 = arith.constant 0 : index
    %1 = vector.load %arg2[%c0_1, %c0_2] : memref<512x128xf32, #tpu.memory_space<vmem>>, vector<512x128xf32>
    %cst = arith.constant dense<0.000000e+00> : vector<8x128xf32>
    %2 = tpu.matmul %0, %1, %cst {dimension_numbers = #tpu.dot_dimension_numbers<[1], [0], [0], [1], [0, 0, 1, 1], [], []>} : vector<8x512xf32>, vector<512x128xf32>, vector<8x128xf32> -> vector<8x128xf32>
    %c0_3 = arith.constant 0 : index
    %c0_4 = arith.constant 0 : index
    %3 = vector.load %arg3[%c0_3, %c0_4] : memref<1x128xf32, #tpu.memory_space<vmem>>, vector<1x128xf32>
    %4 = vector.broadcast %3 : vector<1x128xf32> to vector<8x128xf32>
    %5 = arith.addf %2, %4 : vector<8x128xf32>
    %cst_5 = arith.constant 0.000000e+00 : f32
    %6 = vector.broadcast %cst_5 : f32 to vector<8x128xf32>
    %7 = arith.maximumf %5, %6 : vector<8x128xf32>
    %c0_6 = arith.constant 0 : index
    %c0_7 = arith.constant 0 : index
    %8 = vector.load %arg4[%c0_6, %c0_7] : memref<128x128xf32, #tpu.memory_space<vmem>>, vector<128x128xf32>
    %cst_8 = arith.constant dense<0.000000e+00> : vector<8x128xf32>
    %9 = tpu.matmul %7, %8, %cst_8 {dimension_numbers = #tpu.dot_dimension_numbers<[1], [0], [0], [1], [0, 0, 1, 1], [], []>} : vector<8x128xf32>, vector<128x128xf32>, vector<8x128xf32> -> vector<8x128xf32>
    %c0_9 = arith.constant 0 : index
    %c0_10 = arith.constant 0 : index
    %10 = vector.load %arg5[%c0_9, %c0_10] : memref<1x128xf32, #tpu.memory_space<vmem>>, vector<1x128xf32>
    %11 = vector.broadcast %10 : vector<1x128xf32> to vector<8x128xf32>
    %12 = arith.addf %9, %11 : vector<8x128xf32>
    %cst_11 = arith.constant 0.000000e+00 : f32
    %13 = vector.broadcast %cst_11 : f32 to vector<8x128xf32>
    %14 = arith.maximumf %12, %13 : vector<8x128xf32>
    %c0_12 = arith.constant 0 : index
    %c0_13 = arith.constant 0 : index
    %15 = vector.load %arg6[%c0_12, %c0_13] : memref<128x128xf32, #tpu.memory_space<vmem>>, vector<128x128xf32>
    %cst_14 = arith.constant dense<0.000000e+00> : vector<8x128xf32>
    %16 = tpu.matmul %14, %15, %cst_14 {dimension_numbers = #tpu.dot_dimension_numbers<[1], [0], [0], [1], [0, 0, 1, 1], [], []>} : vector<8x128xf32>, vector<128x128xf32>, vector<8x128xf32> -> vector<8x128xf32>
    %c0_15 = arith.constant 0 : index
    %c0_16 = arith.constant 0 : index
    %17 = vector.load %arg7[%c0_15, %c0_16] : memref<1x128xf32, #tpu.memory_space<vmem>>, vector<1x128xf32>
    %18 = vector.broadcast %17 : vector<1x128xf32> to vector<8x128xf32>
    %19 = arith.addf %16, %18 : vector<8x128xf32>
    %c0_17 = arith.constant 0 : index
    %c0_18 = arith.constant 0 : index
    %20 = vector.load %arg8[%c0_17, %c0_18] : memref<8x128xf32, #tpu.memory_space<vmem>>, vector<8x128xf32>
    tpu.vector_store %arg8[%c0_17, %c0_18], %19 {strides = array<i32>} : memref<8x128xf32, #tpu.memory_space<vmem>>, vector<8x128xf32>,
    return
  }
  func.func @transform_0(%arg0: i32) -> (i32, i32) {
    %c0_i32 = arith.constant 0 : i32
    %c0_i32_0 = arith.constant 0 : i32
    return %arg0, %c0_i32 : i32, i32
  }
  func.func @transform_1(%arg0: i32) -> (i32, i32) {
    %c0_i32 = arith.constant 0 : i32
    %c0_i32_0 = arith.constant 0 : i32
    %c0_i32_1 = arith.constant 0 : i32
    return %c0_i32, %c0_i32_0 : i32, i32
  }
  func.func @transform_2(%arg0: i32) -> (i32, i32) {
    %c0_i32 = arith.constant 0 : i32
    %c0_i32_0 = arith.constant 0 : i32
    %c0_i32_1 = arith.constant 0 : i32
    return %c0_i32, %c0_i32_0 : i32, i32
  }
  func.func @transform_3(%arg0: i32) -> (i32, i32) {
    %c0_i32 = arith.constant 0 : i32
    %c0_i32_0 = arith.constant 0 : i32
    %c0_i32_1 = arith.constant 0 : i32
    return %c0_i32, %c0_i32_0 : i32, i32
  }
  func.func @transform_4(%arg0: i32) -> (i32, i32) {
    %c0_i32 = arith.constant 0 : i32
    %c0_i32_0 = arith.constant 0 : i32
    %c0_i32_1 = arith.constant 0 : i32
    return %c0_i32, %c0_i32_0 : i32, i32
  }
  func.func @transform_5(%arg0: i32) -> (i32, i32) {
    %c0_i32 = arith.constant 0 : i32
    %c0_i32_0 = arith.constant 0 : i32
    %c0_i32_1 = arith.constant 0 : i32
    return %c0_i32, %c0_i32_0 : i32, i32
  }
  func.func @transform_6(%arg0: i32) -> (i32, i32) {
    %c0_i32 = arith.constant 0 : i32
    %c0_i32_0 = arith.constant 0 : i32
    %c0_i32_1 = arith.constant 0 : i32
    return %c0_i32, %c0_i32_0 : i32, i32
  }
  func.func @transform_7(%arg0: i32) -> (i32, i32) {
    %c0_i32 = arith.constant 0 : i32
    %c0_i32_0 = arith.constant 0 : i32
    return %arg0, %c0_i32 : i32, i32
  }
}

</mosaic_0001>

<llo_original>
// kernel: convnet_forward.5
$region0: #{convnet_forward.5}
  #allocation0 [shape = 'u32[]', space=smem, size = 0x4, offset = 0x4, fixed_abs, tag = 'smem constant byte address 0x4 - core index']
  #allocation1 [shape = 'u32[144,128]{1,0:T(1,128)}', space=vmem, size = 0x12000, scoped, tag = 'internal scratch']
  %s0 = inlined_call_operand.vmem [shape: bf16[1568,75], index: 0, kind: input, shape index: {}]
  %s1 = inlined_call_operand.vmem [shape: bf16[75,128], index: 1, kind: input, shape index: {}]
  %s2 = inlined_call_operand.vmem [shape: f32[1,128], index: 2, kind: input, shape index: {}]
  %s3 = inlined_call_operand.vmem [shape: f32[1568,128], index: 3, kind: output, shape index: {}]
  %s4 = sld [smem:[#allocation0]]
  $region93: #{convnet_forward.5} parent=0
    _
  %s6 = ssub.s32 1, %s4
  %s7 = scalar_select 0, %s6, %s4
  $region1: #{convnet_forward.5} parent=0
    #allocation2 [shape = 'u8[524288]{0}', space=vmem, size = 0x80000, scoped, tag = 'output window, operand 0']
    loop: start=0, step=1, limit=6
    $region2: #{convnet_forward.5} parent=1 // loop_pre_header
      _
    $region3: #{convnet_forward.5} parent=1 // loop_header
      %s9 = sphi 0, %s13
      %p10 = scmp.ge.s32.totalorder %s9, 6
      %s19 = sphi 0, %s21
      %s22 = sphi 0, %s19
      %s23 = sphi 0, %s22
      %s39 = sphi 0, %s23
      %s43 = sphi 0, %s43
      %s45 = sphi 0, %s43
      %s46 = sphi 0, %s45
      %s60 = sphi 0, %s46
      %s64 = sphi 0, %s64
      %s66 = sphi 0, %s64
      %s67 = sphi 0, %s66
      %s81 = sphi 0, %s67
      %s87 = sphi 0, %s89
      %s90 = sphi 0, %s87
      %s91 = sphi 0, %s90
      %s107 = sphi 0, %s91
    $region4: #{convnet_forward.5} parent=1 // loop_header_branch
      %12 = sbr.rel (%p10) target = $region8
    $region5: #{convnet_forward.5} parent=1 // loop_body
      %s14 = ssub.s32 %s9, 1
      %s15 = ssub.s32 %s9, 2
      %s16 = sadd.s32 %s9, 1
      %s17 = ssub.s32 %s9, %s16
      %p18 = scmp.eq.s32.totalorder %s17, 0
      %s20 = sadd.s32 %s19, 1
      %s21 = scalar_select %p18, %s19, %s20
      %p24 = pneg %p18
      %p25 = scmp.eq.s32.totalorder %s9, 3
      %p26 = por %p24, %p25
      %p27 = scmp.ne.s32.totalorder %s19, %s22
      %p28 = scmp.eq.s32.totalorder %s9, 0
      %p29 = por %p27, %p28
      %p30 = scmp.ne.s32.totalorder %s19, %s22
      %p31 = scmp.eq.s32.totalorder %s14, 3
      %p32 = por %p30, %p31
      %p33 = scmp.ne.s32.totalorder %s22, %s23
      %p34 = scmp.eq.s32.totalorder %s14, 0
      %p35 = por %p33, %p34
      %p36 = scmp.ne.s32.totalorder %s22, %s23
      %p37 = scmp.eq.s32.totalorder %s15, 3
      %p38 = por %p36, %p37
      %p40 = scmp.ne.s32.totalorder %s23, %s39
      %p41 = scmp.eq.s32.totalorder %s15, 0
      %p42 = por %p40, %p41
      %s44 = sadd.s32 %s43, 1
      %p47 = scmp.eq.s32.totalorder %s9, 3
      %p48 = scmp.ne.s32.totalorder %s43, %s45
      %p49 = scmp.eq.s32.totalorder %s9, 0
      %p50 = por %p48, %p49
      %p51 = scmp.ne.s32.totalorder %s43, %s45
      %p52 = scmp.eq.s32.totalorder %s14, 3
      %p53 = por %p51, %p52
      %p54 = scmp.ne.s32.totalorder %s45, %s46
      %p55 = scmp.eq.s32.totalorder %s14, 0
      %p56 = por %p54, %p55
      %p57 = scmp.ne.s32.totalorder %s45, %s46
      %p58 = scmp.eq.s32.totalorder %s15, 3
      %p59 = por %p57, %p58
      %p61 = scmp.ne.s32.totalorder %s46, %s60
      %p62 = scmp.eq.s32.totalorder %s15, 0
      %p63 = por %p61, %p62
      %s65 = sadd.s32 %s64, 1
      %p68 = scmp.eq.s32.totalorder %s9, 3
      %p69 = scmp.ne.s32.totalorder %s64, %s66
      %p70 = scmp.eq.s32.totalorder %s9, 0
      %p71 = por %p69, %p70
      %p72 = scmp.ne.s32.totalorder %s64, %s66
      %p73 = scmp.eq.s32.totalorder %s14, 3
      %p74 = por %p72, %p73
      %p75 = scmp.ne.s32.totalorder %s66, %s67
      %p76 = scmp.eq.s32.totalorder %s14, 0
      %p77 = por %p75, %p76
      %p78 = scmp.ne.s32.totalorder %s66, %s67
      %p79 = scmp.eq.s32.totalorder %s15, 3
      %p80 = por %p78, %p79
      %p82 = scmp.ne.s32.totalorder %s67, %s81
      %p83 = scmp.eq.s32.totalorder %s15, 0
      %p84 = por %p82, %p83
      %s85 = ssub.s32 %s9, %s16
      %p86 = scmp.eq.s32.totalorder %s85, 0
      %s88 = sadd.s32 %s87, 1
      %s89 = scalar_select %p86, %s87, %s88
      %p92 = pneg %p86
      %p93 = scmp.eq.s32.totalorder %s9, 3
      %p94 = por %p92, %p93
      %p95 = scmp.ne.s32.totalorder %s87, %s90
      %p96 = scmp.eq.s32.totalorder %s9, 0
      %p97 = por %p95, %p96
      %p98 = scmp.ne.s32.totalorder %s87, %s90
      %p99 = scmp.eq.s32.totalorder %s14, 3
      %p100 = por %p98, %p99
      %p101 = scmp.ne.s32.totalorder %s90, %s91
      %p102 = scmp.eq.s32.totalorder %s14, 0
      %p103 = por %p101, %p102
      %p104 = scmp.ne.s32.totalorder %s90, %s91
      %p105 = scmp.eq.s32.totalorder %s15, 3
      %p106 = por %p104, %p105
      %p108 = scmp.ne.s32.totalorder %s91, %s107
      %p109 = scmp.eq.s32.totalorder %s15, 0
      %p110 = por %p108, %p109
      %p111 = scmp.le.s32.totalorder 1, %s9
      %p112 = scmp.lt.s32.totalorder %s9, 5
      %p113 = pnand %p111, %p112
      %p114 = pneg %p113
      // Predicated region
      $region9: #{convnet_forward.5} parent=5 // pred_check
        _
      $region10: #{convnet_forward.5} parent=5 // pred_check_branch
        %116 = sbr.rel (%p113) target = $region12
      $region11: #{convnet_forward.5} parent=5 // pred_region
        %s117 = ssub.s32 %s9, 1
        // Predicated region
        $region13: #{convnet_forward.5} parent=11 // pred_check
          %p118 = pneg %p56
        $region14: #{convnet_forward.5} parent=11 // pred_check_branch
          %120 = sbr.rel (%p118) target = $region16
        $region15: #{convnet_forward.5} parent=11 // pred_region
          _
        $region16: #{convnet_forward.5} parent=11 // pred_fallthru
          _
        // Predicated region
        $region17: #{convnet_forward.5} parent=11 // pred_check
          %p121 = pneg %p77
        $region18: #{convnet_forward.5} parent=11 // pred_check_branch
          %123 = sbr.rel (%p121) target = $region20
        $region19: #{convnet_forward.5} parent=11 // pred_region
          _
        $region20: #{convnet_forward.5} parent=11 // pred_fallthru
          _
      $region12: #{convnet_forward.5} parent=5 // pred_fallthru
        _
      %p124 = scmp.lt.s32.totalorder %s9, 4
      // Predicated region
      $region21: #{convnet_forward.5} parent=5 // pred_check
        %p125 = pneg %p124
      $region22: #{convnet_forward.5} parent=5 // pred_check_branch
        %127 = sbr.rel (%p125) target = $region24
      $region23: #{convnet_forward.5} parent=5 // pred_region
        // Predicated region
        $region25: #{convnet_forward.5} parent=23 // pred_check
          %p128 = pneg %p29
        $region26: #{convnet_forward.5} parent=23 // pred_check_branch
          %130 = sbr.rel (%p128) target = $region28
        $region27: #{convnet_forward.5} parent=23 // pred_region
          %s131 = smul.u32 64, %s9
          %s132 = ssub.s32 196, %s131
          %p133 = scmp.lt.s32.totalorder %s132, 64
          %s134 = scalar_select %p133, %s132, 64
          %s135 = smul.u32 64, %s134
          %p136 = scmp.lt.s32.totalorder %s131, 195
          %s137 = scalar_select %p136, %s131, 195
          %s138 = smul.addr %s137, 4
          %s139 = scalar_lea.vmem %s0, %s138
          %s140 = smul.u32 64, %s9
          %s141 = ssub.s32 196, %s140
          %p142 = scmp.lt.s32.totalorder %s141, 64
          %s143 = scalar_select %p142, %s141, 64
          %s144 = smul.u32 64, %s143
        $region28: #{convnet_forward.5} parent=23 // pred_fallthru
          _
      $region24: #{convnet_forward.5} parent=5 // pred_fallthru
        _
      %p145 = scmp.le.s32.totalorder 1, %s9
      %p146 = scmp.lt.s32.totalorder %s9, 5
      %p147 = pnand %p145, %p146
      %p148 = pneg %p147
      // Predicated region
      $region29: #{convnet_forward.5} parent=5 // pred_check
        _
      $region30: #{convnet_forward.5} parent=5 // pred_check_branch
        %150 = sbr.rel (%p147) target = $region32
      $region31: #{convnet_forward.5} parent=5 // pred_region
        %s151 = ssub.s32 %s9, 1
        %s152 = smul.u32 64, %s14
        %s153 = ssub.s32 196, %s152
        %p154 = scmp.lt.s32.totalorder %s153, 64
        %s155 = scalar_select %p154, %s153, 64
        %s156 = smul.u32 64, %s155
        %p157 = scmp.lt.s32.totalorder %s152, 195
        %s158 = scalar_select %p157, %s152, 195
        %s159 = smul.addr %s158, 4
        %s160 = scalar_lea.vmem %s0, %s159
        %p161 = pneg %p35
        %p162 = pneg %p32
        %p163 = pneg %p56
        %p164 = pneg %p53
        %p165 = pneg %p77
        %p166 = pneg %p74
        %p167 = pneg %p103
        %p168 = pneg %p100
        %s169 = sand.u32 %s90, 1
        %s170 = sand.u32 %s90, 1
        %s171 = smul.addr %s170, 512
        %s172 = scalar_lea.vmem [#allocation2], %s171
        %s173 = smul.u32 64, %s14
        %s174 = ssub.s32 196, %s173
        %p175 = scmp.lt.s32.totalorder %s174, 64
        %s176 = scalar_select %p175, %s174, 64
        %s177 = smul.u32 64, %s176
        %p178 = scmp.lt.s32.totalorder %s173, 195
        %s179 = scalar_select %p178, %s173, 195
        %s180 = smul.addr %s179, 4
        %s181 = scalar_lea.vmem %s0, %s180
        %s182 = smul.u32 64, %s14
        %s183 = ssub.s32 196, %s182
        %p184 = scmp.lt.s32.totalorder %s183, 64
        %s185 = scalar_select %p184, %s183, 64
        %s186 = smul.u32 64, %s185
        %s187 = smul.u32 64, %s14
        %s188 = ssub.s32 196, %s187
        %p189 = scmp.lt.s32.totalorder %s188, 64
        %s190 = scalar_select %p189, %s188, 64
        %s191 = smul.u32 128, %s190
        %v193 = vld [vmem:[%s181] sm:$0xf]
        %v194 = vld [vmem:[%s181 + $0x4] sm:$0xf]
        %v195 = vld [vmem:[%s181 + $0x8] sm:$0xf]
        %v196 = vld [vmem:[%s181 + $0xc] sm:$0xf]
        %v197 = vld [vmem:[%s181 + $0x10] sm:$0xf]
        %v198 = vld [vmem:[%s181 + $0x14] sm:$0xf]
        %v199 = vld [vmem:[%s181 + $0x18] sm:$0xf]
        %v200 = vld [vmem:[%s181 + $0x1c] sm:$0xf]
        %v201 = vld [vmem:[%s181 + $0x20] sm:$0xf]
        %v202 = vld [vmem:[%s181 + $0x24] sm:$0xf]
        %v203 = vld [vmem:[%s181 + $0x28] sm:$0xf]
        %v204 = vld [vmem:[%s181 + $0x2c] sm:$0xf]
        %v205 = vld [vmem:[%s181 + $0x30] sm:$0xf]
        %v206 = vld [vmem:[%s181 + $0x34] sm:$0xf]
        %v207 = vld [vmem:[%s181 + $0x38] sm:$0xf]
        %v208 = vld [vmem:[%s181 + $0x3c] sm:$0xf]
        %v209 = vld [vmem:[%s181 + $0x40] sm:$0xf]
        %v210 = vld [vmem:[%s181 + $0x44] sm:$0xf]
        %v211 = vld [vmem:[%s181 + $0x48] sm:$0xf]
        %v212 = vld [vmem:[%s181 + $0x4c] sm:$0xf]
        %v213 = vld [vmem:[%s181 + $0x50] sm:$0xf]
        %v214 = vld [vmem:[%s181 + $0x54] sm:$0xf]
        %v215 = vld [vmem:[%s181 + $0x58] sm:$0xf]
        %v216 = vld [vmem:[%s181 + $0x5c] sm:$0xf]
        %v217 = vld [vmem:[%s181 + $0x60] sm:$0xf]
        %v218 = vld [vmem:[%s181 + $0x64] sm:$0xf]
        %v219 = vld [vmem:[%s181 + $0x68] sm:$0xf]
        %v220 = vld [vmem:[%s181 + $0x6c] sm:$0xf]
        %v221 = vld [vmem:[%s181 + $0x70] sm:$0xf]
        %v222 = vld [vmem:[%s181 + $0x74] sm:$0xf]
        %v223 = vld [vmem:[%s181 + $0x78] sm:$0xf]
        %v224 = vld [vmem:[%s181 + $0x7c] sm:$0xf]
        %v225 = vld [vmem:[%s181 + $0x80] sm:$0xf]
        %v226 = vld [vmem:[%s181 + $0x84] sm:$0xf]
        %v227 = vld [vmem:[%s181 + $0x88] sm:$0xf]
        %v228 = vld [vmem:[%s181 + $0x8c] sm:$0xf]
        %v229 = vld [vmem:[%s181 + $0x90] sm:$0xf]
        %v230 = vld [vmem:[%s181 + $0x94] sm:$0xf]
        %v231 = vld [vmem:[%s181 + $0x98] sm:$0xf]
        %v232 = vld [vmem:[%s181 + $0x9c] sm:$0xf]
        %v233 = vld [vmem:[%s181 + $0xa0] sm:$0xf]
        %v234 = vld [vmem:[%s181 + $0xa4] sm:$0xf]
        %v235 = vld [vmem:[%s181 + $0xa8] sm:$0xf]
        %v236 = vld [vmem:[%s181 + $0xac] sm:$0xf]
        %v237 = vld [vmem:[%s181 + $0xb0] sm:$0xf]
        %v238 = vld [vmem:[%s181 + $0xb4] sm:$0xf]
        %v239 = vld [vmem:[%s181 + $0xb8] sm:$0xf]
        %v240 = vld [vmem:[%s181 + $0xbc] sm:$0xf]
        %v241 = vld [vmem:[%s181 + $0xc0] sm:$0xf]
        %v242 = vld [vmem:[%s181 + $0xc4] sm:$0xf]
        %v243 = vld [vmem:[%s181 + $0xc8] sm:$0xf]
        %v244 = vld [vmem:[%s181 + $0xcc] sm:$0xf]
        %v245 = vld [vmem:[%s181 + $0xd0] sm:$0xf]
        %v246 = vld [vmem:[%s181 + $0xd4] sm:$0xf]
        %v247 = vld [vmem:[%s181 + $0xd8] sm:$0xf]
        %v248 = vld [vmem:[%s181 + $0xdc] sm:$0xf]
        %v249 = vld [vmem:[%s181 + $0xe0] sm:$0xf]
        %v250 = vld [vmem:[%s181 + $0xe4] sm:$0xf]
        %v251 = vld [vmem:[%s181 + $0xe8] sm:$0xf]
        %v252 = vld [vmem:[%s181 + $0xec] sm:$0xf]
        %v253 = vld [vmem:[%s181 + $0xf0] sm:$0xf]
        %v254 = vld [vmem:[%s181 + $0xf4] sm:$0xf]
        %v255 = vld [vmem:[%s181 + $0xf8] sm:$0xf]
        %v256 = vld [vmem:[%s181 + $0xfc] sm:$0xf]
        %v257 = vld [vmem:[%s1] sm:$0xf]
        %v258 = vld [vmem:[%s1 + $0x4] sm:$0xf]
        %v259 = vld [vmem:[%s1 + $0x8] sm:$0xf]
        %v260 = vld [vmem:[%s1 + $0xc] sm:$0xf]
        %v261 = vld [vmem:[%s1 + $0x10] sm:$0xf]
        %v262 = vld [vmem:[%s1 + $0x14] sm:$0xf]
        %v263 = vld [vmem:[%s1 + $0x18] sm:$0xf]
        %v264 = vld [vmem:[%s1 + $0x1c] sm:$0xf]
        %v265 = vld [vmem:[%s1 + $0x20] sm:$0xf]
        %v266 = vld [vmem:[%s1 + $0x24] sm:$0x3]
        %v267 = vld [vmem:[%s2] sm:$0x1]
        %v269 = vlaneseq
        %v270 = vshrl.u32 %v269, 7
        %v271 = vsub.s32 0, %v270
        %v272 = vrot.slane %v267, %v271
        %v338 = vunpack.c.l.b16 %v193
        %v339 = vunpack.c.l.b16 %v194
        %v340 = vunpack.c.l.b16 %v195
        %v341 = vunpack.c.l.b16 %v196
        %v342 = vunpack.c.l.b16 %v197
        %v343 = vunpack.c.l.b16 %v198
        %v344 = vunpack.c.l.b16 %v199
        %v345 = vunpack.c.l.b16 %v200
        %v346 = vunpack.c.l.b16 %v201
        %v347 = vunpack.c.l.b16 %v202
        %v348 = vunpack.c.l.b16 %v203
        %v349 = vunpack.c.l.b16 %v204
        %v350 = vunpack.c.l.b16 %v205
        %v351 = vunpack.c.l.b16 %v206
        %v352 = vunpack.c.l.b16 %v207
        %v353 = vunpack.c.l.b16 %v208
        %v354 = vunpack.c.l.b16 %v209
        %v355 = vunpack.c.l.b16 %v210
        %v356 = vunpack.c.l.b16 %v211
        %v357 = vunpack.c.l.b16 %v212
        %v358 = vunpack.c.l.b16 %v213
        %v359 = vunpack.c.l.b16 %v214
        %v360 = vunpack.c.l.b16 %v215
        %v361 = vunpack.c.l.b16 %v216
        %v362 = vunpack.c.l.b16 %v217
        %v363 = vunpack.c.l.b16 %v218
        %v364 = vunpack.c.l.b16 %v219
        %v365 = vunpack.c.l.b16 %v220
        %v366 = vunpack.c.l.b16 %v221
        %v367 = vunpack.c.l.b16 %v222
        %v368 = vunpack.c.l.b16 %v223
        %v369 = vunpack.c.l.b16 %v224
        %v370 = vunpack.c.l.b16 %v225
        %v371 = vunpack.c.l.b16 %v226
        %v372 = vunpack.c.l.b16 %v227
        %v373 = vunpack.c.l.b16 %v228
        %v374 = vunpack.c.l.b16 %v229
        %v375 = vunpack.c.l.b16 %v230
        %v376 = vunpack.c.l.b16 %v231
        %v377 = vunpack.c.l.b16 %v232
        %v378 = vunpack.c.l.b16 %v233
        %v379 = vunpack.c.l.b16 %v234
        %v380 = vunpack.c.l.b16 %v235
        %v381 = vunpack.c.l.b16 %v236
        %v382 = vunpack.c.l.b16 %v237
        %v383 = vunpack.c.l.b16 %v238
        %v384 = vunpack.c.l.b16 %v239
        %v385 = vunpack.c.l.b16 %v240
        %v386 = vunpack.c.l.b16 %v241
        %v387 = vunpack.c.l.b16 %v242
        %v388 = vunpack.c.l.b16 %v243
        %v389 = vunpack.c.l.b16 %v244
        %v390 = vunpack.c.l.b16 %v245
        %v391 = vunpack.c.l.b16 %v246
        %v392 = vunpack.c.l.b16 %v247
        %v393 = vunpack.c.l.b16 %v248
        %v394 = vunpack.c.l.b16 %v249
        %v395 = vunpack.c.l.b16 %v250
        %v396 = vunpack.c.l.b16 %v251
        %v397 = vunpack.c.l.b16 %v252
        %v398 = vunpack.c.l.b16 %v253
        %v399 = vunpack.c.l.b16 %v254
        %v400 = vunpack.c.l.b16 %v255
        %v401 = vunpack.c.l.b16 %v256
        %v402 = vpack.c.b16 %v339, %v338
        %v403 = vpack.c.b16 %v341, %v340
        %v404 = vpack.c.b16 %v343, %v342
        %v405 = vpack.c.b16 %v345, %v344
        %v406 = vpack.c.b16 %v347, %v346
        %v407 = vpack.c.b16 %v349, %v348
        %v408 = vpack.c.b16 %v351, %v350
        %v409 = vpack.c.b16 %v353, %v352
        %v410 = vpack.c.b16 %v355, %v354
        %v411 = vpack.c.b16 %v357, %v356
        %v412 = vpack.c.b16 %v359, %v358
        %v413 = vpack.c.b16 %v361, %v360
        %v414 = vpack.c.b16 %v363, %v362
        %v415 = vpack.c.b16 %v365, %v364
        %v416 = vpack.c.b16 %v367, %v366
        %v417 = vpack.c.b16 %v369, %v368
        %v418 = vpack.c.b16 %v371, %v370
        %v419 = vpack.c.b16 %v373, %v372
        %v420 = vpack.c.b16 %v375, %v374
        %v421 = vpack.c.b16 %v377, %v376
        %v422 = vpack.c.b16 %v379, %v378
        %v423 = vpack.c.b16 %v381, %v380
        %v424 = vpack.c.b16 %v383, %v382
        %v425 = vpack.c.b16 %v385, %v384
        %v426 = vpack.c.b16 %v387, %v386
        %v427 = vpack.c.b16 %v389, %v388
        %v428 = vpack.c.b16 %v391, %v390
        %v429 = vpack.c.b16 %v393, %v392
        %v430 = vpack.c.b16 %v395, %v394
        %v431 = vpack.c.b16 %v397, %v396
        %v432 = vpack.c.b16 %v399, %v398
        %v433 = vpack.c.b16 %v401, %v400
        %v444 = vunpack.c.l.b16 %v257
        %v445 = vunpack.c.l.b16 %v258
        %v446 = vunpack.c.l.b16 %v259
        %v447 = vunpack.c.l.b16 %v260
        %v448 = vunpack.c.l.b16 %v261
        %v449 = vunpack.c.l.b16 %v262
        %v450 = vunpack.c.l.b16 %v263
        %v451 = vunpack.c.l.b16 %v264
        %v452 = vunpack.c.l.b16 %v265
        %v453 = vunpack.c.l.b16 %v266
        %v454 = vpack.c.b16 %v445, %v444
        %v455 = vpack.c.b16 %v447, %v446
        %v456 = vpack.c.b16 %v449, %v448
        %v457 = vpack.c.b16 %v451, %v450
        %v458 = vpack.c.b16 %v453, %v452
        %vm463 = vcmask 613376
        %v465 = vsel %vm463, %v402, 0
        %v468 = vsel %vm463, %v403, 0
        %v471 = vsel %vm463, %v404, 0
        %v474 = vsel %vm463, %v405, 0
        %v477 = vsel %vm463, %v406, 0
        %v480 = vsel %vm463, %v407, 0
        %v483 = vsel %vm463, %v408, 0
        %v486 = vsel %vm463, %v409, 0
        %v489 = vsel %vm463, %v410, 0
        %v492 = vsel %vm463, %v411, 0
        %v495 = vsel %vm463, %v412, 0
        %v498 = vsel %vm463, %v413, 0
        %v501 = vsel %vm463, %v414, 0
        %v504 = vsel %vm463, %v415, 0
        %v507 = vsel %vm463, %v416, 0
        %v510 = vsel %vm463, %v417, 0
        %v513 = vsel %vm463, %v418, 0
        %v516 = vsel %vm463, %v419, 0
        %v519 = vsel %vm463, %v420, 0
        %v522 = vsel %vm463, %v421, 0
        %v525 = vsel %vm463, %v422, 0
        %v528 = vsel %vm463, %v423, 0
        %v531 = vsel %vm463, %v424, 0
        %v534 = vsel %vm463, %v425, 0
        %v537 = vsel %vm463, %v426, 0
        %v540 = vsel %vm463, %v427, 0
        %v543 = vsel %vm463, %v428, 0
        %v546 = vsel %vm463, %v429, 0
        %v549 = vsel %vm463, %v430, 0
        %v552 = vsel %vm463, %v431, 0
        %v555 = vsel %vm463, %v432, 0
        %v558 = vsel %vm463, %v433, 0
        %vm560 = vcmask 1044480
        %vm561 = vcmask 1045504
        %v562 = vsel %vm560, 4294967295, 65535
        %v563 = vsel %vm561, %v562, 0
        %v565 = vand.u32 %v458, %v563
        %567 = vmatprep.subr.bf16.mxu0 0
        %568 = vmatpush1.bf16.msra.mxu0 0
        %569 = vmatprep.subr.bf16.mxu0 0
        %570 = vmatpush1.bf16.msra.mxu0 0
        %571 = vmatprep.subr.bf16.mxu0 0
        %572 = vmatpush1.bf16.msra.mxu0 0
        %573 = vmatprep.subr.bf16.mxu0 0
        %574 = vmatpush1.bf16.msra.mxu0 %v565
        %575 = vmatprep.subr.bf16.mxu0 0
        %576 = vmatpush1.bf16.msra.mxu0 %v457
        %577 = vmatprep.subr.bf16.mxu0 0
        %578 = vmatpush1.bf16.msra.mxu0 %v456
        %579 = vmatprep.subr.bf16.mxu0 0
        %580 = vmatpush1.bf16.msra.mxu0 %v455
        %581 = vmatprep.subr.bf16.mxu0 0
        %582 = vmatpush1.bf16.msra.mxu0 %v454
        %583 = vmatprep.subr.bf16.mxu0 0
        %584 = vmatpush2.bf16.msra.mxu0 0
        %585 = vmatprep.subr.bf16.mxu0 0
        %586 = vmatpush2.bf16.msra.mxu0 0
        %587 = vmatprep.subr.bf16.mxu0 0
        %588 = vmatpush2.bf16.msra.mxu0 0
        %589 = vmatprep.subr.bf16.mxu0 0
        %590 = vmatpush2.bf16.msra.mxu0 0
        %591 = vmatprep.subr.bf16.mxu0 0
        %592 = vmatpush2.bf16.msra.mxu0 0
        %593 = vmatprep.subr.bf16.mxu0 0
        %594 = vmatpush2.bf16.msra.mxu0 0
        %595 = vmatprep.subr.bf16.mxu0 0
        %596 = vmatpush2.bf16.msra.mxu0 0
        %597 = vmatprep.subr.bf16.mxu0 0
        %598 = vmatpush2.bf16.msra.mxu0 0
        %599 = vmatprep.mubr.bf16.mxu0 0
        %600 = vmatmul.mubr.bf16.gmra.mxu0 %v465
        %v601 = vpop.f32.mrf.mxu0
        %v602 = vadd.f32 %v272, %v601
        %v603 = vpop.f32.mrf.mxu0
        %v604 = vpop.f32.mrf.mxu0
        %v605 = vadd.f32 %v272, %v604
        %v606 = vpop.f32.mrf.mxu0
        %607 = vmatprep.mubr.bf16.mxu0 0
        %608 = vmatmul.mubr.bf16.gmra.mxu0 %v468
        %v609 = vpop.f32.mrf.mxu0
        %v610 = vadd.f32 %v272, %v609
        %v611 = vpop.f32.mrf.mxu0
        %v612 = vpop.f32.mrf.mxu0
        %v613 = vadd.f32 %v272, %v612
        %v614 = vpop.f32.mrf.mxu0
        %615 = vmatprep.mubr.bf16.mxu0 0
        %616 = vmatmul.mubr.bf16.gmra.mxu0 %v471
        %v617 = vpop.f32.mrf.mxu0
        %v618 = vadd.f32 %v272, %v617
        %v619 = vpop.f32.mrf.mxu0
        %v620 = vpop.f32.mrf.mxu0
        %v621 = vadd.f32 %v272, %v620
        %v622 = vpop.f32.mrf.mxu0
        %623 = vmatprep.mubr.bf16.mxu0 0
        %624 = vmatmul.mubr.bf16.gmra.mxu0 %v474
        %v625 = vpop.f32.mrf.mxu0
        %v626 = vadd.f32 %v272, %v625
        %v627 = vpop.f32.mrf.mxu0
        %v628 = vpop.f32.mrf.mxu0
        %v629 = vadd.f32 %v272, %v628
        %v630 = vpop.f32.mrf.mxu0
        %631 = vmatprep.mubr.bf16.mxu0 0
        %632 = vmatmul.mubr.bf16.gmra.mxu0 %v477
        %v633 = vpop.f32.mrf.mxu0
        %v634 = vadd.f32 %v272, %v633
        %v635 = vpop.f32.mrf.mxu0
        %v636 = vpop.f32.mrf.mxu0
        %v637 = vadd.f32 %v272, %v636
        %v638 = vpop.f32.mrf.mxu0
        %639 = vmatprep.mubr.bf16.mxu0 0
        %640 = vmatmul.mubr.bf16.gmra.mxu0 %v480
        %v641 = vpop.f32.mrf.mxu0
        %v642 = vadd.f32 %v272, %v641
        %v643 = vpop.f32.mrf.mxu0
        %v644 = vpop.f32.mrf.mxu0
        %v645 = vadd.f32 %v272, %v644
        %v646 = vpop.f32.mrf.mxu0
        %647 = vmatprep.mubr.bf16.mxu0 0
        %648 = vmatmul.mubr.bf16.gmra.mxu0 %v483
        %v649 = vpop.f32.mrf.mxu0
        %v650 = vadd.f32 %v272, %v649
        %v651 = vpop.f32.mrf.mxu0
        %v652 = vpop.f32.mrf.mxu0
        %v653 = vadd.f32 %v272, %v652
        %v654 = vpop.f32.mrf.mxu0
        %655 = vmatprep.mubr.bf16.mxu0 0
        %656 = vmatmul.mubr.bf16.gmra.mxu0 %v486
        %v657 = vpop.f32.mrf.mxu0
        %v658 = vadd.f32 %v272, %v657
        %v659 = vpop.f32.mrf.mxu0
        %v660 = vpop.f32.mrf.mxu0
        %v661 = vadd.f32 %v272, %v660
        %v662 = vpop.f32.mrf.mxu0
        %663 = vmatprep.mubr.bf16.mxu0 0
        %664 = vmatmul.mubr.bf16.gmra.mxu0 %v489
        %v665 = vpop.f32.mrf.mxu0
        %v666 = vadd.f32 %v272, %v665
        %v667 = vpop.f32.mrf.mxu0
        %v668 = vpop.f32.mrf.mxu0
        %v669 = vadd.f32 %v272, %v668
        %v670 = vpop.f32.mrf.mxu0
        %671 = vmatprep.mubr.bf16.mxu0 0
        %672 = vmatmul.mubr.bf16.gmra.mxu0 %v492
        %v673 = vpop.f32.mrf.mxu0
        %v674 = vadd.f32 %v272, %v673
        %v675 = vpop.f32.mrf.mxu0
        %v676 = vpop.f32.mrf.mxu0
        %v677 = vadd.f32 %v272, %v676
        %v678 = vpop.f32.mrf.mxu0
        %679 = vmatprep.mubr.bf16.mxu0 0
        %680 = vmatmul.mubr.bf16.gmra.mxu0 %v495
        %v681 = vpop.f32.mrf.mxu0
        %v682 = vadd.f32 %v272, %v681
        %v683 = vpop.f32.mrf.mxu0
        %v684 = vpop.f32.mrf.mxu0
        %v685 = vadd.f32 %v272, %v684
        %v686 = vpop.f32.mrf.mxu0
        %687 = vmatprep.mubr.bf16.mxu0 0
        %688 = vmatmul.mubr.bf16.gmra.mxu0 %v498
        %v689 = vpop.f32.mrf.mxu0
        %v690 = vadd.f32 %v272, %v689
        %v691 = vpop.f32.mrf.mxu0
        %v692 = vpop.f32.mrf.mxu0
        %v693 = vadd.f32 %v272, %v692
        %v694 = vpop.f32.mrf.mxu0
        %695 = vmatprep.mubr.bf16.mxu0 0
        %696 = vmatmul.mubr.bf16.gmra.mxu0 %v501
        %v697 = vpop.f32.mrf.mxu0
        %v698 = vadd.f32 %v272, %v697
        %v699 = vpop.f32.mrf.mxu0
        %v700 = vpop.f32.mrf.mxu0
        %v701 = vadd.f32 %v272, %v700
        %v702 = vpop.f32.mrf.mxu0
        %703 = vmatprep.mubr.bf16.mxu0 0
        %704 = vmatmul.mubr.bf16.gmra.mxu0 %v504
        %v705 = vpop.f32.mrf.mxu0
        %v706 = vadd.f32 %v272, %v705
        %v707 = vpop.f32.mrf.mxu0
        %v708 = vpop.f32.mrf.mxu0
        %v709 = vadd.f32 %v272, %v708
        %v710 = vpop.f32.mrf.mxu0
        %711 = vmatprep.mubr.bf16.mxu0 0
        %712 = vmatmul.mubr.bf16.gmra.mxu0 %v507
        %v713 = vpop.f32.mrf.mxu0
        %v714 = vadd.f32 %v272, %v713
        %v715 = vpop.f32.mrf.mxu0
        %v716 = vpop.f32.mrf.mxu0
        %v717 = vadd.f32 %v272, %v716
        %v718 = vpop.f32.mrf.mxu0
        %719 = vmatprep.mubr.bf16.mxu0 0
        %720 = vmatmul.mubr.bf16.gmra.mxu0 %v510
        %v721 = vpop.f32.mrf.mxu0
        %v722 = vadd.f32 %v272, %v721
        %v723 = vpop.f32.mrf.mxu0
        %v724 = vpop.f32.mrf.mxu0
        %v725 = vadd.f32 %v272, %v724
        %v726 = vpop.f32.mrf.mxu0
        %727 = vmatprep.mubr.bf16.mxu0 0
        %728 = vmatmul.mubr.bf16.gmra.mxu0 %v513
        %v729 = vpop.f32.mrf.mxu0
        %v730 = vadd.f32 %v272, %v729
        %v731 = vpop.f32.mrf.mxu0
        %v732 = vpop.f32.mrf.mxu0
        %v733 = vadd.f32 %v272, %v732
        %v734 = vpop.f32.mrf.mxu0
        %735 = vmatprep.mubr.bf16.mxu0 0
        %736 = vmatmul.mubr.bf16.gmra.mxu0 %v516
        %v737 = vpop.f32.mrf.mxu0
        %v738 = vadd.f32 %v272, %v737
        %v739 = vpop.f32.mrf.mxu0
        %v740 = vpop.f32.mrf.mxu0
        %v741 = vadd.f32 %v272, %v740
        %v742 = vpop.f32.mrf.mxu0
        %743 = vmatprep.mubr.bf16.mxu0 0
        %744 = vmatmul.mubr.bf16.gmra.mxu0 %v519
        %v745 = vpop.f32.mrf.mxu0
        %v746 = vadd.f32 %v272, %v745
        %v747 = vpop.f32.mrf.mxu0
        %v748 = vpop.f32.mrf.mxu0
        %v749 = vadd.f32 %v272, %v748
        %v750 = vpop.f32.mrf.mxu0
        %751 = vmatprep.mubr.bf16.mxu0 0
        %752 = vmatmul.mubr.bf16.gmra.mxu0 %v522
        %v753 = vpop.f32.mrf.mxu0
        %v754 = vadd.f32 %v272, %v753
        %v755 = vpop.f32.mrf.mxu0
        %v756 = vpop.f32.mrf.mxu0
        %v757 = vadd.f32 %v272, %v756
        %v758 = vpop.f32.mrf.mxu0
        %759 = vmatprep.mubr.bf16.mxu0 0
        %760 = vmatmul.mubr.bf16.gmra.mxu0 %v525
        %v761 = vpop.f32.mrf.mxu0
        %v762 = vadd.f32 %v272, %v761
        %v763 = vpop.f32.mrf.mxu0
        %v764 = vpop.f32.mrf.mxu0
        %v765 = vadd.f32 %v272, %v764
        %v766 = vpop.f32.mrf.mxu0
        %767 = vmatprep.mubr.bf16.mxu0 0
        %768 = vmatmul.mubr.bf16.gmra.mxu0 %v528
        %v769 = vpop.f32.mrf.mxu0
        %v770 = vadd.f32 %v272, %v769
        %v771 = vpop.f32.mrf.mxu0
        %v772 = vpop.f32.mrf.mxu0
        %v773 = vadd.f32 %v272, %v772
        %v774 = vpop.f32.mrf.mxu0
        %775 = vmatprep.mubr.bf16.mxu0 0
        %776 = vmatmul.mubr.bf16.gmra.mxu0 %v531
        %v777 = vpop.f32.mrf.mxu0
        %v778 = vadd.f32 %v272, %v777
        %v779 = vpop.f32.mrf.mxu0
        %v780 = vpop.f32.mrf.mxu0
        %v781 = vadd.f32 %v272, %v780
        %v782 = vpop.f32.mrf.mxu0
        %783 = vmatprep.mubr.bf16.mxu0 0
        %784 = vmatmul.mubr.bf16.gmra.mxu0 %v534
        %v785 = vpop.f32.mrf.mxu0
        %v786 = vadd.f32 %v272, %v785
        %v787 = vpop.f32.mrf.mxu0
        %v788 = vpop.f32.mrf.mxu0
        %v789 = vadd.f32 %v272, %v788
        %v790 = vpop.f32.mrf.mxu0
        %791 = vmatprep.mubr.bf16.mxu0 0
        %792 = vmatmul.mubr.bf16.gmra.mxu0 %v537
        %v793 = vpop.f32.mrf.mxu0
        %v794 = vadd.f32 %v272, %v793
        %v795 = vpop.f32.mrf.mxu0
        %v796 = vpop.f32.mrf.mxu0
        %v797 = vadd.f32 %v272, %v796
        %v798 = vpop.f32.mrf.mxu0
        %799 = vmatprep.mubr.bf16.mxu0 0
        %800 = vmatmul.mubr.bf16.gmra.mxu0 %v540
        %v801 = vpop.f32.mrf.mxu0
        %v802 = vadd.f32 %v272, %v801
        %v803 = vpop.f32.mrf.mxu0
        %v804 = vpop.f32.mrf.mxu0
        %v805 = vadd.f32 %v272, %v804
        %v806 = vpop.f32.mrf.mxu0
        %807 = vmatprep.mubr.bf16.mxu0 0
        %808 = vmatmul.mubr.bf16.gmra.mxu0 %v543
        %v809 = vpop.f32.mrf.mxu0
        %v810 = vadd.f32 %v272, %v809
        %v811 = vpop.f32.mrf.mxu0
        %v812 = vpop.f32.mrf.mxu0
        %v813 = vadd.f32 %v272, %v812
        %v814 = vpop.f32.mrf.mxu0
        %815 = vmatprep.mubr.bf16.mxu0 0
        %816 = vmatmul.mubr.bf16.gmra.mxu0 %v546
        %v817 = vpop.f32.mrf.mxu0
        %v818 = vadd.f32 %v272, %v817
        %v819 = vpop.f32.mrf.mxu0
        %v820 = vpop.f32.mrf.mxu0
        %v821 = vadd.f32 %v272, %v820
        %v822 = vpop.f32.mrf.mxu0
        %823 = vmatprep.mubr.bf16.mxu0 0
        %824 = vmatmul.mubr.bf16.gmra.mxu0 %v549
        %v825 = vpop.f32.mrf.mxu0
        %v826 = vadd.f32 %v272, %v825
        %v827 = vpop.f32.mrf.mxu0
        %v828 = vpop.f32.mrf.mxu0
        %v829 = vadd.f32 %v272, %v828
        %v830 = vpop.f32.mrf.mxu0
        %831 = vmatprep.mubr.bf16.mxu0 0
        %832 = vmatmul.mubr.bf16.gmra.mxu0 %v552
        %v833 = vpop.f32.mrf.mxu0
        %v834 = vadd.f32 %v272, %v833
        %v835 = vpop.f32.mrf.mxu0
        %v836 = vpop.f32.mrf.mxu0
        %v837 = vadd.f32 %v272, %v836
        %v838 = vpop.f32.mrf.mxu0
        %839 = vmatprep.mubr.bf16.mxu0 0
        %840 = vmatmul.mubr.bf16.gmra.mxu0 %v555
        %v841 = vpop.f32.mrf.mxu0
        %v842 = vadd.f32 %v272, %v841
        %v843 = vpop.f32.mrf.mxu0
        %v844 = vpop.f32.mrf.mxu0
        %v845 = vadd.f32 %v272, %v844
        %v846 = vpop.f32.mrf.mxu0
        %847 = vmatprep.mubr.bf16.mxu0 0
        %848 = vmatmul.mubr.bf16.gmra.mxu0 %v558
        %v849 = vpop.f32.mrf.mxu0
        %v850 = vadd.f32 %v272, %v849
        %v851 = vpop.f32.mrf.mxu0
        %v852 = vpop.f32.mrf.mxu0
        %v853 = vadd.f32 %v272, %v852
        %v854 = vpop.f32.mrf.mxu0
        %855 = vdwg.mxu0
        %v856 = vmax.f32 %v602, 0.0
        %v857 = vmax.f32 %v605, 0.0
        %v858 = vmax.f32 %v610, 0.0
        %v859 = vmax.f32 %v613, 0.0
        %v860 = vmax.f32 %v618, 0.0
        %v861 = vmax.f32 %v621, 0.0
        %v862 = vmax.f32 %v626, 0.0
        %v863 = vmax.f32 %v629, 0.0
        %v864 = vmax.f32 %v634, 0.0
        %v865 = vmax.f32 %v637, 0.0
        %v866 = vmax.f32 %v642, 0.0
        %v867 = vmax.f32 %v645, 0.0
        %v868 = vmax.f32 %v650, 0.0
        %v869 = vmax.f32 %v653, 0.0
        %v870 = vmax.f32 %v658, 0.0
        %v871 = vmax.f32 %v661, 0.0
        %v872 = vmax.f32 %v666, 0.0
        %v873 = vmax.f32 %v669, 0.0
        %v874 = vmax.f32 %v674, 0.0
        %v875 = vmax.f32 %v677, 0.0
        %v876 = vmax.f32 %v682, 0.0
        %v877 = vmax.f32 %v685, 0.0
        %v878 = vmax.f32 %v690, 0.0
        %v879 = vmax.f32 %v693, 0.0
        %v880 = vmax.f32 %v698, 0.0
        %v881 = vmax.f32 %v701, 0.0
        %v882 = vmax.f32 %v706, 0.0
        %v883 = vmax.f32 %v709, 0.0
        %v884 = vmax.f32 %v714, 0.0
        %v885 = vmax.f32 %v717, 0.0
        %v886 = vmax.f32 %v722, 0.0
        %v887 = vmax.f32 %v725, 0.0
        %v888 = vmax.f32 %v730, 0.0
        %v889 = vmax.f32 %v733, 0.0
        %v890 = vmax.f32 %v738, 0.0
        %v891 = vmax.f32 %v741, 0.0
        %v892 = vmax.f32 %v746, 0.0
        %v893 = vmax.f32 %v749, 0.0
        %v894 = vmax.f32 %v754, 0.0
        %v895 = vmax.f32 %v757, 0.0
        %v896 = vmax.f32 %v762, 0.0
        %v897 = vmax.f32 %v765, 0.0
        %v898 = vmax.f32 %v770, 0.0
        %v899 = vmax.f32 %v773, 0.0
        %v900 = vmax.f32 %v778, 0.0
        %v901 = vmax.f32 %v781, 0.0
        %v902 = vmax.f32 %v786, 0.0
        %v903 = vmax.f32 %v789, 0.0
        %v904 = vmax.f32 %v794, 0.0
        %v905 = vmax.f32 %v797, 0.0
        %v906 = vmax.f32 %v802, 0.0
        %v907 = vmax.f32 %v805, 0.0
        %v908 = vmax.f32 %v810, 0.0
        %v909 = vmax.f32 %v813, 0.0
        %v910 = vmax.f32 %v818, 0.0
        %v911 = vmax.f32 %v821, 0.0
        %v912 = vmax.f32 %v826, 0.0
        %v913 = vmax.f32 %v829, 0.0
        %v914 = vmax.f32 %v834, 0.0
        %v915 = vmax.f32 %v837, 0.0
        %v916 = vmax.f32 %v842, 0.0
        %v917 = vmax.f32 %v845, 0.0
        %v918 = vmax.f32 %v850, 0.0
        %v919 = vmax.f32 %v853, 0.0
        %920 = vst [vmem:[%s172] sm:$0xff] %v856
        %921 = vst [vmem:[%s172 + $0x8] sm:$0xff] %v857
        %922 = vst [vmem:[%s172 + $0x10] sm:$0xff] %v858
        %923 = vst [vmem:[%s172 + $0x18] sm:$0xff] %v859
        %924 = vst [vmem:[%s172 + $0x20] sm:$0xff] %v860
        %925 = vst [vmem:[%s172 + $0x28] sm:$0xff] %v861
        %926 = vst [vmem:[%s172 + $0x30] sm:$0xff] %v862
        %927 = vst [vmem:[%s172 + $0x38] sm:$0xff] %v863
        %928 = vst [vmem:[%s172 + $0x40] sm:$0xff] %v864
        %929 = vst [vmem:[%s172 + $0x48] sm:$0xff] %v865
        %930 = vst [vmem:[%s172 + $0x50] sm:$0xff] %v866
        %931 = vst [vmem:[%s172 + $0x58] sm:$0xff] %v867
        %932 = vst [vmem:[%s172 + $0x60] sm:$0xff] %v868
        %933 = vst [vmem:[%s172 + $0x68] sm:$0xff] %v869
        %934 = vst [vmem:[%s172 + $0x70] sm:$0xff] %v870
        %935 = vst [vmem:[%s172 + $0x78] sm:$0xff] %v871
        %936 = vst [vmem:[%s172 + $0x80] sm:$0xff] %v872
        %937 = vst [vmem:[%s172 + $0x88] sm:$0xff] %v873
        %938 = vst [vmem:[%s172 + $0x90] sm:$0xff] %v874
        %939 = vst [vmem:[%s172 + $0x98] sm:$0xff] %v875
        %940 = vst [vmem:[%s172 + $0xa0] sm:$0xff] %v876
        %941 = vst [vmem:[%s172 + $0xa8] sm:$0xff] %v877
        %942 = vst [vmem:[%s172 + $0xb0] sm:$0xff] %v878
        %943 = vst [vmem:[%s172 + $0xb8] sm:$0xff] %v879
        %944 = vst [vmem:[%s172 + $0xc0] sm:$0xff] %v880
        %945 = vst [vmem:[%s172 + $0xc8] sm:$0xff] %v881
        %946 = vst [vmem:[%s172 + $0xd0] sm:$0xff] %v882
        %947 = vst [vmem:[%s172 + $0xd8] sm:$0xff] %v883
        %948 = vst [vmem:[%s172 + $0xe0] sm:$0xff] %v884
        %949 = vst [vmem:[%s172 + $0xe8] sm:$0xff] %v885
        %950 = vst [vmem:[%s172 + $0xf0] sm:$0xff] %v886
        %951 = vst [vmem:[%s172 + $0xf8] sm:$0xff] %v887
        %952 = vst [vmem:[%s172 + $0x100] sm:$0xff] %v888
        %953 = vst [vmem:[%s172 + $0x108] sm:$0xff] %v889
        %954 = vst [vmem:[%s172 + $0x110] sm:$0xff] %v890
        %955 = vst [vmem:[%s172 + $0x118] sm:$0xff] %v891
        %956 = vst [vmem:[%s172 + $0x120] sm:$0xff] %v892
        %957 = vst [vmem:[%s172 + $0x128] sm:$0xff] %v893
        %958 = vst [vmem:[%s172 + $0x130] sm:$0xff] %v894
        %959 = vst [vmem:[%s172 + $0x138] sm:$0xff] %v895
        %960 = vst [vmem:[%s172 + $0x140] sm:$0xff] %v896
        %961 = vst [vmem:[%s172 + $0x148] sm:$0xff] %v897
        %962 = vst [vmem:[%s172 + $0x150] sm:$0xff] %v898
        %963 = vst [vmem:[%s172 + $0x158] sm:$0xff] %v899
        %964 = vst [vmem:[%s172 + $0x160] sm:$0xff] %v900
        %965 = vst [vmem:[%s172 + $0x168] sm:$0xff] %v901
        %966 = vst [vmem:[%s172 + $0x170] sm:$0xff] %v902
        %967 = vst [vmem:[%s172 + $0x178] sm:$0xff] %v903
        %968 = vst [vmem:[%s172 + $0x180] sm:$0xff] %v904
        %969 = vst [vmem:[%s172 + $0x188] sm:$0xff] %v905
        %970 = vst [vmem:[%s172 + $0x190] sm:$0xff] %v906
        %971 = vst [vmem:[%s172 + $0x198] sm:$0xff] %v907
        %972 = vst [vmem:[%s172 + $0x1a0] sm:$0xff] %v908
        %973 = vst [vmem:[%s172 + $0x1a8] sm:$0xff] %v909
        %974 = vst [vmem:[%s172 + $0x1b0] sm:$0xff] %v910
        %975 = vst [vmem:[%s172 + $0x1b8] sm:$0xff] %v911
        %976 = vst [vmem:[%s172 + $0x1c0] sm:$0xff] %v912
        %977 = vst [vmem:[%s172 + $0x1c8] sm:$0xff] %v913
        %978 = vst [vmem:[%s172 + $0x1d0] sm:$0xff] %v914
        %979 = vst [vmem:[%s172 + $0x1d8] sm:$0xff] %v915
        %980 = vst [vmem:[%s172 + $0x1e0] sm:$0xff] %v916
        %981 = vst [vmem:[%s172 + $0x1e8] sm:$0xff] %v917
        %982 = vst [vmem:[%s172 + $0x1f0] sm:$0xff] %v918
        %983 = vst [vmem:[%s172 + $0x1f8] sm:$0xff] %v919
        %s984 = sand.u32 %s90, 1
        %s985 = sand.u32 %s90, 1
        %s986 = smul.addr %s985, 512
        %s987 = scalar_lea.vmem [#allocation2], %s986
        // Predicated region
        $region33: #{convnet_forward.5} parent=31 // pred_check
          %p988 = pneg %p100
        $region34: #{convnet_forward.5} parent=31 // pred_check_branch
          %990 = sbr.rel (%p988) target = $region36
        $region35: #{convnet_forward.5} parent=31 // pred_region
          %s991 = smul.u32 64, %s14
          %s992 = ssub.s32 196, %s991
          %p993 = scmp.lt.s32.totalorder %s992, 64
          %s994 = scalar_select %p993, %s992, 64
          %s995 = smul.u32 128, %s994
          %p996 = scmp.ne.s32.totalorder 0, %s995
          %s997 = smul.addr %s991, 8
          %s998 = scalar_lea.vmem %s3, %s997
          // Predicated region
          $region37: #{convnet_forward.5} parent=35 // pred_check
            %p999 = pneg %p996
          $region38: #{convnet_forward.5} parent=35 // pred_check_branch
            %1001 = sbr.rel (%p999) target = $region40
          $region39: #{convnet_forward.5} parent=35 // pred_region
            // Predicated region
            $region41: #{convnet_forward.5} parent=39 // pred_check
              _
            $region42: #{convnet_forward.5} parent=39 // pred_check_branch
              %1003 = sbr.rel (0) target = $region44
            $region43: #{convnet_forward.5} parent=39 // pred_region
              // Predicated region
              $region63: #{convnet_forward.5} parent=43 // pred_check
                _
              $region64: #{convnet_forward.5} parent=43 // pred_check_branch
                %1179 = sbr.rel (0) target = $region66
              $region65: #{convnet_forward.5} parent=43 // pred_region
                %s1180 = sshrl.u32 %s994, 6
                // While loop
                $region67: #{convnet_forward.5} parent=65 // loop_pre_header
                  _
                $region68: #{convnet_forward.5} parent=65 // loop_header
                  %s1182 = sphi 0, %s1184
                  %p1183 = scmp.ge.s32.totalorder %s1182, %s1180
                  %s1187 = sphi 0, %s1320
                  %s1188 = sphi %s987, %s1323
                  %s1189 = sphi %s998, %s1324
                $region69: #{convnet_forward.5} parent=65 // loop_header_branch
                  %1186 = sbr.rel (%p1183) target = $region73
                $region70: #{convnet_forward.5} parent=65 // loop_body
                  %v1190 = vld [vmem:[%s1188] sm:$0xff]
                  %1191 = vst [vmem:[%s1189] sm:$0xff] %v1190
                  %v1192 = vld [vmem:[%s1188 + $0x8] sm:$0xff]
                  %1193 = vst [vmem:[%s1189 + $0x8] sm:$0xff] %v1192
                  %v1194 = vld [vmem:[%s1188 + $0x10] sm:$0xff]
                  %1195 = vst [vmem:[%s1189 + $0x10] sm:$0xff] %v1194
                  %v1196 = vld [vmem:[%s1188 + $0x18] sm:$0xff]
                  %1197 = vst [vmem:[%s1189 + $0x18] sm:$0xff] %v1196
                  %v1198 = vld [vmem:[%s1188 + $0x20] sm:$0xff]
                  %1199 = vst [vmem:[%s1189 + $0x20] sm:$0xff] %v1198
                  %v1200 = vld [vmem:[%s1188 + $0x28] sm:$0xff]
                  %1201 = vst [vmem:[%s1189 + $0x28] sm:$0xff] %v1200
                  %v1202 = vld [vmem:[%s1188 + $0x30] sm:$0xff]
                  %1203 = vst [vmem:[%s1189 + $0x30] sm:$0xff] %v1202
                  %v1204 = vld [vmem:[%s1188 + $0x38] sm:$0xff]
                  %1205 = vst [vmem:[%s1189 + $0x38] sm:$0xff] %v1204
                  %v1206 = vld [vmem:[%s1188 + $0x40] sm:$0xff]
                  %1207 = vst [vmem:[%s1189 + $0x40] sm:$0xff] %v1206
                  %v1208 = vld [vmem:[%s1188 + $0x48] sm:$0xff]
                  %1209 = vst [vmem:[%s1189 + $0x48] sm:$0xff] %v1208
                  %v1210 = vld [vmem:[%s1188 + $0x50] sm:$0xff]
                  %1211 = vst [vmem:[%s1189 + $0x50] sm:$0xff] %v1210
                  %v1212 = vld [vmem:[%s1188 + $0x58] sm:$0xff]
                  %1213 = vst [vmem:[%s1189 + $0x58] sm:$0xff] %v1212
                  %v1214 = vld [vmem:[%s1188 + $0x60] sm:$0xff]
                  %1215 = vst [vmem:[%s1189 + $0x60] sm:$0xff] %v1214
                  %v1216 = vld [vmem:[%s1188 + $0x68] sm:$0xff]
                  %1217 = vst [vmem:[%s1189 + $0x68] sm:$0xff] %v1216
                  %v1218 = vld [vmem:[%s1188 + $0x70] sm:$0xff]
                  %1219 = vst [vmem:[%s1189 + $0x70] sm:$0xff] %v1218
                  %v1220 = vld [vmem:[%s1188 + $0x78] sm:$0xff]
                  %1221 = vst [vmem:[%s1189 + $0x78] sm:$0xff] %v1220
                  %v1222 = vld [vmem:[%s1188 + $0x80] sm:$0xff]
                  %1223 = vst [vmem:[%s1189 + $0x80] sm:$0xff] %v1222
                  %v1224 = vld [vmem:[%s1188 + $0x88] sm:$0xff]
                  %1225 = vst [vmem:[%s1189 + $0x88] sm:$0xff] %v1224
                  %v1226 = vld [vmem:[%s1188 + $0x90] sm:$0xff]
                  %1227 = vst [vmem:[%s1189 + $0x90] sm:$0xff] %v1226
                  %v1228 = vld [vmem:[%s1188 + $0x98] sm:$0xff]
                  %1229 = vst [vmem:[%s1189 + $0x98] sm:$0xff] %v1228
                  %v1230 = vld [vmem:[%s1188 + $0xa0] sm:$0xff]
                  %1231 = vst [vmem:[%s1189 + $0xa0] sm:$0xff] %v1230
                  %v1232 = vld [vmem:[%s1188 + $0xa8] sm:$0xff]
                  %1233 = vst [vmem:[%s1189 + $0xa8] sm:$0xff] %v1232
                  %v1234 = vld [vmem:[%s1188 + $0xb0] sm:$0xff]
                  %1235 = vst [vmem:[%s1189 + $0xb0] sm:$0xff] %v1234
                  %v1236 = vld [vmem:[%s1188 + $0xb8] sm:$0xff]
                  %1237 = vst [vmem:[%s1189 + $0xb8] sm:$0xff] %v1236
                  %v1238 = vld [vmem:[%s1188 + $0xc0] sm:$0xff]
                  %1239 = vst [vmem:[%s1189 + $0xc0] sm:$0xff] %v1238
                  %v1240 = vld [vmem:[%s1188 + $0xc8] sm:$0xff]
                  %1241 = vst [vmem:[%s1189 + $0xc8] sm:$0xff] %v1240
                  %v1242 = vld [vmem:[%s1188 + $0xd0] sm:$0xff]
                  %1243 = vst [vmem:[%s1189 + $0xd0] sm:$0xff] %v1242
                  %v1244 = vld [vmem:[%s1188 + $0xd8] sm:$0xff]
                  %1245 = vst [vmem:[%s1189 + $0xd8] sm:$0xff] %v1244
                  %v1246 = vld [vmem:[%s1188 + $0xe0] sm:$0xff]
                  %1247 = vst [vmem:[%s1189 + $0xe0] sm:$0xff] %v1246
                  %v1248 = vld [vmem:[%s1188 + $0xe8] sm:$0xff]
                  %1249 = vst [vmem:[%s1189 + $0xe8] sm:$0xff] %v1248
                  %v1250 = vld [vmem:[%s1188 + $0xf0] sm:$0xff]
                  %1251 = vst [vmem:[%s1189 + $0xf0] sm:$0xff] %v1250
                  %v1252 = vld [vmem:[%s1188 + $0xf8] sm:$0xff]
                  %1253 = vst [vmem:[%s1189 + $0xf8] sm:$0xff] %v1252
                  %v1254 = vld [vmem:[%s1188 + $0x100] sm:$0xff]
                  %1255 = vst [vmem:[%s1189 + $0x100] sm:$0xff] %v1254
                  %v1256 = vld [vmem:[%s1188 + $0x108] sm:$0xff]
                  %1257 = vst [vmem:[%s1189 + $0x108] sm:$0xff] %v1256
                  %v1258 = vld [vmem:[%s1188 + $0x110] sm:$0xff]
                  %1259 = vst [vmem:[%s1189 + $0x110] sm:$0xff] %v1258
                  %v1260 = vld [vmem:[%s1188 + $0x118] sm:$0xff]
                  %1261 = vst [vmem:[%s1189 + $0x118] sm:$0xff] %v1260
                  %v1262 = vld [vmem:[%s1188 + $0x120] sm:$0xff]
                  %1263 = vst [vmem:[%s1189 + $0x120] sm:$0xff] %v1262
                  %v1264 = vld [vmem:[%s1188 + $0x128] sm:$0xff]
                  %1265 = vst [vmem:[%s1189 + $0x128] sm:$0xff] %v1264
                  %v1266 = vld [vmem:[%s1188 + $0x130] sm:$0xff]
                  %1267 = vst [vmem:[%s1189 + $0x130] sm:$0xff] %v1266
                  %v1268 = vld [vmem:[%s1188 + $0x138] sm:$0xff]
                  %1269 = vst [vmem:[%s1189 + $0x138] sm:$0xff] %v1268
                  %v1270 = vld [vmem:[%s1188 + $0x140] sm:$0xff]
                  %1271 = vst [vmem:[%s1189 + $0x140] sm:$0xff] %v1270
                  %v1272 = vld [vmem:[%s1188 + $0x148] sm:$0xff]
                  %1273 = vst [vmem:[%s1189 + $0x148] sm:$0xff] %v1272
                  %v1274 = vld [vmem:[%s1188 + $0x150] sm:$0xff]
                  %1275 = vst [vmem:[%s1189 + $0x150] sm:$0xff] %v1274
                  %v1276 = vld [vmem:[%s1188 + $0x158] sm:$0xff]
                  %1277 = vst [vmem:[%s1189 + $0x158] sm:$0xff] %v1276
                  %v1278 = vld [vmem:[%s1188 + $0x160] sm:$0xff]
                  %1279 = vst [vmem:[%s1189 + $0x160] sm:$0xff] %v1278
                  %v1280 = vld [vmem:[%s1188 + $0x168] sm:$0xff]
                  %1281 = vst [vmem:[%s1189 + $0x168] sm:$0xff] %v1280
                  %v1282 = vld [vmem:[%s1188 + $0x170] sm:$0xff]
                  %1283 = vst [vmem:[%s1189 + $0x170] sm:$0xff] %v1282
                  %v1284 = vld [vmem:[%s1188 + $0x178] sm:$0xff]
                  %1285 = vst [vmem:[%s1189 + $0x178] sm:$0xff] %v1284
                  %v1286 = vld [vmem:[%s1188 + $0x180] sm:$0xff]
                  %1287 = vst [vmem:[%s1189 + $0x180] sm:$0xff] %v1286
                  %v1288 = vld [vmem:[%s1188 + $0x188] sm:$0xff]
                  %1289 = vst [vmem:[%s1189 + $0x188] sm:$0xff] %v1288
                  %v1290 = vld [vmem:[%s1188 + $0x190] sm:$0xff]
                  %1291 = vst [vmem:[%s1189 + $0x190] sm:$0xff] %v1290
                  %v1292 = vld [vmem:[%s1188 + $0x198] sm:$0xff]
                  %1293 = vst [vmem:[%s1189 + $0x198] sm:$0xff] %v1292
                  %v1294 = vld [vmem:[%s1188 + $0x1a0] sm:$0xff]
                  %1295 = vst [vmem:[%s1189 + $0x1a0] sm:$0xff] %v1294
                  %v1296 = vld [vmem:[%s1188 + $0x1a8] sm:$0xff]
                  %1297 = vst [vmem:[%s1189 + $0x1a8] sm:$0xff] %v1296
                  %v1298 = vld [vmem:[%s1188 + $0x1b0] sm:$0xff]
                  %1299 = vst [vmem:[%s1189 + $0x1b0] sm:$0xff] %v1298
                  %v1300 = vld [vmem:[%s1188 + $0x1b8] sm:$0xff]
                  %1301 = vst [vmem:[%s1189 + $0x1b8] sm:$0xff] %v1300
                  %v1302 = vld [vmem:[%s1188 + $0x1c0] sm:$0xff]
                  %1303 = vst [vmem:[%s1189 + $0x1c0] sm:$0xff] %v1302
                  %v1304 = vld [vmem:[%s1188 + $0x1c8] sm:$0xff]
                  %1305 = vst [vmem:[%s1189 + $0x1c8] sm:$0xff] %v1304
                  %v1306 = vld [vmem:[%s1188 + $0x1d0] sm:$0xff]
                  %1307 = vst [vmem:[%s1189 + $0x1d0] sm:$0xff] %v1306
                  %v1308 = vld [vmem:[%s1188 + $0x1d8] sm:$0xff]
                  %1309 = vst [vmem:[%s1189 + $0x1d8] sm:$0xff] %v1308
                  %v1310 = vld [vmem:[%s1188 + $0x1e0] sm:$0xff]
                  %1311 = vst [vmem:[%s1189 + $0x1e0] sm:$0xff] %v1310
                  %v1312 = vld [vmem:[%s1188 + $0x1e8] sm:$0xff]
                  %1313 = vst [vmem:[%s1189 + $0x1e8] sm:$0xff] %v1312
                  %v1314 = vld [vmem:[%s1188 + $0x1f0] sm:$0xff]
                  %1315 = vst [vmem:[%s1189 + $0x1f0] sm:$0xff] %v1314
                  %v1316 = vld [vmem:[%s1188 + $0x1f8] sm:$0xff]
                  %1317 = vst [vmem:[%s1189 + $0x1f8] sm:$0xff] %v1316
                  %s1318 = sadd.s32 1, %s1187
                  %p1319 = scmp.ge.s32.totalorder %s1318, %s1180
                  %s1320 = scalar_select %p1319, 0, %s1318
                  %s1321 = smul.u32 %s1320, 512
                  %s1322 = smul.u32 %s1320, 512
                  %s1323 = scalar_lea.vmem %s987, %s1321 [#allocation2]
                  %s1324 = scalar_lea.vmem %s998, %s1322
                $region71: #{convnet_forward.5} parent=65 // loop_footer
                  %s1184 = sadd.s32 %s1182, 1
                $region72: #{convnet_forward.5} parent=65 // loop_footer_branch
                  %1181 = sbr.rel target = $region68
                $region73: #{convnet_forward.5} parent=65 // loop_exit
                  _
                %s1325 = sshrl.u32 %s994, 6
                %s1326 = sand.u32 %s994, 63
                %s1327 = smul.u32 %s1325, 64
                %s1328 = smul.u32 8, %s1327
                %s1329 = scalar_lea.vmem %s987, %s1328 [#allocation2]
                %s1330 = smul.u32 8, %s1327
                %s1331 = scalar_lea.vmem %s998, %s1330
                // While loop
                $region74: #{convnet_forward.5} parent=65 // loop_pre_header
                  _
                $region75: #{convnet_forward.5} parent=65 // loop_header
                  %s1333 = sphi 0, %s1335
                  %p1334 = scmp.ge.s32.totalorder %s1333, %s1326
                  %s1338 = sphi 0, %s1345
                  %s1339 = sphi %s1329, %s1348
                  %s1340 = sphi %s1331, %s1349
                $region76: #{convnet_forward.5} parent=65 // loop_header_branch
                  %1337 = sbr.rel (%p1334) target = $region80
                $region77: #{convnet_forward.5} parent=65 // loop_body
                  %v1341 = vld [vmem:[%s1339] sm:$0xff]
                  %1342 = vst [vmem:[%s1340] sm:$0xff] %v1341
                  %s1343 = sadd.s32 1, %s1338
                  %p1344 = scmp.ge.s32.totalorder %s1343, %s1326
                  %s1345 = scalar_select %p1344, 0, %s1343
                  %s1346 = smul.u32 %s1345, 8
                  %s1347 = smul.u32 %s1345, 8
                  %s1348 = scalar_lea.vmem %s1329, %s1346 [#allocation2]
                  %s1349 = scalar_lea.vmem %s1331, %s1347
                $region78: #{convnet_forward.5} parent=65 // loop_footer
                  %s1335 = sadd.s32 %s1333, 1
                $region79: #{convnet_forward.5} parent=65 // loop_footer_branch
                  %1332 = sbr.rel target = $region75
                $region80: #{convnet_forward.5} parent=65 // loop_exit
                  _
              $region66: #{convnet_forward.5} parent=43 // pred_fallthru
                _
              // Predicated region
              $region81: #{convnet_forward.5} parent=43 // pred_check
                _
              $region82: #{convnet_forward.5} parent=43 // pred_check_branch
                %1351 = sbr.rel target = $region84
              $region83: #{convnet_forward.5} parent=43 // pred_region
                _
              $region84: #{convnet_forward.5} parent=43 // pred_fallthru
                _
            $region44: #{convnet_forward.5} parent=39 // pred_fallthru
              _
            // Predicated region
            $region45: #{convnet_forward.5} parent=39 // pred_check
              _
            $region46: #{convnet_forward.5} parent=39 // pred_check_branch
              %1005 = sbr.rel target = $region48
            $region47: #{convnet_forward.5} parent=39 // pred_region
              %s1007 = ssub.s32 256, 1
              %s1008 = sshrl.u32 %s994, 6
              // While loop
              $region49: #{convnet_forward.5} parent=47 // loop_pre_header
                _
              $region50: #{convnet_forward.5} parent=47 // loop_header
                %s1010 = sphi 0, %s1012
                %p1011 = scmp.ge.s32.totalorder %s1010, %s1008
                %s1015 = sphi 0, %s1148
                %s1016 = sphi %s987, %s1151
                %s1017 = sphi %s998, %s1152
              $region51: #{convnet_forward.5} parent=47 // loop_header_branch
                %1014 = sbr.rel (%p1011) target = $region55
              $region52: #{convnet_forward.5} parent=47 // loop_body
                %v1018 = vld [vmem:[%s1016] sm:%s1007]
                %1019 = vst [vmem:[%s1017] sm:%s1007] %v1018
                %v1020 = vld [vmem:[%s1016 + $0x8] sm:%s1007]
                %1021 = vst [vmem:[%s1017 + $0x8] sm:%s1007] %v1020
                %v1022 = vld [vmem:[%s1016 + $0x10] sm:%s1007]
                %1023 = vst [vmem:[%s1017 + $0x10] sm:%s1007] %v1022
                %v1024 = vld [vmem:[%s1016 + $0x18] sm:%s1007]
                %1025 = vst [vmem:[%s1017 + $0x18] sm:%s1007] %v1024
                %v1026 = vld [vmem:[%s1016 + $0x20] sm:%s1007]
                %1027 = vst [vmem:[%s1017 + $0x20] sm:%s1007] %v1026
                %v1028 = vld [vmem:[%s1016 + $0x28] sm:%s1007]
                %1029 = vst [vmem:[%s1017 + $0x28] sm:%s1007] %v1028
                %v1030 = vld [vmem:[%s1016 + $0x30] sm:%s1007]
                %1031 = vst [vmem:[%s1017 + $0x30] sm:%s1007] %v1030
                %v1032 = vld [vmem:[%s1016 + $0x38] sm:%s1007]
                %1033 = vst [vmem:[%s1017 + $0x38] sm:%s1007] %v1032
                %v1034 = vld [vmem:[%s1016 + $0x40] sm:%s1007]
                %1035 = vst [vmem:[%s1017 + $0x40] sm:%s1007] %v1034
                %v1036 = vld [vmem:[%s1016 + $0x48] sm:%s1007]
                %1037 = vst [vmem:[%s1017 + $0x48] sm:%s1007] %v1036
                %v1038 = vld [vmem:[%s1016 + $0x50] sm:%s1007]
                %1039 = vst [vmem:[%s1017 + $0x50] sm:%s1007] %v1038
                %v1040 = vld [vmem:[%s1016 + $0x58] sm:%s1007]
                %1041 = vst [vmem:[%s1017 + $0x58] sm:%s1007] %v1040
                %v1042 = vld [vmem:[%s1016 + $0x60] sm:%s1007]
                %1043 = vst [vmem:[%s1017 + $0x60] sm:%s1007] %v1042
                %v1044 = vld [vmem:[%s1016 + $0x68] sm:%s1007]
                %1045 = vst [vmem:[%s1017 + $0x68] sm:%s1007] %v1044
                %v1046 = vld [vmem:[%s1016 + $0x70] sm:%s1007]
                %1047 = vst [vmem:[%s1017 + $0x70] sm:%s1007] %v1046
                %v1048 = vld [vmem:[%s1016 + $0x78] sm:%s1007]
                %1049 = vst [vmem:[%s1017 + $0x78] sm:%s1007] %v1048
                %v1050 = vld [vmem:[%s1016 + $0x80] sm:%s1007]
                %1051 = vst [vmem:[%s1017 + $0x80] sm:%s1007] %v1050
                %v1052 = vld [vmem:[%s1016 + $0x88] sm:%s1007]
                %1053 = vst [vmem:[%s1017 + $0x88] sm:%s1007] %v1052
                %v1054 = vld [vmem:[%s1016 + $0x90] sm:%s1007]
                %1055 = vst [vmem:[%s1017 + $0x90] sm:%s1007] %v1054
                %v1056 = vld [vmem:[%s1016 + $0x98] sm:%s1007]
                %1057 = vst [vmem:[%s1017 + $0x98] sm:%s1007] %v1056
                %v1058 = vld [vmem:[%s1016 + $0xa0] sm:%s1007]
                %1059 = vst [vmem:[%s1017 + $0xa0] sm:%s1007] %v1058
                %v1060 = vld [vmem:[%s1016 + $0xa8] sm:%s1007]
                %1061 = vst [vmem:[%s1017 + $0xa8] sm:%s1007] %v1060
                %v1062 = vld [vmem:[%s1016 + $0xb0] sm:%s1007]
                %1063 = vst [vmem:[%s1017 + $0xb0] sm:%s1007] %v1062
                %v1064 = vld [vmem:[%s1016 + $0xb8] sm:%s1007]
                %1065 = vst [vmem:[%s1017 + $0xb8] sm:%s1007] %v1064
                %v1066 = vld [vmem:[%s1016 + $0xc0] sm:%s1007]
                %1067 = vst [vmem:[%s1017 + $0xc0] sm:%s1007] %v1066
                %v1068 = vld [vmem:[%s1016 + $0xc8] sm:%s1007]
                %1069 = vst [vmem:[%s1017 + $0xc8] sm:%s1007] %v1068
                %v1070 = vld [vmem:[%s1016 + $0xd0] sm:%s1007]
                %1071 = vst [vmem:[%s1017 + $0xd0] sm:%s1007] %v1070
                %v1072 = vld [vmem:[%s1016 + $0xd8] sm:%s1007]
                %1073 = vst [vmem:[%s1017 + $0xd8] sm:%s1007] %v1072
                %v1074 = vld [vmem:[%s1016 + $0xe0] sm:%s1007]
                %1075 = vst [vmem:[%s1017 + $0xe0] sm:%s1007] %v1074
                %v1076 = vld [vmem:[%s1016 + $0xe8] sm:%s1007]
                %1077 = vst [vmem:[%s1017 + $0xe8] sm:%s1007] %v1076
                %v1078 = vld [vmem:[%s1016 + $0xf0] sm:%s1007]
                %1079 = vst [vmem:[%s1017 + $0xf0] sm:%s1007] %v1078
                %v1080 = vld [vmem:[%s1016 + $0xf8] sm:%s1007]
                %1081 = vst [vmem:[%s1017 + $0xf8] sm:%s1007] %v1080
                %v1082 = vld [vmem:[%s1016 + $0x100] sm:%s1007]
                %1083 = vst [vmem:[%s1017 + $0x100] sm:%s1007] %v1082
                %v1084 = vld [vmem:[%s1016 + $0x108] sm:%s1007]
                %1085 = vst [vmem:[%s1017 + $0x108] sm:%s1007] %v1084
                %v1086 = vld [vmem:[%s1016 + $0x110] sm:%s1007]
                %1087 = vst [vmem:[%s1017 + $0x110] sm:%s1007] %v1086
                %v1088 = vld [vmem:[%s1016 + $0x118] sm:%s1007]
                %1089 = vst [vmem:[%s1017 + $0x118] sm:%s1007] %v1088
                %v1090 = vld [vmem:[%s1016 + $0x120] sm:%s1007]
                %1091 = vst [vmem:[%s1017 + $0x120] sm:%s1007] %v1090
                %v1092 = vld [vmem:[%s1016 + $0x128] sm:%s1007]
                %1093 = vst [vmem:[%s1017 + $0x128] sm:%s1007] %v1092
                %v1094 = vld [vmem:[%s1016 + $0x130] sm:%s1007]
                %1095 = vst [vmem:[%s1017 + $0x130] sm:%s1007] %v1094
                %v1096 = vld [vmem:[%s1016 + $0x138] sm:%s1007]
                %1097 = vst [vmem:[%s1017 + $0x138] sm:%s1007] %v1096
                %v1098 = vld [vmem:[%s1016 + $0x140] sm:%s1007]
                %1099 = vst [vmem:[%s1017 + $0x140] sm:%s1007] %v1098
                %v1100 = vld [vmem:[%s1016 + $0x148] sm:%s1007]
                %1101 = vst [vmem:[%s1017 + $0x148] sm:%s1007] %v1100
                %v1102 = vld [vmem:[%s1016 + $0x150] sm:%s1007]
                %1103 = vst [vmem:[%s1017 + $0x150] sm:%s1007] %v1102
                %v1104 = vld [vmem:[%s1016 + $0x158] sm:%s1007]
                %1105 = vst [vmem:[%s1017 + $0x158] sm:%s1007] %v1104
                %v1106 = vld [vmem:[%s1016 + $0x160] sm:%s1007]
                %1107 = vst [vmem:[%s1017 + $0x160] sm:%s1007] %v1106
                %v1108 = vld [vmem:[%s1016 + $0x168] sm:%s1007]
                %1109 = vst [vmem:[%s1017 + $0x168] sm:%s1007] %v1108
                %v1110 = vld [vmem:[%s1016 + $0x170] sm:%s1007]
                %1111 = vst [vmem:[%s1017 + $0x170] sm:%s1007] %v1110
                %v1112 = vld [vmem:[%s1016 + $0x178] sm:%s1007]
                %1113 = vst [vmem:[%s1017 + $0x178] sm:%s1007] %v1112
                %v1114 = vld [vmem:[%s1016 + $0x180] sm:%s1007]
                %1115 = vst [vmem:[%s1017 + $0x180] sm:%s1007] %v1114
                %v1116 = vld [vmem:[%s1016 + $0x188] sm:%s1007]
                %1117 = vst [vmem:[%s1017 + $0x188] sm:%s1007] %v1116
                %v1118 = vld [vmem:[%s1016 + $0x190] sm:%s1007]
                %1119 = vst [vmem:[%s1017 + $0x190] sm:%s1007] %v1118
                %v1120 = vld [vmem:[%s1016 + $0x198] sm:%s1007]
                %1121 = vst [vmem:[%s1017 + $0x198] sm:%s1007] %v1120
                %v1122 = vld [vmem:[%s1016 + $0x1a0] sm:%s1007]
                %1123 = vst [vmem:[%s1017 + $0x1a0] sm:%s1007] %v1122
                %v1124 = vld [vmem:[%s1016 + $0x1a8] sm:%s1007]
                %1125 = vst [vmem:[%s1017 + $0x1a8] sm:%s1007] %v1124
                %v1126 = vld [vmem:[%s1016 + $0x1b0] sm:%s1007]
                %1127 = vst [vmem:[%s1017 + $0x1b0] sm:%s1007] %v1126
                %v1128 = vld [vmem:[%s1016 + $0x1b8] sm:%s1007]
                %1129 = vst [vmem:[%s1017 + $0x1b8] sm:%s1007] %v1128
                %v1130 = vld [vmem:[%s1016 + $0x1c0] sm:%s1007]
                %1131 = vst [vmem:[%s1017 + $0x1c0] sm:%s1007] %v1130
                %v1132 = vld [vmem:[%s1016 + $0x1c8] sm:%s1007]
                %1133 = vst [vmem:[%s1017 + $0x1c8] sm:%s1007] %v1132
                %v1134 = vld [vmem:[%s1016 + $0x1d0] sm:%s1007]
                %1135 = vst [vmem:[%s1017 + $0x1d0] sm:%s1007] %v1134
                %v1136 = vld [vmem:[%s1016 + $0x1d8] sm:%s1007]
                %1137 = vst [vmem:[%s1017 + $0x1d8] sm:%s1007] %v1136
                %v1138 = vld [vmem:[%s1016 + $0x1e0] sm:%s1007]
                %1139 = vst [vmem:[%s1017 + $0x1e0] sm:%s1007] %v1138
                %v1140 = vld [vmem:[%s1016 + $0x1e8] sm:%s1007]
                %1141 = vst [vmem:[%s1017 + $0x1e8] sm:%s1007] %v1140
                %v1142 = vld [vmem:[%s1016 + $0x1f0] sm:%s1007]
                %1143 = vst [vmem:[%s1017 + $0x1f0] sm:%s1007] %v1142
                %v1144 = vld [vmem:[%s1016 + $0x1f8] sm:%s1007]
                %1145 = vst [vmem:[%s1017 + $0x1f8] sm:%s1007] %v1144
                %s1146 = sadd.s32 1, %s1015
                %p1147 = scmp.ge.s32.totalorder %s1146, %s1008
                %s1148 = scalar_select %p1147, 0, %s1146
                %s1149 = smul.u32 %s1148, 512
                %s1150 = smul.u32 %s1148, 512
                %s1151 = scalar_lea.vmem %s987, %s1149 [#allocation2]
                %s1152 = scalar_lea.vmem %s998, %s1150
              $region53: #{convnet_forward.5} parent=47 // loop_footer
                %s1012 = sadd.s32 %s1010, 1
              $region54: #{convnet_forward.5} parent=47 // loop_footer_branch
                %1009 = sbr.rel target = $region50
              $region55: #{convnet_forward.5} parent=47 // loop_exit
                _
              %s1153 = sshrl.u32 %s994, 6
              %s1154 = sand.u32 %s994, 63
              %s1155 = smul.u32 %s1153, 64
              %s1156 = smul.u32 8, %s1155
              %s1157 = scalar_lea.vmem %s987, %s1156 [#allocation2]
              %s1158 = smul.u32 8, %s1155
              %s1159 = scalar_lea.vmem %s998, %s1158
              // While loop
              $region56: #{convnet_forward.5} parent=47 // loop_pre_header
                _
              $region57: #{convnet_forward.5} parent=47 // loop_header
                %s1161 = sphi 0, %s1163
                %p1162 = scmp.ge.s32.totalorder %s1161, %s1154
                %s1166 = sphi 0, %s1173
                %s1167 = sphi %s1157, %s1176
                %s1168 = sphi %s1159, %s1177
              $region58: #{convnet_forward.5} parent=47 // loop_header_branch
                %1165 = sbr.rel (%p1162) target = $region62
              $region59: #{convnet_forward.5} parent=47 // loop_body
                %v1169 = vld [vmem:[%s1167] sm:%s1007]
                %1170 = vst [vmem:[%s1168] sm:%s1007] %v1169
                %s1171 = sadd.s32 1, %s1166
                %p1172 = scmp.ge.s32.totalorder %s1171, %s1154
                %s1173 = scalar_select %p1172, 0, %s1171
                %s1174 = smul.u32 %s1173, 8
                %s1175 = smul.u32 %s1173, 8
                %s1176 = scalar_lea.vmem %s1157, %s1174 [#allocation2]
                %s1177 = scalar_lea.vmem %s1159, %s1175
              $region60: #{convnet_forward.5} parent=47 // loop_footer
                %s1163 = sadd.s32 %s1161, 1
              $region61: #{convnet_forward.5} parent=47 // loop_footer_branch
                %1160 = sbr.rel target = $region57
              $region62: #{convnet_forward.5} parent=47 // loop_exit
                _
            $region48: #{convnet_forward.5} parent=39 // pred_fallthru
              _
          $region40: #{convnet_forward.5} parent=35 // pred_fallthru
            _
          %1352 = vnop
        $region36: #{convnet_forward.5} parent=31 // pred_fallthru
          _
      $region32: #{convnet_forward.5} parent=5 // pred_fallthru
        _
      %p1353 = scmp.le.s32.totalorder 2, %s9
      // Predicated region
      $region85: #{convnet_forward.5} parent=5 // pred_check
        %p1354 = pneg %p1353
      $region86: #{convnet_forward.5} parent=5 // pred_check_branch
        %1356 = sbr.rel (%p1354) target = $region88
      $region87: #{convnet_forward.5} parent=5 // pred_region
        %s1357 = ssub.s32 %s9, 2
        // Predicated region
        $region89: #{convnet_forward.5} parent=87 // pred_check
          %p1358 = pneg %p106
        $region90: #{convnet_forward.5} parent=87 // pred_check_branch
          %1360 = sbr.rel (%p1358) target = $region92
        $region91: #{convnet_forward.5} parent=87 // pred_region
          %s1361 = sand.u32 %s91, 1
          %s1362 = sand.u32 %s91, 1
          %s1363 = smul.addr %s1362, 512
          %s1364 = scalar_lea.vmem [#allocation2], %s1363
        $region92: #{convnet_forward.5} parent=87 // pred_fallthru
          _
      $region88: #{convnet_forward.5} parent=5 // pred_fallthru
        _
    $region6: #{convnet_forward.5} parent=1 // loop_footer
      %s13 = sadd.s32 1, %s9
    $region7: #{convnet_forward.5} parent=1 // loop_footer_branch
      %8 = sbr.rel target = $region3
    $region8: #{convnet_forward.5} parent=1 // loop_exit
      _

// kernel: convnet_forward.6
$region0: #{convnet_forward.6}
  #allocation0 [shape = 'u32[]', space=smem, size = 0x4, offset = 0x4, fixed_abs, tag = 'smem constant byte address 0x4 - core index']
  #allocation1 [shape = 'u32[144,128]{1,0:T(1,128)}', space=vmem, size = 0x12000, scoped, tag = 'internal scratch']
  %s0 = inlined_call_operand.vmem [shape: f32[392,4,128], index: 0, kind: input, shape index: {}]
  %s1 = inlined_call_operand.vmem [shape: f32[392,128], index: 1, kind: output, shape index: {}]
  %s2 = sld [smem:[#allocation0]]
  $region85: #{convnet_forward.6} parent=0
    _
  %s4 = ssub.s32 1, %s2
  %s5 = scalar_select 0, %s4, %s2
  $region1: #{convnet_forward.6} parent=0
    #allocation2 [shape = 'u8[262144]{0}', space=vmem, size = 0x40000, scoped, tag = 'output window, operand 0']
    loop: start=0, step=1, limit=4
    $region2: #{convnet_forward.6} parent=1 // loop_pre_header
      _
    $region3: #{convnet_forward.6} parent=1 // loop_header
      %s7 = sphi 0, %s11
      %p8 = scmp.ge.s32.totalorder %s7, 4
      %s17 = sphi 0, %s19
      %s20 = sphi 0, %s17
      %s21 = sphi 0, %s20
      %s37 = sphi 0, %s21
      %s43 = sphi 0, %s45
      %s46 = sphi 0, %s43
      %s47 = sphi 0, %s46
      %s63 = sphi 0, %s47
    $region4: #{convnet_forward.6} parent=1 // loop_header_branch
      %10 = sbr.rel (%p8) target = $region8
    $region5: #{convnet_forward.6} parent=1 // loop_body
      %s12 = ssub.s32 %s7, 1
      %s13 = ssub.s32 %s7, 2
      %s14 = sadd.s32 %s7, 1
      %s15 = ssub.s32 %s7, %s14
      %p16 = scmp.eq.s32.totalorder %s15, 0
      %s18 = sadd.s32 %s17, 1
      %s19 = scalar_select %p16, %s17, %s18
      %p22 = pneg %p16
      %p23 = scmp.eq.s32.totalorder %s7, 1
      %p24 = por %p22, %p23
      %p25 = scmp.ne.s32.totalorder %s17, %s20
      %p26 = scmp.eq.s32.totalorder %s7, 0
      %p27 = por %p25, %p26
      %p28 = scmp.ne.s32.totalorder %s17, %s20
      %p29 = scmp.eq.s32.totalorder %s12, 1
      %p30 = por %p28, %p29
      %p31 = scmp.ne.s32.totalorder %s20, %s21
      %p32 = scmp.eq.s32.totalorder %s12, 0
      %p33 = por %p31, %p32
      %p34 = scmp.ne.s32.totalorder %s20, %s21
      %p35 = scmp.eq.s32.totalorder %s13, 1
      %p36 = por %p34, %p35
      %p38 = scmp.ne.s32.totalorder %s21, %s37
      %p39 = scmp.eq.s32.totalorder %s13, 0
      %p40 = por %p38, %p39
      %s41 = ssub.s32 %s7, %s14
      %p42 = scmp.eq.s32.totalorder %s41, 0
      %s44 = sadd.s32 %s43, 1
      %s45 = scalar_select %p42, %s43, %s44
      %p48 = pneg %p42
      %p49 = scmp.eq.s32.totalorder %s7, 1
      %p50 = por %p48, %p49
      %p51 = scmp.ne.s32.totalorder %s43, %s46
      %p52 = scmp.eq.s32.totalorder %s7, 0
      %p53 = por %p51, %p52
      %p54 = scmp.ne.s32.totalorder %s43, %s46
      %p55 = scmp.eq.s32.totalorder %s12, 1
      %p56 = por %p54, %p55
      %p57 = scmp.ne.s32.totalorder %s46, %s47
      %p58 = scmp.eq.s32.totalorder %s12, 0
      %p59 = por %p57, %p58
      %p60 = scmp.ne.s32.totalorder %s46, %s47
      %p61 = scmp.eq.s32.totalorder %s13, 1
      %p62 = por %p60, %p61
      %p64 = scmp.ne.s32.totalorder %s47, %s63
      %p65 = scmp.eq.s32.totalorder %s13, 0
      %p66 = por %p64, %p65
      %p67 = scmp.le.s32.totalorder 1, %s7
      %p68 = scmp.lt.s32.totalorder %s7, 3
      %p69 = pnand %p67, %p68
      %p70 = pneg %p69
      // Predicated region
      $region9: #{convnet_forward.6} parent=5 // pred_check
        _
      $region10: #{convnet_forward.6} parent=5 // pred_check_branch
        %72 = sbr.rel (%p69) target = $region12
      $region11: #{convnet_forward.6} parent=5 // pred_region
        %s73 = ssub.s32 %s7, 1
      $region12: #{convnet_forward.6} parent=5 // pred_fallthru
        _
      %p74 = scmp.lt.s32.totalorder %s7, 2
      // Predicated region
      $region13: #{convnet_forward.6} parent=5 // pred_check
        %p75 = pneg %p74
      $region14: #{convnet_forward.6} parent=5 // pred_check_branch
        %77 = sbr.rel (%p75) target = $region16
      $region15: #{convnet_forward.6} parent=5 // pred_region
        // Predicated region
        $region17: #{convnet_forward.6} parent=15 // pred_check
          %p78 = pneg %p27
        $region18: #{convnet_forward.6} parent=15 // pred_check_branch
          %80 = sbr.rel (%p78) target = $region20
        $region19: #{convnet_forward.6} parent=15 // pred_region
          %s81 = smul.u32 256, %s7
          %s82 = ssub.s32 392, %s81
          %p83 = scmp.lt.s32.totalorder %s82, 256
          %s84 = scalar_select %p83, %s82, 256
          %s85 = smul.u32 64, %s84
          %p86 = scmp.lt.s32.totalorder %s81, 391
          %s87 = scalar_select %p86, %s81, 391
          %s88 = smul.addr %s87, 4
          %s89 = scalar_lea.vmem %s0, %s88
          %s90 = smul.u32 256, %s7
          %s91 = ssub.s32 392, %s90
          %p92 = scmp.lt.s32.totalorder %s91, 256
          %s93 = scalar_select %p92, %s91, 256
          %s94 = smul.u32 64, %s93
        $region20: #{convnet_forward.6} parent=15 // pred_fallthru
          _
      $region16: #{convnet_forward.6} parent=5 // pred_fallthru
        _
      %p95 = scmp.le.s32.totalorder 1, %s7
      %p96 = scmp.lt.s32.totalorder %s7, 3
      %p97 = pnand %p95, %p96
      %p98 = pneg %p97
      // Predicated region
      $region21: #{convnet_forward.6} parent=5 // pred_check
        _
      $region22: #{convnet_forward.6} parent=5 // pred_check_branch
        %100 = sbr.rel (%p97) target = $region24
      $region23: #{convnet_forward.6} parent=5 // pred_region
        %s101 = ssub.s32 %s7, 1
        %s102 = smul.u32 256, %s12
        %s103 = ssub.s32 392, %s102
        %p104 = scmp.lt.s32.totalorder %s103, 256
        %s105 = scalar_select %p104, %s103, 256
        %s106 = smul.u32 64, %s105
        %p107 = scmp.lt.s32.totalorder %s102, 391
        %s108 = scalar_select %p107, %s102, 391
        %s109 = smul.addr %s108, 4
        %s110 = scalar_lea.vmem %s0, %s109
        %p111 = pneg %p33
        %p112 = pneg %p30
        %p113 = pneg %p59
        %p114 = pneg %p56
        %s115 = sand.u32 %s46, 1
        %s116 = sand.u32 %s46, 1
        %s117 = smul.addr %s116, 256
        %s118 = scalar_lea.vmem [#allocation2], %s117
        %s119 = smul.u32 256, %s12
        %s120 = ssub.s32 392, %s119
        %p121 = scmp.lt.s32.totalorder %s120, 256
        %s122 = scalar_select %p121, %s120, 256
        %s123 = smul.u32 64, %s122
        %p124 = scmp.lt.s32.totalorder %s119, 391
        %s125 = scalar_select %p124, %s119, 391
        %s126 = smul.addr %s125, 4
        %s127 = scalar_lea.vmem %s0, %s126
        %s128 = smul.u32 256, %s12
        %s129 = ssub.s32 392, %s128
        %p130 = scmp.lt.s32.totalorder %s129, 256
        %s131 = scalar_select %p130, %s129, 256
        %s132 = smul.u32 64, %s131
        %s133 = smul.u32 32, %s12
        %s134 = ssub.s32 49, %s133
        %p135 = scmp.lt.s32.totalorder %s134, 32
        %s136 = scalar_select %p135, %s134, 32
        %s137 = smul.u32 128, %s136
        %v138 = vld [vmem:[%s127] sm:$0xf]
        %v139 = vld [vmem:[%s127 + $0x4] sm:$0xf]
        %v140 = vld [vmem:[%s127 + $0x8] sm:$0xf]
        %v141 = vld [vmem:[%s127 + $0xc] sm:$0xf]
        %v142 = vld [vmem:[%s127 + $0x10] sm:$0xf]
        %v143 = vld [vmem:[%s127 + $0x14] sm:$0xf]
        %v144 = vld [vmem:[%s127 + $0x18] sm:$0xf]
        %v145 = vld [vmem:[%s127 + $0x1c] sm:$0xf]
        %v146 = vld [vmem:[%s127 + $0x20] sm:$0xf]
        %v147 = vld [vmem:[%s127 + $0x24] sm:$0xf]
        %v148 = vld [vmem:[%s127 + $0x28] sm:$0xf]
        %v149 = vld [vmem:[%s127 + $0x2c] sm:$0xf]
        %v150 = vld [vmem:[%s127 + $0x30] sm:$0xf]
        %v151 = vld [vmem:[%s127 + $0x34] sm:$0xf]
        %v152 = vld [vmem:[%s127 + $0x38] sm:$0xf]
        %v153 = vld [vmem:[%s127 + $0x3c] sm:$0xf]
        %v154 = vld [vmem:[%s127 + $0x40] sm:$0xf]
        %v155 = vld [vmem:[%s127 + $0x44] sm:$0xf]
        %v156 = vld [vmem:[%s127 + $0x48] sm:$0xf]
        %v157 = vld [vmem:[%s127 + $0x4c] sm:$0xf]
        %v158 = vld [vmem:[%s127 + $0x50] sm:$0xf]
        %v159 = vld [vmem:[%s127 + $0x54] sm:$0xf]
        %v160 = vld [vmem:[%s127 + $0x58] sm:$0xf]
        %v161 = vld [vmem:[%s127 + $0x5c] sm:$0xf]
        %v162 = vld [vmem:[%s127 + $0x60] sm:$0xf]
        %v163 = vld [vmem:[%s127 + $0x64] sm:$0xf]
        %v164 = vld [vmem:[%s127 + $0x68] sm:$0xf]
        %v165 = vld [vmem:[%s127 + $0x6c] sm:$0xf]
        %v166 = vld [vmem:[%s127 + $0x70] sm:$0xf]
        %v167 = vld [vmem:[%s127 + $0x74] sm:$0xf]
        %v168 = vld [vmem:[%s127 + $0x78] sm:$0xf]
        %v169 = vld [vmem:[%s127 + $0x7c] sm:$0xf]
        %v170 = vld [vmem:[%s127 + $0x80] sm:$0xf]
        %v171 = vld [vmem:[%s127 + $0x84] sm:$0xf]
        %v172 = vld [vmem:[%s127 + $0x88] sm:$0xf]
        %v173 = vld [vmem:[%s127 + $0x8c] sm:$0xf]
        %v174 = vld [vmem:[%s127 + $0x90] sm:$0xf]
        %v175 = vld [vmem:[%s127 + $0x94] sm:$0xf]
        %v176 = vld [vmem:[%s127 + $0x98] sm:$0xf]
        %v177 = vld [vmem:[%s127 + $0x9c] sm:$0xf]
        %v178 = vld [vmem:[%s127 + $0xa0] sm:$0xf]
        %v179 = vld [vmem:[%s127 + $0xa4] sm:$0xf]
        %v180 = vld [vmem:[%s127 + $0xa8] sm:$0xf]
        %v181 = vld [vmem:[%s127 + $0xac] sm:$0xf]
        %v182 = vld [vmem:[%s127 + $0xb0] sm:$0xf]
        %v183 = vld [vmem:[%s127 + $0xb4] sm:$0xf]
        %v184 = vld [vmem:[%s127 + $0xb8] sm:$0xf]
        %v185 = vld [vmem:[%s127 + $0xbc] sm:$0xf]
        %v186 = vld [vmem:[%s127 + $0xc0] sm:$0xf]
        %v187 = vld [vmem:[%s127 + $0xc4] sm:$0xf]
        %v188 = vld [vmem:[%s127 + $0xc8] sm:$0xf]
        %v189 = vld [vmem:[%s127 + $0xcc] sm:$0xf]
        %v190 = vld [vmem:[%s127 + $0xd0] sm:$0xf]
        %v191 = vld [vmem:[%s127 + $0xd4] sm:$0xf]
        %v192 = vld [vmem:[%s127 + $0xd8] sm:$0xf]
        %v193 = vld [vmem:[%s127 + $0xdc] sm:$0xf]
        %v194 = vld [vmem:[%s127 + $0xe0] sm:$0xf]
        %v195 = vld [vmem:[%s127 + $0xe4] sm:$0xf]
        %v196 = vld [vmem:[%s127 + $0xe8] sm:$0xf]
        %v197 = vld [vmem:[%s127 + $0xec] sm:$0xf]
        %v198 = vld [vmem:[%s127 + $0xf0] sm:$0xf]
        %v199 = vld [vmem:[%s127 + $0xf4] sm:$0xf]
        %v200 = vld [vmem:[%s127 + $0xf8] sm:$0xf]
        %v201 = vld [vmem:[%s127 + $0xfc] sm:$0xf]
        %v202 = vld [vmem:[%s127 + $0x100] sm:$0xf]
        %v203 = vld [vmem:[%s127 + $0x104] sm:$0xf]
        %v204 = vld [vmem:[%s127 + $0x108] sm:$0xf]
        %v205 = vld [vmem:[%s127 + $0x10c] sm:$0xf]
        %v206 = vld [vmem:[%s127 + $0x110] sm:$0xf]
        %v207 = vld [vmem:[%s127 + $0x114] sm:$0xf]
        %v208 = vld [vmem:[%s127 + $0x118] sm:$0xf]
        %v209 = vld [vmem:[%s127 + $0x11c] sm:$0xf]
        %v210 = vld [vmem:[%s127 + $0x120] sm:$0xf]
        %v211 = vld [vmem:[%s127 + $0x124] sm:$0xf]
        %v212 = vld [vmem:[%s127 + $0x128] sm:$0xf]
        %v213 = vld [vmem:[%s127 + $0x12c] sm:$0xf]
        %v214 = vld [vmem:[%s127 + $0x130] sm:$0xf]
        %v215 = vld [vmem:[%s127 + $0x134] sm:$0xf]
        %v216 = vld [vmem:[%s127 + $0x138] sm:$0xf]
        %v217 = vld [vmem:[%s127 + $0x13c] sm:$0xf]
        %v218 = vld [vmem:[%s127 + $0x140] sm:$0xf]
        %v219 = vld [vmem:[%s127 + $0x144] sm:$0xf]
        %v220 = vld [vmem:[%s127 + $0x148] sm:$0xf]
        %v221 = vld [vmem:[%s127 + $0x14c] sm:$0xf]
        %v222 = vld [vmem:[%s127 + $0x150] sm:$0xf]
        %v223 = vld [vmem:[%s127 + $0x154] sm:$0xf]
        %v224 = vld [vmem:[%s127 + $0x158] sm:$0xf]
        %v225 = vld [vmem:[%s127 + $0x15c] sm:$0xf]
        %v226 = vld [vmem:[%s127 + $0x160] sm:$0xf]
        %v227 = vld [vmem:[%s127 + $0x164] sm:$0xf]
        %v228 = vld [vmem:[%s127 + $0x168] sm:$0xf]
        %v229 = vld [vmem:[%s127 + $0x16c] sm:$0xf]
        %v230 = vld [vmem:[%s127 + $0x170] sm:$0xf]
        %v231 = vld [vmem:[%s127 + $0x174] sm:$0xf]
        %v232 = vld [vmem:[%s127 + $0x178] sm:$0xf]
        %v233 = vld [vmem:[%s127 + $0x17c] sm:$0xf]
        %v234 = vld [vmem:[%s127 + $0x180] sm:$0xf]
        %v235 = vld [vmem:[%s127 + $0x184] sm:$0xf]
        %v236 = vld [vmem:[%s127 + $0x188] sm:$0xf]
        %v237 = vld [vmem:[%s127 + $0x18c] sm:$0xf]
        %v238 = vld [vmem:[%s127 + $0x190] sm:$0xf]
        %v239 = vld [vmem:[%s127 + $0x194] sm:$0xf]
        %v240 = vld [vmem:[%s127 + $0x198] sm:$0xf]
        %v241 = vld [vmem:[%s127 + $0x19c] sm:$0xf]
        %v242 = vld [vmem:[%s127 + $0x1a0] sm:$0xf]
        %v243 = vld [vmem:[%s127 + $0x1a4] sm:$0xf]
        %v244 = vld [vmem:[%s127 + $0x1a8] sm:$0xf]
        %v245 = vld [vmem:[%s127 + $0x1ac] sm:$0xf]
        %v246 = vld [vmem:[%s127 + $0x1b0] sm:$0xf]
        %v247 = vld [vmem:[%s127 + $0x1b4] sm:$0xf]
        %v248 = vld [vmem:[%s127 + $0x1b8] sm:$0xf]
        %v249 = vld [vmem:[%s127 + $0x1bc] sm:$0xf]
        %v250 = vld [vmem:[%s127 + $0x1c0] sm:$0xf]
        %v251 = vld [vmem:[%s127 + $0x1c4] sm:$0xf]
        %v252 = vld [vmem:[%s127 + $0x1c8] sm:$0xf]
        %v253 = vld [vmem:[%s127 + $0x1cc] sm:$0xf]
        %v254 = vld [vmem:[%s127 + $0x1d0] sm:$0xf]
        %v255 = vld [vmem:[%s127 + $0x1d4] sm:$0xf]
        %v256 = vld [vmem:[%s127 + $0x1d8] sm:$0xf]
        %v257 = vld [vmem:[%s127 + $0x1dc] sm:$0xf]
        %v258 = vld [vmem:[%s127 + $0x1e0] sm:$0xf]
        %v259 = vld [vmem:[%s127 + $0x1e4] sm:$0xf]
        %v260 = vld [vmem:[%s127 + $0x1e8] sm:$0xf]
        %v261 = vld [vmem:[%s127 + $0x1ec] sm:$0xf]
        %v262 = vld [vmem:[%s127 + $0x1f0] sm:$0xf]
        %v263 = vld [vmem:[%s127 + $0x1f4] sm:$0xf]
        %v264 = vld [vmem:[%s127 + $0x1f8] sm:$0xf]
        %v265 = vld [vmem:[%s127 + $0x1fc] sm:$0xf]
        %v266 = vld [vmem:[%s127 + $0x200] sm:$0xf]
        %v267 = vld [vmem:[%s127 + $0x204] sm:$0xf]
        %v268 = vld [vmem:[%s127 + $0x208] sm:$0xf]
        %v269 = vld [vmem:[%s127 + $0x20c] sm:$0xf]
        %v270 = vld [vmem:[%s127 + $0x210] sm:$0xf]
        %v271 = vld [vmem:[%s127 + $0x214] sm:$0xf]
        %v272 = vld [vmem:[%s127 + $0x218] sm:$0xf]
        %v273 = vld [vmem:[%s127 + $0x21c] sm:$0xf]
        %v274 = vld [vmem:[%s127 + $0x220] sm:$0xf]
        %v275 = vld [vmem:[%s127 + $0x224] sm:$0xf]
        %v276 = vld [vmem:[%s127 + $0x228] sm:$0xf]
        %v277 = vld [vmem:[%s127 + $0x22c] sm:$0xf]
        %v278 = vld [vmem:[%s127 + $0x230] sm:$0xf]
        %v279 = vld [vmem:[%s127 + $0x234] sm:$0xf]
        %v280 = vld [vmem:[%s127 + $0x238] sm:$0xf]
        %v281 = vld [vmem:[%s127 + $0x23c] sm:$0xf]
        %v282 = vld [vmem:[%s127 + $0x240] sm:$0xf]
        %v283 = vld [vmem:[%s127 + $0x244] sm:$0xf]
        %v284 = vld [vmem:[%s127 + $0x248] sm:$0xf]
        %v285 = vld [vmem:[%s127 + $0x24c] sm:$0xf]
        %v286 = vld [vmem:[%s127 + $0x250] sm:$0xf]
        %v287 = vld [vmem:[%s127 + $0x254] sm:$0xf]
        %v288 = vld [vmem:[%s127 + $0x258] sm:$0xf]
        %v289 = vld [vmem:[%s127 + $0x25c] sm:$0xf]
        %v290 = vld [vmem:[%s127 + $0x260] sm:$0xf]
        %v291 = vld [vmem:[%s127 + $0x264] sm:$0xf]
        %v292 = vld [vmem:[%s127 + $0x268] sm:$0xf]
        %v293 = vld [vmem:[%s127 + $0x26c] sm:$0xf]
        %v294 = vld [vmem:[%s127 + $0x270] sm:$0xf]
        %v295 = vld [vmem:[%s127 + $0x274] sm:$0xf]
        %v296 = vld [vmem:[%s127 + $0x278] sm:$0xf]
        %v297 = vld [vmem:[%s127 + $0x27c] sm:$0xf]
        %v298 = vld [vmem:[%s127 + $0x280] sm:$0xf]
        %v299 = vld [vmem:[%s127 + $0x284] sm:$0xf]
        %v300 = vld [vmem:[%s127 + $0x288] sm:$0xf]
        %v301 = vld [vmem:[%s127 + $0x28c] sm:$0xf]
        %v302 = vld [vmem:[%s127 + $0x290] sm:$0xf]
        %v303 = vld [vmem:[%s127 + $0x294] sm:$0xf]
        %v304 = vld [vmem:[%s127 + $0x298] sm:$0xf]
        %v305 = vld [vmem:[%s127 + $0x29c] sm:$0xf]
        %v306 = vld [vmem:[%s127 + $0x2a0] sm:$0xf]
        %v307 = vld [vmem:[%s127 + $0x2a4] sm:$0xf]
        %v308 = vld [vmem:[%s127 + $0x2a8] sm:$0xf]
        %v309 = vld [vmem:[%s127 + $0x2ac] sm:$0xf]
        %v310 = vld [vmem:[%s127 + $0x2b0] sm:$0xf]
        %v311 = vld [vmem:[%s127 + $0x2b4] sm:$0xf]
        %v312 = vld [vmem:[%s127 + $0x2b8] sm:$0xf]
        %v313 = vld [vmem:[%s127 + $0x2bc] sm:$0xf]
        %v314 = vld [vmem:[%s127 + $0x2c0] sm:$0xf]
        %v315 = vld [vmem:[%s127 + $0x2c4] sm:$0xf]
        %v316 = vld [vmem:[%s127 + $0x2c8] sm:$0xf]
        %v317 = vld [vmem:[%s127 + $0x2cc] sm:$0xf]
        %v318 = vld [vmem:[%s127 + $0x2d0] sm:$0xf]
        %v319 = vld [vmem:[%s127 + $0x2d4] sm:$0xf]
        %v320 = vld [vmem:[%s127 + $0x2d8] sm:$0xf]
        %v321 = vld [vmem:[%s127 + $0x2dc] sm:$0xf]
        %v322 = vld [vmem:[%s127 + $0x2e0] sm:$0xf]
        %v323 = vld [vmem:[%s127 + $0x2e4] sm:$0xf]
        %v324 = vld [vmem:[%s127 + $0x2e8] sm:$0xf]
        %v325 = vld [vmem:[%s127 + $0x2ec] sm:$0xf]
        %v326 = vld [vmem:[%s127 + $0x2f0] sm:$0xf]
        %v327 = vld [vmem:[%s127 + $0x2f4] sm:$0xf]
        %v328 = vld [vmem:[%s127 + $0x2f8] sm:$0xf]
        %v329 = vld [vmem:[%s127 + $0x2fc] sm:$0xf]
        %v330 = vld [vmem:[%s127 + $0x300] sm:$0xf]
        %v331 = vld [vmem:[%s127 + $0x304] sm:$0xf]
        %v332 = vld [vmem:[%s127 + $0x308] sm:$0xf]
        %v333 = vld [vmem:[%s127 + $0x30c] sm:$0xf]
        %v334 = vld [vmem:[%s127 + $0x310] sm:$0xf]
        %v335 = vld [vmem:[%s127 + $0x314] sm:$0xf]
        %v336 = vld [vmem:[%s127 + $0x318] sm:$0xf]
        %v337 = vld [vmem:[%s127 + $0x31c] sm:$0xf]
        %v338 = vld [vmem:[%s127 + $0x320] sm:$0xf]
        %v339 = vld [vmem:[%s127 + $0x324] sm:$0xf]
        %v340 = vld [vmem:[%s127 + $0x328] sm:$0xf]
        %v341 = vld [vmem:[%s127 + $0x32c] sm:$0xf]
        %v342 = vld [vmem:[%s127 + $0x330] sm:$0xf]
        %v343 = vld [vmem:[%s127 + $0x334] sm:$0xf]
        %v344 = vld [vmem:[%s127 + $0x338] sm:$0xf]
        %v345 = vld [vmem:[%s127 + $0x33c] sm:$0xf]
        %v346 = vld [vmem:[%s127 + $0x340] sm:$0xf]
        %v347 = vld [vmem:[%s127 + $0x344] sm:$0xf]
        %v348 = vld [vmem:[%s127 + $0x348] sm:$0xf]
        %v349 = vld [vmem:[%s127 + $0x34c] sm:$0xf]
        %v350 = vld [vmem:[%s127 + $0x350] sm:$0xf]
        %v351 = vld [vmem:[%s127 + $0x354] sm:$0xf]
        %v352 = vld [vmem:[%s127 + $0x358] sm:$0xf]
        %v353 = vld [vmem:[%s127 + $0x35c] sm:$0xf]
        %v354 = vld [vmem:[%s127 + $0x360] sm:$0xf]
        %v355 = vld [vmem:[%s127 + $0x364] sm:$0xf]
        %v356 = vld [vmem:[%s127 + $0x368] sm:$0xf]
        %v357 = vld [vmem:[%s127 + $0x36c] sm:$0xf]
        %v358 = vld [vmem:[%s127 + $0x370] sm:$0xf]
        %v359 = vld [vmem:[%s127 + $0x374] sm:$0xf]
        %v360 = vld [vmem:[%s127 + $0x378] sm:$0xf]
        %v361 = vld [vmem:[%s127 + $0x37c] sm:$0xf]
        %v362 = vld [vmem:[%s127 + $0x380] sm:$0xf]
        %v363 = vld [vmem:[%s127 + $0x384] sm:$0xf]
        %v364 = vld [vmem:[%s127 + $0x388] sm:$0xf]
        %v365 = vld [vmem:[%s127 + $0x38c] sm:$0xf]
        %v366 = vld [vmem:[%s127 + $0x390] sm:$0xf]
        %v367 = vld [vmem:[%s127 + $0x394] sm:$0xf]
        %v368 = vld [vmem:[%s127 + $0x398] sm:$0xf]
        %v369 = vld [vmem:[%s127 + $0x39c] sm:$0xf]
        %v370 = vld [vmem:[%s127 + $0x3a0] sm:$0xf]
        %v371 = vld [vmem:[%s127 + $0x3a4] sm:$0xf]
        %v372 = vld [vmem:[%s127 + $0x3a8] sm:$0xf]
        %v373 = vld [vmem:[%s127 + $0x3ac] sm:$0xf]
        %v374 = vld [vmem:[%s127 + $0x3b0] sm:$0xf]
        %v375 = vld [vmem:[%s127 + $0x3b4] sm:$0xf]
        %v376 = vld [vmem:[%s127 + $0x3b8] sm:$0xf]
        %v377 = vld [vmem:[%s127 + $0x3bc] sm:$0xf]
        %v378 = vld [vmem:[%s127 + $0x3c0] sm:$0xf]
        %v379 = vld [vmem:[%s127 + $0x3c4] sm:$0xf]
        %v380 = vld [vmem:[%s127 + $0x3c8] sm:$0xf]
        %v381 = vld [vmem:[%s127 + $0x3cc] sm:$0xf]
        %v382 = vld [vmem:[%s127 + $0x3d0] sm:$0xf]
        %v383 = vld [vmem:[%s127 + $0x3d4] sm:$0xf]
        %v384 = vld [vmem:[%s127 + $0x3d8] sm:$0xf]
        %v385 = vld [vmem:[%s127 + $0x3dc] sm:$0xf]
        %v386 = vld [vmem:[%s127 + $0x3e0] sm:$0xf]
        %v387 = vld [vmem:[%s127 + $0x3e4] sm:$0xf]
        %v388 = vld [vmem:[%s127 + $0x3e8] sm:$0xf]
        %v389 = vld [vmem:[%s127 + $0x3ec] sm:$0xf]
        %v390 = vld [vmem:[%s127 + $0x3f0] sm:$0xf]
        %v391 = vld [vmem:[%s127 + $0x3f4] sm:$0xf]
        %v392 = vld [vmem:[%s127 + $0x3f8] sm:$0xf]
        %v393 = vld [vmem:[%s127 + $0x3fc] sm:$0xf]
        %vm394 = vcmask 1043456
        %v395 = vsel %vm394, %v138, -inf
        %v396 = vrot.slane %v395, 4
        %v397 = vmax.f32 %v395, %v396
        %v398 = vrot.slane %v397, 2
        %v399 = vmax.f32 %v397, %v398
        %v400 = vrot.slane %v399, 1
        %v401 = vmax.f32 %v399, %v400
        %v402 = vsel %vm394, %v139, -inf
        %v403 = vrot.slane %v402, 4
        %v404 = vmax.f32 %v402, %v403
        %v405 = vrot.slane %v404, 2
        %v406 = vmax.f32 %v404, %v405
        %v407 = vrot.slane %v406, 1
        %v408 = vmax.f32 %v406, %v407
        %v409 = vsel %vm394, %v140, -inf
        %v410 = vrot.slane %v409, 4
        %v411 = vmax.f32 %v409, %v410
        %v412 = vrot.slane %v411, 2
        %v413 = vmax.f32 %v411, %v412
        %v414 = vrot.slane %v413, 1
        %v415 = vmax.f32 %v413, %v414
        %v416 = vsel %vm394, %v141, -inf
        %v417 = vrot.slane %v416, 4
        %v418 = vmax.f32 %v416, %v417
        %v419 = vrot.slane %v418, 2
        %v420 = vmax.f32 %v418, %v419
        %v421 = vrot.slane %v420, 1
        %v422 = vmax.f32 %v420, %v421
        %v423 = vsel %vm394, %v142, -inf
        %v424 = vrot.slane %v423, 4
        %v425 = vmax.f32 %v423, %v424
        %v426 = vrot.slane %v425, 2
        %v427 = vmax.f32 %v425, %v426
        %v428 = vrot.slane %v427, 1
        %v429 = vmax.f32 %v427, %v428
        %v430 = vsel %vm394, %v143, -inf
        %v431 = vrot.slane %v430, 4
        %v432 = vmax.f32 %v430, %v431
        %v433 = vrot.slane %v432, 2
        %v434 = vmax.f32 %v432, %v433
        %v435 = vrot.slane %v434, 1
        %v436 = vmax.f32 %v434, %v435
        %v437 = vsel %vm394, %v144, -inf
        %v438 = vrot.slane %v437, 4
        %v439 = vmax.f32 %v437, %v438
        %v440 = vrot.slane %v439, 2
        %v441 = vmax.f32 %v439, %v440
        %v442 = vrot.slane %v441, 1
        %v443 = vmax.f32 %v441, %v442
        %v444 = vsel %vm394, %v145, -inf
        %v445 = vrot.slane %v444, 4
        %v446 = vmax.f32 %v444, %v445
        %v447 = vrot.slane %v446, 2
        %v448 = vmax.f32 %v446, %v447
        %v449 = vrot.slane %v448, 1
        %v450 = vmax.f32 %v448, %v449
        %v451 = vsel %vm394, %v146, -inf
        %v452 = vrot.slane %v451, 4
        %v453 = vmax.f32 %v451, %v452
        %v454 = vrot.slane %v453, 2
        %v455 = vmax.f32 %v453, %v454
        %v456 = vrot.slane %v455, 1
        %v457 = vmax.f32 %v455, %v456
        %v458 = vsel %vm394, %v147, -inf
        %v459 = vrot.slane %v458, 4
        %v460 = vmax.f32 %v458, %v459
        %v461 = vrot.slane %v460, 2
        %v462 = vmax.f32 %v460, %v461
        %v463 = vrot.slane %v462, 1
        %v464 = vmax.f32 %v462, %v463
        %v465 = vsel %vm394, %v148, -inf
        %v466 = vrot.slane %v465, 4
        %v467 = vmax.f32 %v465, %v466
        %v468 = vrot.slane %v467, 2
        %v469 = vmax.f32 %v467, %v468
        %v470 = vrot.slane %v469, 1
        %v471 = vmax.f32 %v469, %v470
        %v472 = vsel %vm394, %v149, -inf
        %v473 = vrot.slane %v472, 4
        %v474 = vmax.f32 %v472, %v473
        %v475 = vrot.slane %v474, 2
        %v476 = vmax.f32 %v474, %v475
        %v477 = vrot.slane %v476, 1
        %v478 = vmax.f32 %v476, %v477
        %v479 = vsel %vm394, %v150, -inf
        %v480 = vrot.slane %v479, 4
        %v481 = vmax.f32 %v479, %v480
        %v482 = vrot.slane %v481, 2
        %v483 = vmax.f32 %v481, %v482
        %v484 = vrot.slane %v483, 1
        %v485 = vmax.f32 %v483, %v484
        %v486 = vsel %vm394, %v151, -inf
        %v487 = vrot.slane %v486, 4
        %v488 = vmax.f32 %v486, %v487
        %v489 = vrot.slane %v488, 2
        %v490 = vmax.f32 %v488, %v489
        %v491 = vrot.slane %v490, 1
        %v492 = vmax.f32 %v490, %v491
        %v493 = vsel %vm394, %v152, -inf
        %v494 = vrot.slane %v493, 4
        %v495 = vmax.f32 %v493, %v494
        %v496 = vrot.slane %v495, 2
        %v497 = vmax.f32 %v495, %v496
        %v498 = vrot.slane %v497, 1
        %v499 = vmax.f32 %v497, %v498
        %v500 = vsel %vm394, %v153, -inf
        %v501 = vrot.slane %v500, 4
        %v502 = vmax.f32 %v500, %v501
        %v503 = vrot.slane %v502, 2
        %v504 = vmax.f32 %v502, %v503
        %v505 = vrot.slane %v504, 1
        %v506 = vmax.f32 %v504, %v505
        %v507 = vsel %vm394, %v154, -inf
        %v508 = vrot.slane %v507, 4
        %v509 = vmax.f32 %v507, %v508
        %v510 = vrot.slane %v509, 2
        %v511 = vmax.f32 %v509, %v510
        %v512 = vrot.slane %v511, 1
        %v513 = vmax.f32 %v511, %v512
        %v514 = vsel %vm394, %v155, -inf
        %v515 = vrot.slane %v514, 4
        %v516 = vmax.f32 %v514, %v515
        %v517 = vrot.slane %v516, 2
        %v518 = vmax.f32 %v516, %v517
        %v519 = vrot.slane %v518, 1
        %v520 = vmax.f32 %v518, %v519
        %v521 = vsel %vm394, %v156, -inf
        %v522 = vrot.slane %v521, 4
        %v523 = vmax.f32 %v521, %v522
        %v524 = vrot.slane %v523, 2
        %v525 = vmax.f32 %v523, %v524
        %v526 = vrot.slane %v525, 1
        %v527 = vmax.f32 %v525, %v526
        %v528 = vsel %vm394, %v157, -inf
        %v529 = vrot.slane %v528, 4
        %v530 = vmax.f32 %v528, %v529
        %v531 = vrot.slane %v530, 2
        %v532 = vmax.f32 %v530, %v531
        %v533 = vrot.slane %v532, 1
        %v534 = vmax.f32 %v532, %v533
        %v535 = vsel %vm394, %v158, -inf
        %v536 = vrot.slane %v535, 4
        %v537 = vmax.f32 %v535, %v536
        %v538 = vrot.slane %v537, 2
        %v539 = vmax.f32 %v537, %v538
        %v540 = vrot.slane %v539, 1
        %v541 = vmax.f32 %v539, %v540
        %v542 = vsel %vm394, %v159, -inf
        %v543 = vrot.slane %v542, 4
        %v544 = vmax.f32 %v542, %v543
        %v545 = vrot.slane %v544, 2
        %v546 = vmax.f32 %v544, %v545
        %v547 = vrot.slane %v546, 1
        %v548 = vmax.f32 %v546, %v547
        %v549 = vsel %vm394, %v160, -inf
        %v550 = vrot.slane %v549, 4
        %v551 = vmax.f32 %v549, %v550
        %v552 = vrot.slane %v551, 2
        %v553 = vmax.f32 %v551, %v552
        %v554 = vrot.slane %v553, 1
        %v555 = vmax.f32 %v553, %v554
        %v556 = vsel %vm394, %v161, -inf
        %v557 = vrot.slane %v556, 4
        %v558 = vmax.f32 %v556, %v557
        %v559 = vrot.slane %v558, 2
        %v560 = vmax.f32 %v558, %v559
        %v561 = vrot.slane %v560, 1
        %v562 = vmax.f32 %v560, %v561
        %v563 = vsel %vm394, %v162, -inf
        %v564 = vrot.slane %v563, 4
        %v565 = vmax.f32 %v563, %v564
        %v566 = vrot.slane %v565, 2
        %v567 = vmax.f32 %v565, %v566
        %v568 = vrot.slane %v567, 1
        %v569 = vmax.f32 %v567, %v568
        %v570 = vsel %vm394, %v163, -inf
        %v571 = vrot.slane %v570, 4
        %v572 = vmax.f32 %v570, %v571
        %v573 = vrot.slane %v572, 2
        %v574 = vmax.f32 %v572, %v573
        %v575 = vrot.slane %v574, 1
        %v576 = vmax.f32 %v574, %v575
        %v577 = vsel %vm394, %v164, -inf
        %v578 = vrot.slane %v577, 4
        %v579 = vmax.f32 %v577, %v578
        %v580 = vrot.slane %v579, 2
        %v581 = vmax.f32 %v579, %v580
        %v582 = vrot.slane %v581, 1
        %v583 = vmax.f32 %v581, %v582
        %v584 = vsel %vm394, %v165, -inf
        %v585 = vrot.slane %v584, 4
        %v586 = vmax.f32 %v584, %v585
        %v587 = vrot.slane %v586, 2
        %v588 = vmax.f32 %v586, %v587
        %v589 = vrot.slane %v588, 1
        %v590 = vmax.f32 %v588, %v589
        %v591 = vsel %vm394, %v166, -inf
        %v592 = vrot.slane %v591, 4
        %v593 = vmax.f32 %v591, %v592
        %v594 = vrot.slane %v593, 2
        %v595 = vmax.f32 %v593, %v594
        %v596 = vrot.slane %v595, 1
        %v597 = vmax.f32 %v595, %v596
        %v598 = vsel %vm394, %v167, -inf
        %v599 = vrot.slane %v598, 4
        %v600 = vmax.f32 %v598, %v599
        %v601 = vrot.slane %v600, 2
        %v602 = vmax.f32 %v600, %v601
        %v603 = vrot.slane %v602, 1
        %v604 = vmax.f32 %v602, %v603
        %v605 = vsel %vm394, %v168, -inf
        %v606 = vrot.slane %v605, 4
        %v607 = vmax.f32 %v605, %v606
        %v608 = vrot.slane %v607, 2
        %v609 = vmax.f32 %v607, %v608
        %v610 = vrot.slane %v609, 1
        %v611 = vmax.f32 %v609, %v610
        %v612 = vsel %vm394, %v169, -inf
        %v613 = vrot.slane %v612, 4
        %v614 = vmax.f32 %v612, %v613
        %v615 = vrot.slane %v614, 2
        %v616 = vmax.f32 %v614, %v615
        %v617 = vrot.slane %v616, 1
        %v618 = vmax.f32 %v616, %v617
        %v619 = vsel %vm394, %v170, -inf
        %v620 = vrot.slane %v619, 4
        %v621 = vmax.f32 %v619, %v620
        %v622 = vrot.slane %v621, 2
        %v623 = vmax.f32 %v621, %v622
        %v624 = vrot.slane %v623, 1
        %v625 = vmax.f32 %v623, %v624
        %v626 = vsel %vm394, %v171, -inf
        %v627 = vrot.slane %v626, 4
        %v628 = vmax.f32 %v626, %v627
        %v629 = vrot.slane %v628, 2
        %v630 = vmax.f32 %v628, %v629
        %v631 = vrot.slane %v630, 1
        %v632 = vmax.f32 %v630, %v631
        %v633 = vsel %vm394, %v172, -inf
        %v634 = vrot.slane %v633, 4
        %v635 = vmax.f32 %v633, %v634
        %v636 = vrot.slane %v635, 2
        %v637 = vmax.f32 %v635, %v636
        %v638 = vrot.slane %v637, 1
        %v639 = vmax.f32 %v637, %v638
        %v640 = vsel %vm394, %v173, -inf
        %v641 = vrot.slane %v640, 4
        %v642 = vmax.f32 %v640, %v641
        %v643 = vrot.slane %v642, 2
        %v644 = vmax.f32 %v642, %v643
        %v645 = vrot.slane %v644, 1
        %v646 = vmax.f32 %v644, %v645
        %v647 = vsel %vm394, %v174, -inf
        %v648 = vrot.slane %v647, 4
        %v649 = vmax.f32 %v647, %v648
        %v650 = vrot.slane %v649, 2
        %v651 = vmax.f32 %v649, %v650
        %v652 = vrot.slane %v651, 1
        %v653 = vmax.f32 %v651, %v652
        %v654 = vsel %vm394, %v175, -inf
        %v655 = vrot.slane %v654, 4
        %v656 = vmax.f32 %v654, %v655
        %v657 = vrot.slane %v656, 2
        %v658 = vmax.f32 %v656, %v657
        %v659 = vrot.slane %v658, 1
        %v660 = vmax.f32 %v658, %v659
        %v661 = vsel %vm394, %v176, -inf
        %v662 = vrot.slane %v661, 4
        %v663 = vmax.f32 %v661, %v662
        %v664 = vrot.slane %v663, 2
        %v665 = vmax.f32 %v663, %v664
        %v666 = vrot.slane %v665, 1
        %v667 = vmax.f32 %v665, %v666
        %v668 = vsel %vm394, %v177, -inf
        %v669 = vrot.slane %v668, 4
        %v670 = vmax.f32 %v668, %v669
        %v671 = vrot.slane %v670, 2
        %v672 = vmax.f32 %v670, %v671
        %v673 = vrot.slane %v672, 1
        %v674 = vmax.f32 %v672, %v673
        %v675 = vsel %vm394, %v178, -inf
        %v676 = vrot.slane %v675, 4
        %v677 = vmax.f32 %v675, %v676
        %v678 = vrot.slane %v677, 2
        %v679 = vmax.f32 %v677, %v678
        %v680 = vrot.slane %v679, 1
        %v681 = vmax.f32 %v679, %v680
        %v682 = vsel %vm394, %v179, -inf
        %v683 = vrot.slane %v682, 4
        %v684 = vmax.f32 %v682, %v683
        %v685 = vrot.slane %v684, 2
        %v686 = vmax.f32 %v684, %v685
        %v687 = vrot.slane %v686, 1
        %v688 = vmax.f32 %v686, %v687
        %v689 = vsel %vm394, %v180, -inf
        %v690 = vrot.slane %v689, 4
        %v691 = vmax.f32 %v689, %v690
        %v692 = vrot.slane %v691, 2
        %v693 = vmax.f32 %v691, %v692
        %v694 = vrot.slane %v693, 1
        %v695 = vmax.f32 %v693, %v694
        %v696 = vsel %vm394, %v181, -inf
        %v697 = vrot.slane %v696, 4
        %v698 = vmax.f32 %v696, %v697
        %v699 = vrot.slane %v698, 2
        %v700 = vmax.f32 %v698, %v699
        %v701 = vrot.slane %v700, 1
        %v702 = vmax.f32 %v700, %v701
        %v703 = vsel %vm394, %v182, -inf
        %v704 = vrot.slane %v703, 4
        %v705 = vmax.f32 %v703, %v704
        %v706 = vrot.slane %v705, 2
        %v707 = vmax.f32 %v705, %v706
        %v708 = vrot.slane %v707, 1
        %v709 = vmax.f32 %v707, %v708
        %v710 = vsel %vm394, %v183, -inf
        %v711 = vrot.slane %v710, 4
        %v712 = vmax.f32 %v710, %v711
        %v713 = vrot.slane %v712, 2
        %v714 = vmax.f32 %v712, %v713
        %v715 = vrot.slane %v714, 1
        %v716 = vmax.f32 %v714, %v715
        %v717 = vsel %vm394, %v184, -inf
        %v718 = vrot.slane %v717, 4
        %v719 = vmax.f32 %v717, %v718
        %v720 = vrot.slane %v719, 2
        %v721 = vmax.f32 %v719, %v720
        %v722 = vrot.slane %v721, 1
        %v723 = vmax.f32 %v721, %v722
        %v724 = vsel %vm394, %v185, -inf
        %v725 = vrot.slane %v724, 4
        %v726 = vmax.f32 %v724, %v725
        %v727 = vrot.slane %v726, 2
        %v728 = vmax.f32 %v726, %v727
        %v729 = vrot.slane %v728, 1
        %v730 = vmax.f32 %v728, %v729
        %v731 = vsel %vm394, %v186, -inf
        %v732 = vrot.slane %v731, 4
        %v733 = vmax.f32 %v731, %v732
        %v734 = vrot.slane %v733, 2
        %v735 = vmax.f32 %v733, %v734
        %v736 = vrot.slane %v735, 1
        %v737 = vmax.f32 %v735, %v736
        %v738 = vsel %vm394, %v187, -inf
        %v739 = vrot.slane %v738, 4
        %v740 = vmax.f32 %v738, %v739
        %v741 = vrot.slane %v740, 2
        %v742 = vmax.f32 %v740, %v741
        %v743 = vrot.slane %v742, 1
        %v744 = vmax.f32 %v742, %v743
        %v745 = vsel %vm394, %v188, -inf
        %v746 = vrot.slane %v745, 4
        %v747 = vmax.f32 %v745, %v746
        %v748 = vrot.slane %v747, 2
        %v749 = vmax.f32 %v747, %v748
        %v750 = vrot.slane %v749, 1
        %v751 = vmax.f32 %v749, %v750
        %v752 = vsel %vm394, %v189, -inf
        %v753 = vrot.slane %v752, 4
        %v754 = vmax.f32 %v752, %v753
        %v755 = vrot.slane %v754, 2
        %v756 = vmax.f32 %v754, %v755
        %v757 = vrot.slane %v756, 1
        %v758 = vmax.f32 %v756, %v757
        %v759 = vsel %vm394, %v190, -inf
        %v760 = vrot.slane %v759, 4
        %v761 = vmax.f32 %v759, %v760
        %v762 = vrot.slane %v761, 2
        %v763 = vmax.f32 %v761, %v762
        %v764 = vrot.slane %v763, 1
        %v765 = vmax.f32 %v763, %v764
        %v766 = vsel %vm394, %v191, -inf
        %v767 = vrot.slane %v766, 4
        %v768 = vmax.f32 %v766, %v767
        %v769 = vrot.slane %v768, 2
        %v770 = vmax.f32 %v768, %v769
        %v771 = vrot.slane %v770, 1
        %v772 = vmax.f32 %v770, %v771
        %v773 = vsel %vm394, %v192, -inf
        %v774 = vrot.slane %v773, 4
        %v775 = vmax.f32 %v773, %v774
        %v776 = vrot.slane %v775, 2
        %v777 = vmax.f32 %v775, %v776
        %v778 = vrot.slane %v777, 1
        %v779 = vmax.f32 %v777, %v778
        %v780 = vsel %vm394, %v193, -inf
        %v781 = vrot.slane %v780, 4
        %v782 = vmax.f32 %v780, %v781
        %v783 = vrot.slane %v782, 2
        %v784 = vmax.f32 %v782, %v783
        %v785 = vrot.slane %v784, 1
        %v786 = vmax.f32 %v784, %v785
        %v787 = vsel %vm394, %v194, -inf
        %v788 = vrot.slane %v787, 4
        %v789 = vmax.f32 %v787, %v788
        %v790 = vrot.slane %v789, 2
        %v791 = vmax.f32 %v789, %v790
        %v792 = vrot.slane %v791, 1
        %v793 = vmax.f32 %v791, %v792
        %v794 = vsel %vm394, %v195, -inf
        %v795 = vrot.slane %v794, 4
        %v796 = vmax.f32 %v794, %v795
        %v797 = vrot.slane %v796, 2
        %v798 = vmax.f32 %v796, %v797
        %v799 = vrot.slane %v798, 1
        %v800 = vmax.f32 %v798, %v799
        %v801 = vsel %vm394, %v196, -inf
        %v802 = vrot.slane %v801, 4
        %v803 = vmax.f32 %v801, %v802
        %v804 = vrot.slane %v803, 2
        %v805 = vmax.f32 %v803, %v804
        %v806 = vrot.slane %v805, 1
        %v807 = vmax.f32 %v805, %v806
        %v808 = vsel %vm394, %v197, -inf
        %v809 = vrot.slane %v808, 4
        %v810 = vmax.f32 %v808, %v809
        %v811 = vrot.slane %v810, 2
        %v812 = vmax.f32 %v810, %v811
        %v813 = vrot.slane %v812, 1
        %v814 = vmax.f32 %v812, %v813
        %v815 = vsel %vm394, %v198, -inf
        %v816 = vrot.slane %v815, 4
        %v817 = vmax.f32 %v815, %v816
        %v818 = vrot.slane %v817, 2
        %v819 = vmax.f32 %v817, %v818
        %v820 = vrot.slane %v819, 1
        %v821 = vmax.f32 %v819, %v820
        %v822 = vsel %vm394, %v199, -inf
        %v823 = vrot.slane %v822, 4
        %v824 = vmax.f32 %v822, %v823
        %v825 = vrot.slane %v824, 2
        %v826 = vmax.f32 %v824, %v825
        %v827 = vrot.slane %v826, 1
        %v828 = vmax.f32 %v826, %v827
        %v829 = vsel %vm394, %v200, -inf
        %v830 = vrot.slane %v829, 4
        %v831 = vmax.f32 %v829, %v830
        %v832 = vrot.slane %v831, 2
        %v833 = vmax.f32 %v831, %v832
        %v834 = vrot.slane %v833, 1
        %v835 = vmax.f32 %v833, %v834
        %v836 = vsel %vm394, %v201, -inf
        %v837 = vrot.slane %v836, 4
        %v838 = vmax.f32 %v836, %v837
        %v839 = vrot.slane %v838, 2
        %v840 = vmax.f32 %v838, %v839
        %v841 = vrot.slane %v840, 1
        %v842 = vmax.f32 %v840, %v841
        %v843 = vsel %vm394, %v202, -inf
        %v844 = vrot.slane %v843, 4
        %v845 = vmax.f32 %v843, %v844
        %v846 = vrot.slane %v845, 2
        %v847 = vmax.f32 %v845, %v846
        %v848 = vrot.slane %v847, 1
        %v849 = vmax.f32 %v847, %v848
        %v850 = vsel %vm394, %v203, -inf
        %v851 = vrot.slane %v850, 4
        %v852 = vmax.f32 %v850, %v851
        %v853 = vrot.slane %v852, 2
        %v854 = vmax.f32 %v852, %v853
        %v855 = vrot.slane %v854, 1
        %v856 = vmax.f32 %v854, %v855
        %v857 = vsel %vm394, %v204, -inf
        %v858 = vrot.slane %v857, 4
        %v859 = vmax.f32 %v857, %v858
        %v860 = vrot.slane %v859, 2
        %v861 = vmax.f32 %v859, %v860
        %v862 = vrot.slane %v861, 1
        %v863 = vmax.f32 %v861, %v862
        %v864 = vsel %vm394, %v205, -inf
        %v865 = vrot.slane %v864, 4
        %v866 = vmax.f32 %v864, %v865
        %v867 = vrot.slane %v866, 2
        %v868 = vmax.f32 %v866, %v867
        %v869 = vrot.slane %v868, 1
        %v870 = vmax.f32 %v868, %v869
        %v871 = vsel %vm394, %v206, -inf
        %v872 = vrot.slane %v871, 4
        %v873 = vmax.f32 %v871, %v872
        %v874 = vrot.slane %v873, 2
        %v875 = vmax.f32 %v873, %v874
        %v876 = vrot.slane %v875, 1
        %v877 = vmax.f32 %v875, %v876
        %v878 = vsel %vm394, %v207, -inf
        %v879 = vrot.slane %v878, 4
        %v880 = vmax.f32 %v878, %v879
        %v881 = vrot.slane %v880, 2
        %v882 = vmax.f32 %v880, %v881
        %v883 = vrot.slane %v882, 1
        %v884 = vmax.f32 %v882, %v883
        %v885 = vsel %vm394, %v208, -inf
        %v886 = vrot.slane %v885, 4
        %v887 = vmax.f32 %v885, %v886
        %v888 = vrot.slane %v887, 2
        %v889 = vmax.f32 %v887, %v888
        %v890 = vrot.slane %v889, 1
        %v891 = vmax.f32 %v889, %v890
        %v892 = vsel %vm394, %v209, -inf
        %v893 = vrot.slane %v892, 4
        %v894 = vmax.f32 %v892, %v893
        %v895 = vrot.slane %v894, 2
        %v896 = vmax.f32 %v894, %v895
        %v897 = vrot.slane %v896, 1
        %v898 = vmax.f32 %v896, %v897
        %v899 = vsel %vm394, %v210, -inf
        %v900 = vrot.slane %v899, 4
        %v901 = vmax.f32 %v899, %v900
        %v902 = vrot.slane %v901, 2
        %v903 = vmax.f32 %v901, %v902
        %v904 = vrot.slane %v903, 1
        %v905 = vmax.f32 %v903, %v904
        %v906 = vsel %vm394, %v211, -inf
        %v907 = vrot.slane %v906, 4
        %v908 = vmax.f32 %v906, %v907
        %v909 = vrot.slane %v908, 2
        %v910 = vmax.f32 %v908, %v909
        %v911 = vrot.slane %v910, 1
        %v912 = vmax.f32 %v910, %v911
        %v913 = vsel %vm394, %v212, -inf
        %v914 = vrot.slane %v913, 4
        %v915 = vmax.f32 %v913, %v914
        %v916 = vrot.slane %v915, 2
        %v917 = vmax.f32 %v915, %v916
        %v918 = vrot.slane %v917, 1
        %v919 = vmax.f32 %v917, %v918
        %v920 = vsel %vm394, %v213, -inf
        %v921 = vrot.slane %v920, 4
        %v922 = vmax.f32 %v920, %v921
        %v923 = vrot.slane %v922, 2
        %v924 = vmax.f32 %v922, %v923
        %v925 = vrot.slane %v924, 1
        %v926 = vmax.f32 %v924, %v925
        %v927 = vsel %vm394, %v214, -inf
        %v928 = vrot.slane %v927, 4
        %v929 = vmax.f32 %v927, %v928
        %v930 = vrot.slane %v929, 2
        %v931 = vmax.f32 %v929, %v930
        %v932 = vrot.slane %v931, 1
        %v933 = vmax.f32 %v931, %v932
        %v934 = vsel %vm394, %v215, -inf
        %v935 = vrot.slane %v934, 4
        %v936 = vmax.f32 %v934, %v935
        %v937 = vrot.slane %v936, 2
        %v938 = vmax.f32 %v936, %v937
        %v939 = vrot.slane %v938, 1
        %v940 = vmax.f32 %v938, %v939
        %v941 = vsel %vm394, %v216, -inf
        %v942 = vrot.slane %v941, 4
        %v943 = vmax.f32 %v941, %v942
        %v944 = vrot.slane %v943, 2
        %v945 = vmax.f32 %v943, %v944
        %v946 = vrot.slane %v945, 1
        %v947 = vmax.f32 %v945, %v946
        %v948 = vsel %vm394, %v217, -inf
        %v949 = vrot.slane %v948, 4
        %v950 = vmax.f32 %v948, %v949
        %v951 = vrot.slane %v950, 2
        %v952 = vmax.f32 %v950, %v951
        %v953 = vrot.slane %v952, 1
        %v954 = vmax.f32 %v952, %v953
        %v955 = vsel %vm394, %v218, -inf
        %v956 = vrot.slane %v955, 4
        %v957 = vmax.f32 %v955, %v956
        %v958 = vrot.slane %v957, 2
        %v959 = vmax.f32 %v957, %v958
        %v960 = vrot.slane %v959, 1
        %v961 = vmax.f32 %v959, %v960
        %v962 = vsel %vm394, %v219, -inf
        %v963 = vrot.slane %v962, 4
        %v964 = vmax.f32 %v962, %v963
        %v965 = vrot.slane %v964, 2
        %v966 = vmax.f32 %v964, %v965
        %v967 = vrot.slane %v966, 1
        %v968 = vmax.f32 %v966, %v967
        %v969 = vsel %vm394, %v220, -inf
        %v970 = vrot.slane %v969, 4
        %v971 = vmax.f32 %v969, %v970
        %v972 = vrot.slane %v971, 2
        %v973 = vmax.f32 %v971, %v972
        %v974 = vrot.slane %v973, 1
        %v975 = vmax.f32 %v973, %v974
        %v976 = vsel %vm394, %v221, -inf
        %v977 = vrot.slane %v976, 4
        %v978 = vmax.f32 %v976, %v977
        %v979 = vrot.slane %v978, 2
        %v980 = vmax.f32 %v978, %v979
        %v981 = vrot.slane %v980, 1
        %v982 = vmax.f32 %v980, %v981
        %v983 = vsel %vm394, %v222, -inf
        %v984 = vrot.slane %v983, 4
        %v985 = vmax.f32 %v983, %v984
        %v986 = vrot.slane %v985, 2
        %v987 = vmax.f32 %v985, %v986
        %v988 = vrot.slane %v987, 1
        %v989 = vmax.f32 %v987, %v988
        %v990 = vsel %vm394, %v223, -inf
        %v991 = vrot.slane %v990, 4
        %v992 = vmax.f32 %v990, %v991
        %v993 = vrot.slane %v992, 2
        %v994 = vmax.f32 %v992, %v993
        %v995 = vrot.slane %v994, 1
        %v996 = vmax.f32 %v994, %v995
        %v997 = vsel %vm394, %v224, -inf
        %v998 = vrot.slane %v997, 4
        %v999 = vmax.f32 %v997, %v998
        %v1000 = vrot.slane %v999, 2
        %v1001 = vmax.f32 %v999, %v1000
        %v1002 = vrot.slane %v1001, 1
        %v1003 = vmax.f32 %v1001, %v1002
        %v1004 = vsel %vm394, %v225, -inf
        %v1005 = vrot.slane %v1004, 4
        %v1006 = vmax.f32 %v1004, %v1005
        %v1007 = vrot.slane %v1006, 2
        %v1008 = vmax.f32 %v1006, %v1007
        %v1009 = vrot.slane %v1008, 1
        %v1010 = vmax.f32 %v1008, %v1009
        %v1011 = vsel %vm394, %v226, -inf
        %v1012 = vrot.slane %v1011, 4
        %v1013 = vmax.f32 %v1011, %v1012
        %v1014 = vrot.slane %v1013, 2
        %v1015 = vmax.f32 %v1013, %v1014
        %v1016 = vrot.slane %v1015, 1
        %v1017 = vmax.f32 %v1015, %v1016
        %v1018 = vsel %vm394, %v227, -inf
        %v1019 = vrot.slane %v1018, 4
        %v1020 = vmax.f32 %v1018, %v1019
        %v1021 = vrot.slane %v1020, 2
        %v1022 = vmax.f32 %v1020, %v1021
        %v1023 = vrot.slane %v1022, 1
        %v1024 = vmax.f32 %v1022, %v1023
        %v1025 = vsel %vm394, %v228, -inf
        %v1026 = vrot.slane %v1025, 4
        %v1027 = vmax.f32 %v1025, %v1026
        %v1028 = vrot.slane %v1027, 2
        %v1029 = vmax.f32 %v1027, %v1028
        %v1030 = vrot.slane %v1029, 1
        %v1031 = vmax.f32 %v1029, %v1030
        %v1032 = vsel %vm394, %v229, -inf
        %v1033 = vrot.slane %v1032, 4
        %v1034 = vmax.f32 %v1032, %v1033
        %v1035 = vrot.slane %v1034, 2
        %v1036 = vmax.f32 %v1034, %v1035
        %v1037 = vrot.slane %v1036, 1
        %v1038 = vmax.f32 %v1036, %v1037
        %v1039 = vsel %vm394, %v230, -inf
        %v1040 = vrot.slane %v1039, 4
        %v1041 = vmax.f32 %v1039, %v1040
        %v1042 = vrot.slane %v1041, 2
        %v1043 = vmax.f32 %v1041, %v1042
        %v1044 = vrot.slane %v1043, 1
        %v1045 = vmax.f32 %v1043, %v1044
        %v1046 = vsel %vm394, %v231, -inf
        %v1047 = vrot.slane %v1046, 4
        %v1048 = vmax.f32 %v1046, %v1047
        %v1049 = vrot.slane %v1048, 2
        %v1050 = vmax.f32 %v1048, %v1049
        %v1051 = vrot.slane %v1050, 1
        %v1052 = vmax.f32 %v1050, %v1051
        %v1053 = vsel %vm394, %v232, -inf
        %v1054 = vrot.slane %v1053, 4
        %v1055 = vmax.f32 %v1053, %v1054
        %v1056 = vrot.slane %v1055, 2
        %v1057 = vmax.f32 %v1055, %v1056
        %v1058 = vrot.slane %v1057, 1
        %v1059 = vmax.f32 %v1057, %v1058
        %v1060 = vsel %vm394, %v233, -inf
        %v1061 = vrot.slane %v1060, 4
        %v1062 = vmax.f32 %v1060, %v1061
        %v1063 = vrot.slane %v1062, 2
        %v1064 = vmax.f32 %v1062, %v1063
        %v1065 = vrot.slane %v1064, 1
        %v1066 = vmax.f32 %v1064, %v1065
        %v1067 = vsel %vm394, %v234, -inf
        %v1068 = vrot.slane %v1067, 4
        %v1069 = vmax.f32 %v1067, %v1068
        %v1070 = vrot.slane %v1069, 2
        %v1071 = vmax.f32 %v1069, %v1070
        %v1072 = vrot.slane %v1071, 1
        %v1073 = vmax.f32 %v1071, %v1072
        %v1074 = vsel %vm394, %v235, -inf
        %v1075 = vrot.slane %v1074, 4
        %v1076 = vmax.f32 %v1074, %v1075
        %v1077 = vrot.slane %v1076, 2
        %v1078 = vmax.f32 %v1076, %v1077
        %v1079 = vrot.slane %v1078, 1
        %v1080 = vmax.f32 %v1078, %v1079
        %v1081 = vsel %vm394, %v236, -inf
        %v1082 = vrot.slane %v1081, 4
        %v1083 = vmax.f32 %v1081, %v1082
        %v1084 = vrot.slane %v1083, 2
        %v1085 = vmax.f32 %v1083, %v1084
        %v1086 = vrot.slane %v1085, 1
        %v1087 = vmax.f32 %v1085, %v1086
        %v1088 = vsel %vm394, %v237, -inf
        %v1089 = vrot.slane %v1088, 4
        %v1090 = vmax.f32 %v1088, %v1089
        %v1091 = vrot.slane %v1090, 2
        %v1092 = vmax.f32 %v1090, %v1091
        %v1093 = vrot.slane %v1092, 1
        %v1094 = vmax.f32 %v1092, %v1093
        %v1095 = vsel %vm394, %v238, -inf
        %v1096 = vrot.slane %v1095, 4
        %v1097 = vmax.f32 %v1095, %v1096
        %v1098 = vrot.slane %v1097, 2
        %v1099 = vmax.f32 %v1097, %v1098
        %v1100 = vrot.slane %v1099, 1
        %v1101 = vmax.f32 %v1099, %v1100
        %v1102 = vsel %vm394, %v239, -inf
        %v1103 = vrot.slane %v1102, 4
        %v1104 = vmax.f32 %v1102, %v1103
        %v1105 = vrot.slane %v1104, 2
        %v1106 = vmax.f32 %v1104, %v1105
        %v1107 = vrot.slane %v1106, 1
        %v1108 = vmax.f32 %v1106, %v1107
        %v1109 = vsel %vm394, %v240, -inf
        %v1110 = vrot.slane %v1109, 4
        %v1111 = vmax.f32 %v1109, %v1110
        %v1112 = vrot.slane %v1111, 2
        %v1113 = vmax.f32 %v1111, %v1112
        %v1114 = vrot.slane %v1113, 1
        %v1115 = vmax.f32 %v1113, %v1114
        %v1116 = vsel %vm394, %v241, -inf
        %v1117 = vrot.slane %v1116, 4
        %v1118 = vmax.f32 %v1116, %v1117
        %v1119 = vrot.slane %v1118, 2
        %v1120 = vmax.f32 %v1118, %v1119
        %v1121 = vrot.slane %v1120, 1
        %v1122 = vmax.f32 %v1120, %v1121
        %v1123 = vsel %vm394, %v242, -inf
        %v1124 = vrot.slane %v1123, 4
        %v1125 = vmax.f32 %v1123, %v1124
        %v1126 = vrot.slane %v1125, 2
        %v1127 = vmax.f32 %v1125, %v1126
        %v1128 = vrot.slane %v1127, 1
        %v1129 = vmax.f32 %v1127, %v1128
        %v1130 = vsel %vm394, %v243, -inf
        %v1131 = vrot.slane %v1130, 4
        %v1132 = vmax.f32 %v1130, %v1131
        %v1133 = vrot.slane %v1132, 2
        %v1134 = vmax.f32 %v1132, %v1133
        %v1135 = vrot.slane %v1134, 1
        %v1136 = vmax.f32 %v1134, %v1135
        %v1137 = vsel %vm394, %v244, -inf
        %v1138 = vrot.slane %v1137, 4
        %v1139 = vmax.f32 %v1137, %v1138
        %v1140 = vrot.slane %v1139, 2
        %v1141 = vmax.f32 %v1139, %v1140
        %v1142 = vrot.slane %v1141, 1
        %v1143 = vmax.f32 %v1141, %v1142
        %v1144 = vsel %vm394, %v245, -inf
        %v1145 = vrot.slane %v1144, 4
        %v1146 = vmax.f32 %v1144, %v1145
        %v1147 = vrot.slane %v1146, 2
        %v1148 = vmax.f32 %v1146, %v1147
        %v1149 = vrot.slane %v1148, 1
        %v1150 = vmax.f32 %v1148, %v1149
        %v1151 = vsel %vm394, %v246, -inf
        %v1152 = vrot.slane %v1151, 4
        %v1153 = vmax.f32 %v1151, %v1152
        %v1154 = vrot.slane %v1153, 2
        %v1155 = vmax.f32 %v1153, %v1154
        %v1156 = vrot.slane %v1155, 1
        %v1157 = vmax.f32 %v1155, %v1156
        %v1158 = vsel %vm394, %v247, -inf
        %v1159 = vrot.slane %v1158, 4
        %v1160 = vmax.f32 %v1158, %v1159
        %v1161 = vrot.slane %v1160, 2
        %v1162 = vmax.f32 %v1160, %v1161
        %v1163 = vrot.slane %v1162, 1
        %v1164 = vmax.f32 %v1162, %v1163
        %v1165 = vsel %vm394, %v248, -inf
        %v1166 = vrot.slane %v1165, 4
        %v1167 = vmax.f32 %v1165, %v1166
        %v1168 = vrot.slane %v1167, 2
        %v1169 = vmax.f32 %v1167, %v1168
        %v1170 = vrot.slane %v1169, 1
        %v1171 = vmax.f32 %v1169, %v1170
        %v1172 = vsel %vm394, %v249, -inf
        %v1173 = vrot.slane %v1172, 4
        %v1174 = vmax.f32 %v1172, %v1173
        %v1175 = vrot.slane %v1174, 2
        %v1176 = vmax.f32 %v1174, %v1175
        %v1177 = vrot.slane %v1176, 1
        %v1178 = vmax.f32 %v1176, %v1177
        %v1179 = vsel %vm394, %v250, -inf
        %v1180 = vrot.slane %v1179, 4
        %v1181 = vmax.f32 %v1179, %v1180
        %v1182 = vrot.slane %v1181, 2
        %v1183 = vmax.f32 %v1181, %v1182
        %v1184 = vrot.slane %v1183, 1
        %v1185 = vmax.f32 %v1183, %v1184
        %v1186 = vsel %vm394, %v251, -inf
        %v1187 = vrot.slane %v1186, 4
        %v1188 = vmax.f32 %v1186, %v1187
        %v1189 = vrot.slane %v1188, 2
        %v1190 = vmax.f32 %v1188, %v1189
        %v1191 = vrot.slane %v1190, 1
        %v1192 = vmax.f32 %v1190, %v1191
        %v1193 = vsel %vm394, %v252, -inf
        %v1194 = vrot.slane %v1193, 4
        %v1195 = vmax.f32 %v1193, %v1194
        %v1196 = vrot.slane %v1195, 2
        %v1197 = vmax.f32 %v1195, %v1196
        %v1198 = vrot.slane %v1197, 1
        %v1199 = vmax.f32 %v1197, %v1198
        %v1200 = vsel %vm394, %v253, -inf
        %v1201 = vrot.slane %v1200, 4
        %v1202 = vmax.f32 %v1200, %v1201
        %v1203 = vrot.slane %v1202, 2
        %v1204 = vmax.f32 %v1202, %v1203
        %v1205 = vrot.slane %v1204, 1
        %v1206 = vmax.f32 %v1204, %v1205
        %v1207 = vsel %vm394, %v254, -inf
        %v1208 = vrot.slane %v1207, 4
        %v1209 = vmax.f32 %v1207, %v1208
        %v1210 = vrot.slane %v1209, 2
        %v1211 = vmax.f32 %v1209, %v1210
        %v1212 = vrot.slane %v1211, 1
        %v1213 = vmax.f32 %v1211, %v1212
        %v1214 = vsel %vm394, %v255, -inf
        %v1215 = vrot.slane %v1214, 4
        %v1216 = vmax.f32 %v1214, %v1215
        %v1217 = vrot.slane %v1216, 2
        %v1218 = vmax.f32 %v1216, %v1217
        %v1219 = vrot.slane %v1218, 1
        %v1220 = vmax.f32 %v1218, %v1219
        %v1221 = vsel %vm394, %v256, -inf
        %v1222 = vrot.slane %v1221, 4
        %v1223 = vmax.f32 %v1221, %v1222
        %v1224 = vrot.slane %v1223, 2
        %v1225 = vmax.f32 %v1223, %v1224
        %v1226 = vrot.slane %v1225, 1
        %v1227 = vmax.f32 %v1225, %v1226
        %v1228 = vsel %vm394, %v257, -inf
        %v1229 = vrot.slane %v1228, 4
        %v1230 = vmax.f32 %v1228, %v1229
        %v1231 = vrot.slane %v1230, 2
        %v1232 = vmax.f32 %v1230, %v1231
        %v1233 = vrot.slane %v1232, 1
        %v1234 = vmax.f32 %v1232, %v1233
        %v1235 = vsel %vm394, %v258, -inf
        %v1236 = vrot.slane %v1235, 4
        %v1237 = vmax.f32 %v1235, %v1236
        %v1238 = vrot.slane %v1237, 2
        %v1239 = vmax.f32 %v1237, %v1238
        %v1240 = vrot.slane %v1239, 1
        %v1241 = vmax.f32 %v1239, %v1240
        %v1242 = vsel %vm394, %v259, -inf
        %v1243 = vrot.slane %v1242, 4
        %v1244 = vmax.f32 %v1242, %v1243
        %v1245 = vrot.slane %v1244, 2
        %v1246 = vmax.f32 %v1244, %v1245
        %v1247 = vrot.slane %v1246, 1
        %v1248 = vmax.f32 %v1246, %v1247
        %v1249 = vsel %vm394, %v260, -inf
        %v1250 = vrot.slane %v1249, 4
        %v1251 = vmax.f32 %v1249, %v1250
        %v1252 = vrot.slane %v1251, 2
        %v1253 = vmax.f32 %v1251, %v1252
        %v1254 = vrot.slane %v1253, 1
        %v1255 = vmax.f32 %v1253, %v1254
        %v1256 = vsel %vm394, %v261, -inf
        %v1257 = vrot.slane %v1256, 4
        %v1258 = vmax.f32 %v1256, %v1257
        %v1259 = vrot.slane %v1258, 2
        %v1260 = vmax.f32 %v1258, %v1259
        %v1261 = vrot.slane %v1260, 1
        %v1262 = vmax.f32 %v1260, %v1261
        %v1263 = vsel %vm394, %v262, -inf
        %v1264 = vrot.slane %v1263, 4
        %v1265 = vmax.f32 %v1263, %v1264
        %v1266 = vrot.slane %v1265, 2
        %v1267 = vmax.f32 %v1265, %v1266
        %v1268 = vrot.slane %v1267, 1
        %v1269 = vmax.f32 %v1267, %v1268
        %v1270 = vsel %vm394, %v263, -inf
        %v1271 = vrot.slane %v1270, 4
        %v1272 = vmax.f32 %v1270, %v1271
        %v1273 = vrot.slane %v1272, 2
        %v1274 = vmax.f32 %v1272, %v1273
        %v1275 = vrot.slane %v1274, 1
        %v1276 = vmax.f32 %v1274, %v1275
        %v1277 = vsel %vm394, %v264, -inf
        %v1278 = vrot.slane %v1277, 4
        %v1279 = vmax.f32 %v1277, %v1278
        %v1280 = vrot.slane %v1279, 2
        %v1281 = vmax.f32 %v1279, %v1280
        %v1282 = vrot.slane %v1281, 1
        %v1283 = vmax.f32 %v1281, %v1282
        %v1284 = vsel %vm394, %v265, -inf
        %v1285 = vrot.slane %v1284, 4
        %v1286 = vmax.f32 %v1284, %v1285
        %v1287 = vrot.slane %v1286, 2
        %v1288 = vmax.f32 %v1286, %v1287
        %v1289 = vrot.slane %v1288, 1
        %v1290 = vmax.f32 %v1288, %v1289
        %v1291 = vsel %vm394, %v266, -inf
        %v1292 = vrot.slane %v1291, 4
        %v1293 = vmax.f32 %v1291, %v1292
        %v1294 = vrot.slane %v1293, 2
        %v1295 = vmax.f32 %v1293, %v1294
        %v1296 = vrot.slane %v1295, 1
        %v1297 = vmax.f32 %v1295, %v1296
        %v1298 = vsel %vm394, %v267, -inf
        %v1299 = vrot.slane %v1298, 4
        %v1300 = vmax.f32 %v1298, %v1299
        %v1301 = vrot.slane %v1300, 2
        %v1302 = vmax.f32 %v1300, %v1301
        %v1303 = vrot.slane %v1302, 1
        %v1304 = vmax.f32 %v1302, %v1303
        %v1305 = vsel %vm394, %v268, -inf
        %v1306 = vrot.slane %v1305, 4
        %v1307 = vmax.f32 %v1305, %v1306
        %v1308 = vrot.slane %v1307, 2
        %v1309 = vmax.f32 %v1307, %v1308
        %v1310 = vrot.slane %v1309, 1
        %v1311 = vmax.f32 %v1309, %v1310
        %v1312 = vsel %vm394, %v269, -inf
        %v1313 = vrot.slane %v1312, 4
        %v1314 = vmax.f32 %v1312, %v1313
        %v1315 = vrot.slane %v1314, 2
        %v1316 = vmax.f32 %v1314, %v1315
        %v1317 = vrot.slane %v1316, 1
        %v1318 = vmax.f32 %v1316, %v1317
        %v1319 = vsel %vm394, %v270, -inf
        %v1320 = vrot.slane %v1319, 4
        %v1321 = vmax.f32 %v1319, %v1320
        %v1322 = vrot.slane %v1321, 2
        %v1323 = vmax.f32 %v1321, %v1322
        %v1324 = vrot.slane %v1323, 1
        %v1325 = vmax.f32 %v1323, %v1324
        %v1326 = vsel %vm394, %v271, -inf
        %v1327 = vrot.slane %v1326, 4
        %v1328 = vmax.f32 %v1326, %v1327
        %v1329 = vrot.slane %v1328, 2
        %v1330 = vmax.f32 %v1328, %v1329
        %v1331 = vrot.slane %v1330, 1
        %v1332 = vmax.f32 %v1330, %v1331
        %v1333 = vsel %vm394, %v272, -inf
        %v1334 = vrot.slane %v1333, 4
        %v1335 = vmax.f32 %v1333, %v1334
        %v1336 = vrot.slane %v1335, 2
        %v1337 = vmax.f32 %v1335, %v1336
        %v1338 = vrot.slane %v1337, 1
        %v1339 = vmax.f32 %v1337, %v1338
        %v1340 = vsel %vm394, %v273, -inf
        %v1341 = vrot.slane %v1340, 4
        %v1342 = vmax.f32 %v1340, %v1341
        %v1343 = vrot.slane %v1342, 2
        %v1344 = vmax.f32 %v1342, %v1343
        %v1345 = vrot.slane %v1344, 1
        %v1346 = vmax.f32 %v1344, %v1345
        %v1347 = vsel %vm394, %v274, -inf
        %v1348 = vrot.slane %v1347, 4
        %v1349 = vmax.f32 %v1347, %v1348
        %v1350 = vrot.slane %v1349, 2
        %v1351 = vmax.f32 %v1349, %v1350
        %v1352 = vrot.slane %v1351, 1
        %v1353 = vmax.f32 %v1351, %v1352
        %v1354 = vsel %vm394, %v275, -inf
        %v1355 = vrot.slane %v1354, 4
        %v1356 = vmax.f32 %v1354, %v1355
        %v1357 = vrot.slane %v1356, 2
        %v1358 = vmax.f32 %v1356, %v1357
        %v1359 = vrot.slane %v1358, 1
        %v1360 = vmax.f32 %v1358, %v1359
        %v1361 = vsel %vm394, %v276, -inf
        %v1362 = vrot.slane %v1361, 4
        %v1363 = vmax.f32 %v1361, %v1362
        %v1364 = vrot.slane %v1363, 2
        %v1365 = vmax.f32 %v1363, %v1364
        %v1366 = vrot.slane %v1365, 1
        %v1367 = vmax.f32 %v1365, %v1366
        %v1368 = vsel %vm394, %v277, -inf
        %v1369 = vrot.slane %v1368, 4
        %v1370 = vmax.f32 %v1368, %v1369
        %v1371 = vrot.slane %v1370, 2
        %v1372 = vmax.f32 %v1370, %v1371
        %v1373 = vrot.slane %v1372, 1
        %v1374 = vmax.f32 %v1372, %v1373
        %v1375 = vsel %vm394, %v278, -inf
        %v1376 = vrot.slane %v1375, 4
        %v1377 = vmax.f32 %v1375, %v1376
        %v1378 = vrot.slane %v1377, 2
        %v1379 = vmax.f32 %v1377, %v1378
        %v1380 = vrot.slane %v1379, 1
        %v1381 = vmax.f32 %v1379, %v1380
        %v1382 = vsel %vm394, %v279, -inf
        %v1383 = vrot.slane %v1382, 4
        %v1384 = vmax.f32 %v1382, %v1383
        %v1385 = vrot.slane %v1384, 2
        %v1386 = vmax.f32 %v1384, %v1385
        %v1387 = vrot.slane %v1386, 1
        %v1388 = vmax.f32 %v1386, %v1387
        %v1389 = vsel %vm394, %v280, -inf
        %v1390 = vrot.slane %v1389, 4
        %v1391 = vmax.f32 %v1389, %v1390
        %v1392 = vrot.slane %v1391, 2
        %v1393 = vmax.f32 %v1391, %v1392
        %v1394 = vrot.slane %v1393, 1
        %v1395 = vmax.f32 %v1393, %v1394
        %v1396 = vsel %vm394, %v281, -inf
        %v1397 = vrot.slane %v1396, 4
        %v1398 = vmax.f32 %v1396, %v1397
        %v1399 = vrot.slane %v1398, 2
        %v1400 = vmax.f32 %v1398, %v1399
        %v1401 = vrot.slane %v1400, 1
        %v1402 = vmax.f32 %v1400, %v1401
        %v1403 = vsel %vm394, %v282, -inf
        %v1404 = vrot.slane %v1403, 4
        %v1405 = vmax.f32 %v1403, %v1404
        %v1406 = vrot.slane %v1405, 2
        %v1407 = vmax.f32 %v1405, %v1406
        %v1408 = vrot.slane %v1407, 1
        %v1409 = vmax.f32 %v1407, %v1408
        %v1410 = vsel %vm394, %v283, -inf
        %v1411 = vrot.slane %v1410, 4
        %v1412 = vmax.f32 %v1410, %v1411
        %v1413 = vrot.slane %v1412, 2
        %v1414 = vmax.f32 %v1412, %v1413
        %v1415 = vrot.slane %v1414, 1
        %v1416 = vmax.f32 %v1414, %v1415
        %v1417 = vsel %vm394, %v284, -inf
        %v1418 = vrot.slane %v1417, 4
        %v1419 = vmax.f32 %v1417, %v1418
        %v1420 = vrot.slane %v1419, 2
        %v1421 = vmax.f32 %v1419, %v1420
        %v1422 = vrot.slane %v1421, 1
        %v1423 = vmax.f32 %v1421, %v1422
        %v1424 = vsel %vm394, %v285, -inf
        %v1425 = vrot.slane %v1424, 4
        %v1426 = vmax.f32 %v1424, %v1425
        %v1427 = vrot.slane %v1426, 2
        %v1428 = vmax.f32 %v1426, %v1427
        %v1429 = vrot.slane %v1428, 1
        %v1430 = vmax.f32 %v1428, %v1429
        %v1431 = vsel %vm394, %v286, -inf
        %v1432 = vrot.slane %v1431, 4
        %v1433 = vmax.f32 %v1431, %v1432
        %v1434 = vrot.slane %v1433, 2
        %v1435 = vmax.f32 %v1433, %v1434
        %v1436 = vrot.slane %v1435, 1
        %v1437 = vmax.f32 %v1435, %v1436
        %v1438 = vsel %vm394, %v287, -inf
        %v1439 = vrot.slane %v1438, 4
        %v1440 = vmax.f32 %v1438, %v1439
        %v1441 = vrot.slane %v1440, 2
        %v1442 = vmax.f32 %v1440, %v1441
        %v1443 = vrot.slane %v1442, 1
        %v1444 = vmax.f32 %v1442, %v1443
        %v1445 = vsel %vm394, %v288, -inf
        %v1446 = vrot.slane %v1445, 4
        %v1447 = vmax.f32 %v1445, %v1446
        %v1448 = vrot.slane %v1447, 2
        %v1449 = vmax.f32 %v1447, %v1448
        %v1450 = vrot.slane %v1449, 1
        %v1451 = vmax.f32 %v1449, %v1450
        %v1452 = vsel %vm394, %v289, -inf
        %v1453 = vrot.slane %v1452, 4
        %v1454 = vmax.f32 %v1452, %v1453
        %v1455 = vrot.slane %v1454, 2
        %v1456 = vmax.f32 %v1454, %v1455
        %v1457 = vrot.slane %v1456, 1
        %v1458 = vmax.f32 %v1456, %v1457
        %v1459 = vsel %vm394, %v290, -inf
        %v1460 = vrot.slane %v1459, 4
        %v1461 = vmax.f32 %v1459, %v1460
        %v1462 = vrot.slane %v1461, 2
        %v1463 = vmax.f32 %v1461, %v1462
        %v1464 = vrot.slane %v1463, 1
        %v1465 = vmax.f32 %v1463, %v1464
        %v1466 = vsel %vm394, %v291, -inf
        %v1467 = vrot.slane %v1466, 4
        %v1468 = vmax.f32 %v1466, %v1467
        %v1469 = vrot.slane %v1468, 2
        %v1470 = vmax.f32 %v1468, %v1469
        %v1471 = vrot.slane %v1470, 1
        %v1472 = vmax.f32 %v1470, %v1471
        %v1473 = vsel %vm394, %v292, -inf
        %v1474 = vrot.slane %v1473, 4
        %v1475 = vmax.f32 %v1473, %v1474
        %v1476 = vrot.slane %v1475, 2
        %v1477 = vmax.f32 %v1475, %v1476
        %v1478 = vrot.slane %v1477, 1
        %v1479 = vmax.f32 %v1477, %v1478
        %v1480 = vsel %vm394, %v293, -inf
        %v1481 = vrot.slane %v1480, 4
        %v1482 = vmax.f32 %v1480, %v1481
        %v1483 = vrot.slane %v1482, 2
        %v1484 = vmax.f32 %v1482, %v1483
        %v1485 = vrot.slane %v1484, 1
        %v1486 = vmax.f32 %v1484, %v1485
        %v1487 = vsel %vm394, %v294, -inf
        %v1488 = vrot.slane %v1487, 4
        %v1489 = vmax.f32 %v1487, %v1488
        %v1490 = vrot.slane %v1489, 2
        %v1491 = vmax.f32 %v1489, %v1490
        %v1492 = vrot.slane %v1491, 1
        %v1493 = vmax.f32 %v1491, %v1492
        %v1494 = vsel %vm394, %v295, -inf
        %v1495 = vrot.slane %v1494, 4
        %v1496 = vmax.f32 %v1494, %v1495
        %v1497 = vrot.slane %v1496, 2
        %v1498 = vmax.f32 %v1496, %v1497
        %v1499 = vrot.slane %v1498, 1
        %v1500 = vmax.f32 %v1498, %v1499
        %v1501 = vsel %vm394, %v296, -inf
        %v1502 = vrot.slane %v1501, 4
        %v1503 = vmax.f32 %v1501, %v1502
        %v1504 = vrot.slane %v1503, 2
        %v1505 = vmax.f32 %v1503, %v1504
        %v1506 = vrot.slane %v1505, 1
        %v1507 = vmax.f32 %v1505, %v1506
        %v1508 = vsel %vm394, %v297, -inf
        %v1509 = vrot.slane %v1508, 4
        %v1510 = vmax.f32 %v1508, %v1509
        %v1511 = vrot.slane %v1510, 2
        %v1512 = vmax.f32 %v1510, %v1511
        %v1513 = vrot.slane %v1512, 1
        %v1514 = vmax.f32 %v1512, %v1513
        %v1515 = vsel %vm394, %v298, -inf
        %v1516 = vrot.slane %v1515, 4
        %v1517 = vmax.f32 %v1515, %v1516
        %v1518 = vrot.slane %v1517, 2
        %v1519 = vmax.f32 %v1517, %v1518
        %v1520 = vrot.slane %v1519, 1
        %v1521 = vmax.f32 %v1519, %v1520
        %v1522 = vsel %vm394, %v299, -inf
        %v1523 = vrot.slane %v1522, 4
        %v1524 = vmax.f32 %v1522, %v1523
        %v1525 = vrot.slane %v1524, 2
        %v1526 = vmax.f32 %v1524, %v1525
        %v1527 = vrot.slane %v1526, 1
        %v1528 = vmax.f32 %v1526, %v1527
        %v1529 = vsel %vm394, %v300, -inf
        %v1530 = vrot.slane %v1529, 4
        %v1531 = vmax.f32 %v1529, %v1530
        %v1532 = vrot.slane %v1531, 2
        %v1533 = vmax.f32 %v1531, %v1532
        %v1534 = vrot.slane %v1533, 1
        %v1535 = vmax.f32 %v1533, %v1534
        %v1536 = vsel %vm394, %v301, -inf
        %v1537 = vrot.slane %v1536, 4
        %v1538 = vmax.f32 %v1536, %v1537
        %v1539 = vrot.slane %v1538, 2
        %v1540 = vmax.f32 %v1538, %v1539
        %v1541 = vrot.slane %v1540, 1
        %v1542 = vmax.f32 %v1540, %v1541
        %v1543 = vsel %vm394, %v302, -inf
        %v1544 = vrot.slane %v1543, 4
        %v1545 = vmax.f32 %v1543, %v1544
        %v1546 = vrot.slane %v1545, 2
        %v1547 = vmax.f32 %v1545, %v1546
        %v1548 = vrot.slane %v1547, 1
        %v1549 = vmax.f32 %v1547, %v1548
        %v1550 = vsel %vm394, %v303, -inf
        %v1551 = vrot.slane %v1550, 4
        %v1552 = vmax.f32 %v1550, %v1551
        %v1553 = vrot.slane %v1552, 2
        %v1554 = vmax.f32 %v1552, %v1553
        %v1555 = vrot.slane %v1554, 1
        %v1556 = vmax.f32 %v1554, %v1555
        %v1557 = vsel %vm394, %v304, -inf
        %v1558 = vrot.slane %v1557, 4
        %v1559 = vmax.f32 %v1557, %v1558
        %v1560 = vrot.slane %v1559, 2
        %v1561 = vmax.f32 %v1559, %v1560
        %v1562 = vrot.slane %v1561, 1
        %v1563 = vmax.f32 %v1561, %v1562
        %v1564 = vsel %vm394, %v305, -inf
        %v1565 = vrot.slane %v1564, 4
        %v1566 = vmax.f32 %v1564, %v1565
        %v1567 = vrot.slane %v1566, 2
        %v1568 = vmax.f32 %v1566, %v1567
        %v1569 = vrot.slane %v1568, 1
        %v1570 = vmax.f32 %v1568, %v1569
        %v1571 = vsel %vm394, %v306, -inf
        %v1572 = vrot.slane %v1571, 4
        %v1573 = vmax.f32 %v1571, %v1572
        %v1574 = vrot.slane %v1573, 2
        %v1575 = vmax.f32 %v1573, %v1574
        %v1576 = vrot.slane %v1575, 1
        %v1577 = vmax.f32 %v1575, %v1576
        %v1578 = vsel %vm394, %v307, -inf
        %v1579 = vrot.slane %v1578, 4
        %v1580 = vmax.f32 %v1578, %v1579
        %v1581 = vrot.slane %v1580, 2
        %v1582 = vmax.f32 %v1580, %v1581
        %v1583 = vrot.slane %v1582, 1
        %v1584 = vmax.f32 %v1582, %v1583
        %v1585 = vsel %vm394, %v308, -inf
        %v1586 = vrot.slane %v1585, 4
        %v1587 = vmax.f32 %v1585, %v1586
        %v1588 = vrot.slane %v1587, 2
        %v1589 = vmax.f32 %v1587, %v1588
        %v1590 = vrot.slane %v1589, 1
        %v1591 = vmax.f32 %v1589, %v1590
        %v1592 = vsel %vm394, %v309, -inf
        %v1593 = vrot.slane %v1592, 4
        %v1594 = vmax.f32 %v1592, %v1593
        %v1595 = vrot.slane %v1594, 2
        %v1596 = vmax.f32 %v1594, %v1595
        %v1597 = vrot.slane %v1596, 1
        %v1598 = vmax.f32 %v1596, %v1597
        %v1599 = vsel %vm394, %v310, -inf
        %v1600 = vrot.slane %v1599, 4
        %v1601 = vmax.f32 %v1599, %v1600
        %v1602 = vrot.slane %v1601, 2
        %v1603 = vmax.f32 %v1601, %v1602
        %v1604 = vrot.slane %v1603, 1
        %v1605 = vmax.f32 %v1603, %v1604
        %v1606 = vsel %vm394, %v311, -inf
        %v1607 = vrot.slane %v1606, 4
        %v1608 = vmax.f32 %v1606, %v1607
        %v1609 = vrot.slane %v1608, 2
        %v1610 = vmax.f32 %v1608, %v1609
        %v1611 = vrot.slane %v1610, 1
        %v1612 = vmax.f32 %v1610, %v1611
        %v1613 = vsel %vm394, %v312, -inf
        %v1614 = vrot.slane %v1613, 4
        %v1615 = vmax.f32 %v1613, %v1614
        %v1616 = vrot.slane %v1615, 2
        %v1617 = vmax.f32 %v1615, %v1616
        %v1618 = vrot.slane %v1617, 1
        %v1619 = vmax.f32 %v1617, %v1618
        %v1620 = vsel %vm394, %v313, -inf
        %v1621 = vrot.slane %v1620, 4
        %v1622 = vmax.f32 %v1620, %v1621
        %v1623 = vrot.slane %v1622, 2
        %v1624 = vmax.f32 %v1622, %v1623
        %v1625 = vrot.slane %v1624, 1
        %v1626 = vmax.f32 %v1624, %v1625
        %v1627 = vsel %vm394, %v314, -inf
        %v1628 = vrot.slane %v1627, 4
        %v1629 = vmax.f32 %v1627, %v1628
        %v1630 = vrot.slane %v1629, 2
        %v1631 = vmax.f32 %v1629, %v1630
        %v1632 = vrot.slane %v1631, 1
        %v1633 = vmax.f32 %v1631, %v1632
        %v1634 = vsel %vm394, %v315, -inf
        %v1635 = vrot.slane %v1634, 4
        %v1636 = vmax.f32 %v1634, %v1635
        %v1637 = vrot.slane %v1636, 2
        %v1638 = vmax.f32 %v1636, %v1637
        %v1639 = vrot.slane %v1638, 1
        %v1640 = vmax.f32 %v1638, %v1639
        %v1641 = vsel %vm394, %v316, -inf
        %v1642 = vrot.slane %v1641, 4
        %v1643 = vmax.f32 %v1641, %v1642
        %v1644 = vrot.slane %v1643, 2
        %v1645 = vmax.f32 %v1643, %v1644
        %v1646 = vrot.slane %v1645, 1
        %v1647 = vmax.f32 %v1645, %v1646
        %v1648 = vsel %vm394, %v317, -inf
        %v1649 = vrot.slane %v1648, 4
        %v1650 = vmax.f32 %v1648, %v1649
        %v1651 = vrot.slane %v1650, 2
        %v1652 = vmax.f32 %v1650, %v1651
        %v1653 = vrot.slane %v1652, 1
        %v1654 = vmax.f32 %v1652, %v1653
        %v1655 = vsel %vm394, %v318, -inf
        %v1656 = vrot.slane %v1655, 4
        %v1657 = vmax.f32 %v1655, %v1656
        %v1658 = vrot.slane %v1657, 2
        %v1659 = vmax.f32 %v1657, %v1658
        %v1660 = vrot.slane %v1659, 1
        %v1661 = vmax.f32 %v1659, %v1660
        %v1662 = vsel %vm394, %v319, -inf
        %v1663 = vrot.slane %v1662, 4
        %v1664 = vmax.f32 %v1662, %v1663
        %v1665 = vrot.slane %v1664, 2
        %v1666 = vmax.f32 %v1664, %v1665
        %v1667 = vrot.slane %v1666, 1
        %v1668 = vmax.f32 %v1666, %v1667
        %v1669 = vsel %vm394, %v320, -inf
        %v1670 = vrot.slane %v1669, 4
        %v1671 = vmax.f32 %v1669, %v1670
        %v1672 = vrot.slane %v1671, 2
        %v1673 = vmax.f32 %v1671, %v1672
        %v1674 = vrot.slane %v1673, 1
        %v1675 = vmax.f32 %v1673, %v1674
        %v1676 = vsel %vm394, %v321, -inf
        %v1677 = vrot.slane %v1676, 4
        %v1678 = vmax.f32 %v1676, %v1677
        %v1679 = vrot.slane %v1678, 2
        %v1680 = vmax.f32 %v1678, %v1679
        %v1681 = vrot.slane %v1680, 1
        %v1682 = vmax.f32 %v1680, %v1681
        %v1683 = vsel %vm394, %v322, -inf
        %v1684 = vrot.slane %v1683, 4
        %v1685 = vmax.f32 %v1683, %v1684
        %v1686 = vrot.slane %v1685, 2
        %v1687 = vmax.f32 %v1685, %v1686
        %v1688 = vrot.slane %v1687, 1
        %v1689 = vmax.f32 %v1687, %v1688
        %v1690 = vsel %vm394, %v323, -inf
        %v1691 = vrot.slane %v1690, 4
        %v1692 = vmax.f32 %v1690, %v1691
        %v1693 = vrot.slane %v1692, 2
        %v1694 = vmax.f32 %v1692, %v1693
        %v1695 = vrot.slane %v1694, 1
        %v1696 = vmax.f32 %v1694, %v1695
        %v1697 = vsel %vm394, %v324, -inf
        %v1698 = vrot.slane %v1697, 4
        %v1699 = vmax.f32 %v1697, %v1698
        %v1700 = vrot.slane %v1699, 2
        %v1701 = vmax.f32 %v1699, %v1700
        %v1702 = vrot.slane %v1701, 1
        %v1703 = vmax.f32 %v1701, %v1702
        %v1704 = vsel %vm394, %v325, -inf
        %v1705 = vrot.slane %v1704, 4
        %v1706 = vmax.f32 %v1704, %v1705
        %v1707 = vrot.slane %v1706, 2
        %v1708 = vmax.f32 %v1706, %v1707
        %v1709 = vrot.slane %v1708, 1
        %v1710 = vmax.f32 %v1708, %v1709
        %v1711 = vsel %vm394, %v326, -inf
        %v1712 = vrot.slane %v1711, 4
        %v1713 = vmax.f32 %v1711, %v1712
        %v1714 = vrot.slane %v1713, 2
        %v1715 = vmax.f32 %v1713, %v1714
        %v1716 = vrot.slane %v1715, 1
        %v1717 = vmax.f32 %v1715, %v1716
        %v1718 = vsel %vm394, %v327, -inf
        %v1719 = vrot.slane %v1718, 4
        %v1720 = vmax.f32 %v1718, %v1719
        %v1721 = vrot.slane %v1720, 2
        %v1722 = vmax.f32 %v1720, %v1721
        %v1723 = vrot.slane %v1722, 1
        %v1724 = vmax.f32 %v1722, %v1723
        %v1725 = vsel %vm394, %v328, -inf
        %v1726 = vrot.slane %v1725, 4
        %v1727 = vmax.f32 %v1725, %v1726
        %v1728 = vrot.slane %v1727, 2
        %v1729 = vmax.f32 %v1727, %v1728
        %v1730 = vrot.slane %v1729, 1
        %v1731 = vmax.f32 %v1729, %v1730
        %v1732 = vsel %vm394, %v329, -inf
        %v1733 = vrot.slane %v1732, 4
        %v1734 = vmax.f32 %v1732, %v1733
        %v1735 = vrot.slane %v1734, 2
        %v1736 = vmax.f32 %v1734, %v1735
        %v1737 = vrot.slane %v1736, 1
        %v1738 = vmax.f32 %v1736, %v1737
        %v1739 = vsel %vm394, %v330, -inf
        %v1740 = vrot.slane %v1739, 4
        %v1741 = vmax.f32 %v1739, %v1740
        %v1742 = vrot.slane %v1741, 2
        %v1743 = vmax.f32 %v1741, %v1742
        %v1744 = vrot.slane %v1743, 1
        %v1745 = vmax.f32 %v1743, %v1744
        %v1746 = vsel %vm394, %v331, -inf
        %v1747 = vrot.slane %v1746, 4
        %v1748 = vmax.f32 %v1746, %v1747
        %v1749 = vrot.slane %v1748, 2
        %v1750 = vmax.f32 %v1748, %v1749
        %v1751 = vrot.slane %v1750, 1
        %v1752 = vmax.f32 %v1750, %v1751
        %v1753 = vsel %vm394, %v332, -inf
        %v1754 = vrot.slane %v1753, 4
        %v1755 = vmax.f32 %v1753, %v1754
        %v1756 = vrot.slane %v1755, 2
        %v1757 = vmax.f32 %v1755, %v1756
        %v1758 = vrot.slane %v1757, 1
        %v1759 = vmax.f32 %v1757, %v1758
        %v1760 = vsel %vm394, %v333, -inf
        %v1761 = vrot.slane %v1760, 4
        %v1762 = vmax.f32 %v1760, %v1761
        %v1763 = vrot.slane %v1762, 2
        %v1764 = vmax.f32 %v1762, %v1763
        %v1765 = vrot.slane %v1764, 1
        %v1766 = vmax.f32 %v1764, %v1765
        %v1767 = vsel %vm394, %v334, -inf
        %v1768 = vrot.slane %v1767, 4
        %v1769 = vmax.f32 %v1767, %v1768
        %v1770 = vrot.slane %v1769, 2
        %v1771 = vmax.f32 %v1769, %v1770
        %v1772 = vrot.slane %v1771, 1
        %v1773 = vmax.f32 %v1771, %v1772
        %v1774 = vsel %vm394, %v335, -inf
        %v1775 = vrot.slane %v1774, 4
        %v1776 = vmax.f32 %v1774, %v1775
        %v1777 = vrot.slane %v1776, 2
        %v1778 = vmax.f32 %v1776, %v1777
        %v1779 = vrot.slane %v1778, 1
        %v1780 = vmax.f32 %v1778, %v1779
        %v1781 = vsel %vm394, %v336, -inf
        %v1782 = vrot.slane %v1781, 4
        %v1783 = vmax.f32 %v1781, %v1782
        %v1784 = vrot.slane %v1783, 2
        %v1785 = vmax.f32 %v1783, %v1784
        %v1786 = vrot.slane %v1785, 1
        %v1787 = vmax.f32 %v1785, %v1786
        %v1788 = vsel %vm394, %v337, -inf
        %v1789 = vrot.slane %v1788, 4
        %v1790 = vmax.f32 %v1788, %v1789
        %v1791 = vrot.slane %v1790, 2
        %v1792 = vmax.f32 %v1790, %v1791
        %v1793 = vrot.slane %v1792, 1
        %v1794 = vmax.f32 %v1792, %v1793
        %v1795 = vsel %vm394, %v338, -inf
        %v1796 = vrot.slane %v1795, 4
        %v1797 = vmax.f32 %v1795, %v1796
        %v1798 = vrot.slane %v1797, 2
        %v1799 = vmax.f32 %v1797, %v1798
        %v1800 = vrot.slane %v1799, 1
        %v1801 = vmax.f32 %v1799, %v1800
        %v1802 = vsel %vm394, %v339, -inf
        %v1803 = vrot.slane %v1802, 4
        %v1804 = vmax.f32 %v1802, %v1803
        %v1805 = vrot.slane %v1804, 2
        %v1806 = vmax.f32 %v1804, %v1805
        %v1807 = vrot.slane %v1806, 1
        %v1808 = vmax.f32 %v1806, %v1807
        %v1809 = vsel %vm394, %v340, -inf
        %v1810 = vrot.slane %v1809, 4
        %v1811 = vmax.f32 %v1809, %v1810
        %v1812 = vrot.slane %v1811, 2
        %v1813 = vmax.f32 %v1811, %v1812
        %v1814 = vrot.slane %v1813, 1
        %v1815 = vmax.f32 %v1813, %v1814
        %v1816 = vsel %vm394, %v341, -inf
        %v1817 = vrot.slane %v1816, 4
        %v1818 = vmax.f32 %v1816, %v1817
        %v1819 = vrot.slane %v1818, 2
        %v1820 = vmax.f32 %v1818, %v1819
        %v1821 = vrot.slane %v1820, 1
        %v1822 = vmax.f32 %v1820, %v1821
        %v1823 = vsel %vm394, %v342, -inf
        %v1824 = vrot.slane %v1823, 4
        %v1825 = vmax.f32 %v1823, %v1824
        %v1826 = vrot.slane %v1825, 2
        %v1827 = vmax.f32 %v1825, %v1826
        %v1828 = vrot.slane %v1827, 1
        %v1829 = vmax.f32 %v1827, %v1828
        %v1830 = vsel %vm394, %v343, -inf
        %v1831 = vrot.slane %v1830, 4
        %v1832 = vmax.f32 %v1830, %v1831
        %v1833 = vrot.slane %v1832, 2
        %v1834 = vmax.f32 %v1832, %v1833
        %v1835 = vrot.slane %v1834, 1
        %v1836 = vmax.f32 %v1834, %v1835
        %v1837 = vsel %vm394, %v344, -inf
        %v1838 = vrot.slane %v1837, 4
        %v1839 = vmax.f32 %v1837, %v1838
        %v1840 = vrot.slane %v1839, 2
        %v1841 = vmax.f32 %v1839, %v1840
        %v1842 = vrot.slane %v1841, 1
        %v1843 = vmax.f32 %v1841, %v1842
        %v1844 = vsel %vm394, %v345, -inf
        %v1845 = vrot.slane %v1844, 4
        %v1846 = vmax.f32 %v1844, %v1845
        %v1847 = vrot.slane %v1846, 2
        %v1848 = vmax.f32 %v1846, %v1847
        %v1849 = vrot.slane %v1848, 1
        %v1850 = vmax.f32 %v1848, %v1849
        %v1851 = vsel %vm394, %v346, -inf
        %v1852 = vrot.slane %v1851, 4
        %v1853 = vmax.f32 %v1851, %v1852
        %v1854 = vrot.slane %v1853, 2
        %v1855 = vmax.f32 %v1853, %v1854
        %v1856 = vrot.slane %v1855, 1
        %v1857 = vmax.f32 %v1855, %v1856
        %v1858 = vsel %vm394, %v347, -inf
        %v1859 = vrot.slane %v1858, 4
        %v1860 = vmax.f32 %v1858, %v1859
        %v1861 = vrot.slane %v1860, 2
        %v1862 = vmax.f32 %v1860, %v1861
        %v1863 = vrot.slane %v1862, 1
        %v1864 = vmax.f32 %v1862, %v1863
        %v1865 = vsel %vm394, %v348, -inf
        %v1866 = vrot.slane %v1865, 4
        %v1867 = vmax.f32 %v1865, %v1866
        %v1868 = vrot.slane %v1867, 2
        %v1869 = vmax.f32 %v1867, %v1868
        %v1870 = vrot.slane %v1869, 1
        %v1871 = vmax.f32 %v1869, %v1870
        %v1872 = vsel %vm394, %v349, -inf
        %v1873 = vrot.slane %v1872, 4
        %v1874 = vmax.f32 %v1872, %v1873
        %v1875 = vrot.slane %v1874, 2
        %v1876 = vmax.f32 %v1874, %v1875
        %v1877 = vrot.slane %v1876, 1
        %v1878 = vmax.f32 %v1876, %v1877
        %v1879 = vsel %vm394, %v350, -inf
        %v1880 = vrot.slane %v1879, 4
        %v1881 = vmax.f32 %v1879, %v1880
        %v1882 = vrot.slane %v1881, 2
        %v1883 = vmax.f32 %v1881, %v1882
        %v1884 = vrot.slane %v1883, 1
        %v1885 = vmax.f32 %v1883, %v1884
        %v1886 = vsel %vm394, %v351, -inf
        %v1887 = vrot.slane %v1886, 4
        %v1888 = vmax.f32 %v1886, %v1887
        %v1889 = vrot.slane %v1888, 2
        %v1890 = vmax.f32 %v1888, %v1889
        %v1891 = vrot.slane %v1890, 1
        %v1892 = vmax.f32 %v1890, %v1891
        %v1893 = vsel %vm394, %v352, -inf
        %v1894 = vrot.slane %v1893, 4
        %v1895 = vmax.f32 %v1893, %v1894
        %v1896 = vrot.slane %v1895, 2
        %v1897 = vmax.f32 %v1895, %v1896
        %v1898 = vrot.slane %v1897, 1
        %v1899 = vmax.f32 %v1897, %v1898
        %v1900 = vsel %vm394, %v353, -inf
        %v1901 = vrot.slane %v1900, 4
        %v1902 = vmax.f32 %v1900, %v1901
        %v1903 = vrot.slane %v1902, 2
        %v1904 = vmax.f32 %v1902, %v1903
        %v1905 = vrot.slane %v1904, 1
        %v1906 = vmax.f32 %v1904, %v1905
        %v1907 = vsel %vm394, %v354, -inf
        %v1908 = vrot.slane %v1907, 4
        %v1909 = vmax.f32 %v1907, %v1908
        %v1910 = vrot.slane %v1909, 2
        %v1911 = vmax.f32 %v1909, %v1910
        %v1912 = vrot.slane %v1911, 1
        %v1913 = vmax.f32 %v1911, %v1912
        %v1914 = vsel %vm394, %v355, -inf
        %v1915 = vrot.slane %v1914, 4
        %v1916 = vmax.f32 %v1914, %v1915
        %v1917 = vrot.slane %v1916, 2
        %v1918 = vmax.f32 %v1916, %v1917
        %v1919 = vrot.slane %v1918, 1
        %v1920 = vmax.f32 %v1918, %v1919
        %v1921 = vsel %vm394, %v356, -inf
        %v1922 = vrot.slane %v1921, 4
        %v1923 = vmax.f32 %v1921, %v1922
        %v1924 = vrot.slane %v1923, 2
        %v1925 = vmax.f32 %v1923, %v1924
        %v1926 = vrot.slane %v1925, 1
        %v1927 = vmax.f32 %v1925, %v1926
        %v1928 = vsel %vm394, %v357, -inf
        %v1929 = vrot.slane %v1928, 4
        %v1930 = vmax.f32 %v1928, %v1929
        %v1931 = vrot.slane %v1930, 2
        %v1932 = vmax.f32 %v1930, %v1931
        %v1933 = vrot.slane %v1932, 1
        %v1934 = vmax.f32 %v1932, %v1933
        %v1935 = vsel %vm394, %v358, -inf
        %v1936 = vrot.slane %v1935, 4
        %v1937 = vmax.f32 %v1935, %v1936
        %v1938 = vrot.slane %v1937, 2
        %v1939 = vmax.f32 %v1937, %v1938
        %v1940 = vrot.slane %v1939, 1
        %v1941 = vmax.f32 %v1939, %v1940
        %v1942 = vsel %vm394, %v359, -inf
        %v1943 = vrot.slane %v1942, 4
        %v1944 = vmax.f32 %v1942, %v1943
        %v1945 = vrot.slane %v1944, 2
        %v1946 = vmax.f32 %v1944, %v1945
        %v1947 = vrot.slane %v1946, 1
        %v1948 = vmax.f32 %v1946, %v1947
        %v1949 = vsel %vm394, %v360, -inf
        %v1950 = vrot.slane %v1949, 4
        %v1951 = vmax.f32 %v1949, %v1950
        %v1952 = vrot.slane %v1951, 2
        %v1953 = vmax.f32 %v1951, %v1952
        %v1954 = vrot.slane %v1953, 1
        %v1955 = vmax.f32 %v1953, %v1954
        %v1956 = vsel %vm394, %v361, -inf
        %v1957 = vrot.slane %v1956, 4
        %v1958 = vmax.f32 %v1956, %v1957
        %v1959 = vrot.slane %v1958, 2
        %v1960 = vmax.f32 %v1958, %v1959
        %v1961 = vrot.slane %v1960, 1
        %v1962 = vmax.f32 %v1960, %v1961
        %v1963 = vsel %vm394, %v362, -inf
        %v1964 = vrot.slane %v1963, 4
        %v1965 = vmax.f32 %v1963, %v1964
        %v1966 = vrot.slane %v1965, 2
        %v1967 = vmax.f32 %v1965, %v1966
        %v1968 = vrot.slane %v1967, 1
        %v1969 = vmax.f32 %v1967, %v1968
        %v1970 = vsel %vm394, %v363, -inf
        %v1971 = vrot.slane %v1970, 4
        %v1972 = vmax.f32 %v1970, %v1971
        %v1973 = vrot.slane %v1972, 2
        %v1974 = vmax.f32 %v1972, %v1973
        %v1975 = vrot.slane %v1974, 1
        %v1976 = vmax.f32 %v1974, %v1975
        %v1977 = vsel %vm394, %v364, -inf
        %v1978 = vrot.slane %v1977, 4
        %v1979 = vmax.f32 %v1977, %v1978
        %v1980 = vrot.slane %v1979, 2
        %v1981 = vmax.f32 %v1979, %v1980
        %v1982 = vrot.slane %v1981, 1
        %v1983 = vmax.f32 %v1981, %v1982
        %v1984 = vsel %vm394, %v365, -inf
        %v1985 = vrot.slane %v1984, 4
        %v1986 = vmax.f32 %v1984, %v1985
        %v1987 = vrot.slane %v1986, 2
        %v1988 = vmax.f32 %v1986, %v1987
        %v1989 = vrot.slane %v1988, 1
        %v1990 = vmax.f32 %v1988, %v1989
        %v1991 = vsel %vm394, %v366, -inf
        %v1992 = vrot.slane %v1991, 4
        %v1993 = vmax.f32 %v1991, %v1992
        %v1994 = vrot.slane %v1993, 2
        %v1995 = vmax.f32 %v1993, %v1994
        %v1996 = vrot.slane %v1995, 1
        %v1997 = vmax.f32 %v1995, %v1996
        %v1998 = vsel %vm394, %v367, -inf
        %v1999 = vrot.slane %v1998, 4
        %v2000 = vmax.f32 %v1998, %v1999
        %v2001 = vrot.slane %v2000, 2
        %v2002 = vmax.f32 %v2000, %v2001
        %v2003 = vrot.slane %v2002, 1
        %v2004 = vmax.f32 %v2002, %v2003
        %v2005 = vsel %vm394, %v368, -inf
        %v2006 = vrot.slane %v2005, 4
        %v2007 = vmax.f32 %v2005, %v2006
        %v2008 = vrot.slane %v2007, 2
        %v2009 = vmax.f32 %v2007, %v2008
        %v2010 = vrot.slane %v2009, 1
        %v2011 = vmax.f32 %v2009, %v2010
        %v2012 = vsel %vm394, %v369, -inf
        %v2013 = vrot.slane %v2012, 4
        %v2014 = vmax.f32 %v2012, %v2013
        %v2015 = vrot.slane %v2014, 2
        %v2016 = vmax.f32 %v2014, %v2015
        %v2017 = vrot.slane %v2016, 1
        %v2018 = vmax.f32 %v2016, %v2017
        %v2019 = vsel %vm394, %v370, -inf
        %v2020 = vrot.slane %v2019, 4
        %v2021 = vmax.f32 %v2019, %v2020
        %v2022 = vrot.slane %v2021, 2
        %v2023 = vmax.f32 %v2021, %v2022
        %v2024 = vrot.slane %v2023, 1
        %v2025 = vmax.f32 %v2023, %v2024
        %v2026 = vsel %vm394, %v371, -inf
        %v2027 = vrot.slane %v2026, 4
        %v2028 = vmax.f32 %v2026, %v2027
        %v2029 = vrot.slane %v2028, 2
        %v2030 = vmax.f32 %v2028, %v2029
        %v2031 = vrot.slane %v2030, 1
        %v2032 = vmax.f32 %v2030, %v2031
        %v2033 = vsel %vm394, %v372, -inf
        %v2034 = vrot.slane %v2033, 4
        %v2035 = vmax.f32 %v2033, %v2034
        %v2036 = vrot.slane %v2035, 2
        %v2037 = vmax.f32 %v2035, %v2036
        %v2038 = vrot.slane %v2037, 1
        %v2039 = vmax.f32 %v2037, %v2038
        %v2040 = vsel %vm394, %v373, -inf
        %v2041 = vrot.slane %v2040, 4
        %v2042 = vmax.f32 %v2040, %v2041
        %v2043 = vrot.slane %v2042, 2
        %v2044 = vmax.f32 %v2042, %v2043
        %v2045 = vrot.slane %v2044, 1
        %v2046 = vmax.f32 %v2044, %v2045
        %v2047 = vsel %vm394, %v374, -inf
        %v2048 = vrot.slane %v2047, 4
        %v2049 = vmax.f32 %v2047, %v2048
        %v2050 = vrot.slane %v2049, 2
        %v2051 = vmax.f32 %v2049, %v2050
        %v2052 = vrot.slane %v2051, 1
        %v2053 = vmax.f32 %v2051, %v2052
        %v2054 = vsel %vm394, %v375, -inf
        %v2055 = vrot.slane %v2054, 4
        %v2056 = vmax.f32 %v2054, %v2055
        %v2057 = vrot.slane %v2056, 2
        %v2058 = vmax.f32 %v2056, %v2057
        %v2059 = vrot.slane %v2058, 1
        %v2060 = vmax.f32 %v2058, %v2059
        %v2061 = vsel %vm394, %v376, -inf
        %v2062 = vrot.slane %v2061, 4
        %v2063 = vmax.f32 %v2061, %v2062
        %v2064 = vrot.slane %v2063, 2
        %v2065 = vmax.f32 %v2063, %v2064
        %v2066 = vrot.slane %v2065, 1
        %v2067 = vmax.f32 %v2065, %v2066
        %v2068 = vsel %vm394, %v377, -inf
        %v2069 = vrot.slane %v2068, 4
        %v2070 = vmax.f32 %v2068, %v2069
        %v2071 = vrot.slane %v2070, 2
        %v2072 = vmax.f32 %v2070, %v2071
        %v2073 = vrot.slane %v2072, 1
        %v2074 = vmax.f32 %v2072, %v2073
        %v2075 = vsel %vm394, %v378, -inf
        %v2076 = vrot.slane %v2075, 4
        %v2077 = vmax.f32 %v2075, %v2076
        %v2078 = vrot.slane %v2077, 2
        %v2079 = vmax.f32 %v2077, %v2078
        %v2080 = vrot.slane %v2079, 1
        %v2081 = vmax.f32 %v2079, %v2080
        %v2082 = vsel %vm394, %v379, -inf
        %v2083 = vrot.slane %v2082, 4
        %v2084 = vmax.f32 %v2082, %v2083
        %v2085 = vrot.slane %v2084, 2
        %v2086 = vmax.f32 %v2084, %v2085
        %v2087 = vrot.slane %v2086, 1
        %v2088 = vmax.f32 %v2086, %v2087
        %v2089 = vsel %vm394, %v380, -inf
        %v2090 = vrot.slane %v2089, 4
        %v2091 = vmax.f32 %v2089, %v2090
        %v2092 = vrot.slane %v2091, 2
        %v2093 = vmax.f32 %v2091, %v2092
        %v2094 = vrot.slane %v2093, 1
        %v2095 = vmax.f32 %v2093, %v2094
        %v2096 = vsel %vm394, %v381, -inf
        %v2097 = vrot.slane %v2096, 4
        %v2098 = vmax.f32 %v2096, %v2097
        %v2099 = vrot.slane %v2098, 2
        %v2100 = vmax.f32 %v2098, %v2099
        %v2101 = vrot.slane %v2100, 1
        %v2102 = vmax.f32 %v2100, %v2101
        %v2103 = vsel %vm394, %v382, -inf
        %v2104 = vrot.slane %v2103, 4
        %v2105 = vmax.f32 %v2103, %v2104
        %v2106 = vrot.slane %v2105, 2
        %v2107 = vmax.f32 %v2105, %v2106
        %v2108 = vrot.slane %v2107, 1
        %v2109 = vmax.f32 %v2107, %v2108
        %v2110 = vsel %vm394, %v383, -inf
        %v2111 = vrot.slane %v2110, 4
        %v2112 = vmax.f32 %v2110, %v2111
        %v2113 = vrot.slane %v2112, 2
        %v2114 = vmax.f32 %v2112, %v2113
        %v2115 = vrot.slane %v2114, 1
        %v2116 = vmax.f32 %v2114, %v2115
        %v2117 = vsel %vm394, %v384, -inf
        %v2118 = vrot.slane %v2117, 4
        %v2119 = vmax.f32 %v2117, %v2118
        %v2120 = vrot.slane %v2119, 2
        %v2121 = vmax.f32 %v2119, %v2120
        %v2122 = vrot.slane %v2121, 1
        %v2123 = vmax.f32 %v2121, %v2122
        %v2124 = vsel %vm394, %v385, -inf
        %v2125 = vrot.slane %v2124, 4
        %v2126 = vmax.f32 %v2124, %v2125
        %v2127 = vrot.slane %v2126, 2
        %v2128 = vmax.f32 %v2126, %v2127
        %v2129 = vrot.slane %v2128, 1
        %v2130 = vmax.f32 %v2128, %v2129
        %v2131 = vsel %vm394, %v386, -inf
        %v2132 = vrot.slane %v2131, 4
        %v2133 = vmax.f32 %v2131, %v2132
        %v2134 = vrot.slane %v2133, 2
        %v2135 = vmax.f32 %v2133, %v2134
        %v2136 = vrot.slane %v2135, 1
        %v2137 = vmax.f32 %v2135, %v2136
        %v2138 = vsel %vm394, %v387, -inf
        %v2139 = vrot.slane %v2138, 4
        %v2140 = vmax.f32 %v2138, %v2139
        %v2141 = vrot.slane %v2140, 2
        %v2142 = vmax.f32 %v2140, %v2141
        %v2143 = vrot.slane %v2142, 1
        %v2144 = vmax.f32 %v2142, %v2143
        %v2145 = vsel %vm394, %v388, -inf
        %v2146 = vrot.slane %v2145, 4
        %v2147 = vmax.f32 %v2145, %v2146
        %v2148 = vrot.slane %v2147, 2
        %v2149 = vmax.f32 %v2147, %v2148
        %v2150 = vrot.slane %v2149, 1
        %v2151 = vmax.f32 %v2149, %v2150
        %v2152 = vsel %vm394, %v389, -inf
        %v2153 = vrot.slane %v2152, 4
        %v2154 = vmax.f32 %v2152, %v2153
        %v2155 = vrot.slane %v2154, 2
        %v2156 = vmax.f32 %v2154, %v2155
        %v2157 = vrot.slane %v2156, 1
        %v2158 = vmax.f32 %v2156, %v2157
        %v2159 = vsel %vm394, %v390, -inf
        %v2160 = vrot.slane %v2159, 4
        %v2161 = vmax.f32 %v2159, %v2160
        %v2162 = vrot.slane %v2161, 2
        %v2163 = vmax.f32 %v2161, %v2162
        %v2164 = vrot.slane %v2163, 1
        %v2165 = vmax.f32 %v2163, %v2164
        %v2166 = vsel %vm394, %v391, -inf
        %v2167 = vrot.slane %v2166, 4
        %v2168 = vmax.f32 %v2166, %v2167
        %v2169 = vrot.slane %v2168, 2
        %v2170 = vmax.f32 %v2168, %v2169
        %v2171 = vrot.slane %v2170, 1
        %v2172 = vmax.f32 %v2170, %v2171
        %v2173 = vsel %vm394, %v392, -inf
        %v2174 = vrot.slane %v2173, 4
        %v2175 = vmax.f32 %v2173, %v2174
        %v2176 = vrot.slane %v2175, 2
        %v2177 = vmax.f32 %v2175, %v2176
        %v2178 = vrot.slane %v2177, 1
        %v2179 = vmax.f32 %v2177, %v2178
        %v2180 = vsel %vm394, %v393, -inf
        %v2181 = vrot.slane %v2180, 4
        %v2182 = vmax.f32 %v2180, %v2181
        %v2183 = vrot.slane %v2182, 2
        %v2184 = vmax.f32 %v2182, %v2183
        %v2185 = vrot.slane %v2184, 1
        %v2186 = vmax.f32 %v2184, %v2185
        %vm2443 = vcmask 1041409
        %v2444 = vsel %vm2443, %v408, %v401
        %vm2445 = vcmask 1042434
        %v2446 = vsel %vm2445, %v415, %v2444
        %vm2447 = vcmask 1043459
        %v2448 = vsel %vm2447, %v422, %v2446
        %vm2449 = vcmask 1044484
        %v2450 = vsel %vm2449, %v429, %v2448
        %vm2451 = vcmask 1045509
        %v2452 = vsel %vm2451, %v436, %v2450
        %vm2453 = vcmask 1046534
        %v2454 = vsel %vm2453, %v443, %v2452
        %vm2455 = vcmask 1047559
        %v2456 = vsel %vm2455, %v450, %v2454
        %v2457 = vsel %vm2443, %v464, %v457
        %v2458 = vsel %vm2445, %v471, %v2457
        %v2459 = vsel %vm2447, %v478, %v2458
        %v2460 = vsel %vm2449, %v485, %v2459
        %v2461 = vsel %vm2451, %v492, %v2460
        %v2462 = vsel %vm2453, %v499, %v2461
        %v2463 = vsel %vm2455, %v506, %v2462
        %v2464 = vsel %vm2443, %v520, %v513
        %v2465 = vsel %vm2445, %v527, %v2464
        %v2466 = vsel %vm2447, %v534, %v2465
        %v2467 = vsel %vm2449, %v541, %v2466
        %v2468 = vsel %vm2451, %v548, %v2467
        %v2469 = vsel %vm2453, %v555, %v2468
        %v2470 = vsel %vm2455, %v562, %v2469
        %v2471 = vsel %vm2443, %v576, %v569
        %v2472 = vsel %vm2445, %v583, %v2471
        %v2473 = vsel %vm2447, %v590, %v2472
        %v2474 = vsel %vm2449, %v597, %v2473
        %v2475 = vsel %vm2451, %v604, %v2474
        %v2476 = vsel %vm2453, %v611, %v2475
        %v2477 = vsel %vm2455, %v618, %v2476
        %v2478 = vsel %vm2443, %v632, %v625
        %v2479 = vsel %vm2445, %v639, %v2478
        %v2480 = vsel %vm2447, %v646, %v2479
        %v2481 = vsel %vm2449, %v653, %v2480
        %v2482 = vsel %vm2451, %v660, %v2481
        %v2483 = vsel %vm2453, %v667, %v2482
        %v2484 = vsel %vm2455, %v674, %v2483
        %v2485 = vsel %vm2443, %v688, %v681
        %v2486 = vsel %vm2445, %v695, %v2485
        %v2487 = vsel %vm2447, %v702, %v2486
        %v2488 = vsel %vm2449, %v709, %v2487
        %v2489 = vsel %vm2451, %v716, %v2488
        %v2490 = vsel %vm2453, %v723, %v2489
        %v2491 = vsel %vm2455, %v730, %v2490
        %v2492 = vsel %vm2443, %v744, %v737
        %v2493 = vsel %vm2445, %v751, %v2492
        %v2494 = vsel %vm2447, %v758, %v2493
        %v2495 = vsel %vm2449, %v765, %v2494
        %v2496 = vsel %vm2451, %v772, %v2495
        %v2497 = vsel %vm2453, %v779, %v2496
        %v2498 = vsel %vm2455, %v786, %v2497
        %v2499 = vsel %vm2443, %v800, %v793
        %v2500 = vsel %vm2445, %v807, %v2499
        %v2501 = vsel %vm2447, %v814, %v2500
        %v2502 = vsel %vm2449, %v821, %v2501
        %v2503 = vsel %vm2451, %v828, %v2502
        %v2504 = vsel %vm2453, %v835, %v2503
        %v2505 = vsel %vm2455, %v842, %v2504
        %v2506 = vsel %vm2443, %v856, %v849
        %v2507 = vsel %vm2445, %v863, %v2506
        %v2508 = vsel %vm2447, %v870, %v2507
        %v2509 = vsel %vm2449, %v877, %v2508
        %v2510 = vsel %vm2451, %v884, %v2509
        %v2511 = vsel %vm2453, %v891, %v2510
        %v2512 = vsel %vm2455, %v898, %v2511
        %v2513 = vsel %vm2443, %v912, %v905
        %v2514 = vsel %vm2445, %v919, %v2513
        %v2515 = vsel %vm2447, %v926, %v2514
        %v2516 = vsel %vm2449, %v933, %v2515
        %v2517 = vsel %vm2451, %v940, %v2516
        %v2518 = vsel %vm2453, %v947, %v2517
        %v2519 = vsel %vm2455, %v954, %v2518
        %v2520 = vsel %vm2443, %v968, %v961
        %v2521 = vsel %vm2445, %v975, %v2520
        %v2522 = vsel %vm2447, %v982, %v2521
        %v2523 = vsel %vm2449, %v989, %v2522
        %v2524 = vsel %vm2451, %v996, %v2523
        %v2525 = vsel %vm2453, %v1003, %v2524
        %v2526 = vsel %vm2455, %v1010, %v2525
        %v2527 = vsel %vm2443, %v1024, %v1017
        %v2528 = vsel %vm2445, %v1031, %v2527
        %v2529 = vsel %vm2447, %v1038, %v2528
        %v2530 = vsel %vm2449, %v1045, %v2529
        %v2531 = vsel %vm2451, %v1052, %v2530
        %v2532 = vsel %vm2453, %v1059, %v2531
        %v2533 = vsel %vm2455, %v1066, %v2532
        %v2534 = vsel %vm2443, %v1080, %v1073
        %v2535 = vsel %vm2445, %v1087, %v2534
        %v2536 = vsel %vm2447, %v1094, %v2535
        %v2537 = vsel %vm2449, %v1101, %v2536
        %v2538 = vsel %vm2451, %v1108, %v2537
        %v2539 = vsel %vm2453, %v1115, %v2538
        %v2540 = vsel %vm2455, %v1122, %v2539
        %v2541 = vsel %vm2443, %v1136, %v1129
        %v2542 = vsel %vm2445, %v1143, %v2541
        %v2543 = vsel %vm2447, %v1150, %v2542
        %v2544 = vsel %vm2449, %v1157, %v2543
        %v2545 = vsel %vm2451, %v1164, %v2544
        %v2546 = vsel %vm2453, %v1171, %v2545
        %v2547 = vsel %vm2455, %v1178, %v2546
        %v2548 = vsel %vm2443, %v1192, %v1185
        %v2549 = vsel %vm2445, %v1199, %v2548
        %v2550 = vsel %vm2447, %v1206, %v2549
        %v2551 = vsel %vm2449, %v1213, %v2550
        %v2552 = vsel %vm2451, %v1220, %v2551
        %v2553 = vsel %vm2453, %v1227, %v2552
        %v2554 = vsel %vm2455, %v1234, %v2553
        %v2555 = vsel %vm2443, %v1248, %v1241
        %v2556 = vsel %vm2445, %v1255, %v2555
        %v2557 = vsel %vm2447, %v1262, %v2556
        %v2558 = vsel %vm2449, %v1269, %v2557
        %v2559 = vsel %vm2451, %v1276, %v2558
        %v2560 = vsel %vm2453, %v1283, %v2559
        %v2561 = vsel %vm2455, %v1290, %v2560
        %v2562 = vsel %vm2443, %v1304, %v1297
        %v2563 = vsel %vm2445, %v1311, %v2562
        %v2564 = vsel %vm2447, %v1318, %v2563
        %v2565 = vsel %vm2449, %v1325, %v2564
        %v2566 = vsel %vm2451, %v1332, %v2565
        %v2567 = vsel %vm2453, %v1339, %v2566
        %v2568 = vsel %vm2455, %v1346, %v2567
        %v2569 = vsel %vm2443, %v1360, %v1353
        %v2570 = vsel %vm2445, %v1367, %v2569
        %v2571 = vsel %vm2447, %v1374, %v2570
        %v2572 = vsel %vm2449, %v1381, %v2571
        %v2573 = vsel %vm2451, %v1388, %v2572
        %v2574 = vsel %vm2453, %v1395, %v2573
        %v2575 = vsel %vm2455, %v1402, %v2574
        %v2576 = vsel %vm2443, %v1416, %v1409
        %v2577 = vsel %vm2445, %v1423, %v2576
        %v2578 = vsel %vm2447, %v1430, %v2577
        %v2579 = vsel %vm2449, %v1437, %v2578
        %v2580 = vsel %vm2451, %v1444, %v2579
        %v2581 = vsel %vm2453, %v1451, %v2580
        %v2582 = vsel %vm2455, %v1458, %v2581
        %v2583 = vsel %vm2443, %v1472, %v1465
        %v2584 = vsel %vm2445, %v1479, %v2583
        %v2585 = vsel %vm2447, %v1486, %v2584
        %v2586 = vsel %vm2449, %v1493, %v2585
        %v2587 = vsel %vm2451, %v1500, %v2586
        %v2588 = vsel %vm2453, %v1507, %v2587
        %v2589 = vsel %vm2455, %v1514, %v2588
        %v2590 = vsel %vm2443, %v1528, %v1521
        %v2591 = vsel %vm2445, %v1535, %v2590
        %v2592 = vsel %vm2447, %v1542, %v2591
        %v2593 = vsel %vm2449, %v1549, %v2592
        %v2594 = vsel %vm2451, %v1556, %v2593
        %v2595 = vsel %vm2453, %v1563, %v2594
        %v2596 = vsel %vm2455, %v1570, %v2595
        %v2597 = vsel %vm2443, %v1584, %v1577
        %v2598 = vsel %vm2445, %v1591, %v2597
        %v2599 = vsel %vm2447, %v1598, %v2598
        %v2600 = vsel %vm2449, %v1605, %v2599
        %v2601 = vsel %vm2451, %v1612, %v2600
        %v2602 = vsel %vm2453, %v1619, %v2601
        %v2603 = vsel %vm2455, %v1626, %v2602
        %v2604 = vsel %vm2443, %v1640, %v1633
        %v2605 = vsel %vm2445, %v1647, %v2604
        %v2606 = vsel %vm2447, %v1654, %v2605
        %v2607 = vsel %vm2449, %v1661, %v2606
        %v2608 = vsel %vm2451, %v1668, %v2607
        %v2609 = vsel %vm2453, %v1675, %v2608
        %v2610 = vsel %vm2455, %v1682, %v2609
        %v2611 = vsel %vm2443, %v1696, %v1689
        %v2612 = vsel %vm2445, %v1703, %v2611
        %v2613 = vsel %vm2447, %v1710, %v2612
        %v2614 = vsel %vm2449, %v1717, %v2613
        %v2615 = vsel %vm2451, %v1724, %v2614
        %v2616 = vsel %vm2453, %v1731, %v2615
        %v2617 = vsel %vm2455, %v1738, %v2616
        %v2618 = vsel %vm2443, %v1752, %v1745
        %v2619 = vsel %vm2445, %v1759, %v2618
        %v2620 = vsel %vm2447, %v1766, %v2619
        %v2621 = vsel %vm2449, %v1773, %v2620
        %v2622 = vsel %vm2451, %v1780, %v2621
        %v2623 = vsel %vm2453, %v1787, %v2622
        %v2624 = vsel %vm2455, %v1794, %v2623
        %v2625 = vsel %vm2443, %v1808, %v1801
        %v2626 = vsel %vm2445, %v1815, %v2625
        %v2627 = vsel %vm2447, %v1822, %v2626
        %v2628 = vsel %vm2449, %v1829, %v2627
        %v2629 = vsel %vm2451, %v1836, %v2628
        %v2630 = vsel %vm2453, %v1843, %v2629
        %v2631 = vsel %vm2455, %v1850, %v2630
        %v2632 = vsel %vm2443, %v1864, %v1857
        %v2633 = vsel %vm2445, %v1871, %v2632
        %v2634 = vsel %vm2447, %v1878, %v2633
        %v2635 = vsel %vm2449, %v1885, %v2634
        %v2636 = vsel %vm2451, %v1892, %v2635
        %v2637 = vsel %vm2453, %v1899, %v2636
        %v2638 = vsel %vm2455, %v1906, %v2637
        %v2639 = vsel %vm2443, %v1920, %v1913
        %v2640 = vsel %vm2445, %v1927, %v2639
        %v2641 = vsel %vm2447, %v1934, %v2640
        %v2642 = vsel %vm2449, %v1941, %v2641
        %v2643 = vsel %vm2451, %v1948, %v2642
        %v2644 = vsel %vm2453, %v1955, %v2643
        %v2645 = vsel %vm2455, %v1962, %v2644
        %v2646 = vsel %vm2443, %v1976, %v1969
        %v2647 = vsel %vm2445, %v1983, %v2646
        %v2648 = vsel %vm2447, %v1990, %v2647
        %v2649 = vsel %vm2449, %v1997, %v2648
        %v2650 = vsel %vm2451, %v2004, %v2649
        %v2651 = vsel %vm2453, %v2011, %v2650
        %v2652 = vsel %vm2455, %v2018, %v2651
        %v2653 = vsel %vm2443, %v2032, %v2025
        %v2654 = vsel %vm2445, %v2039, %v2653
        %v2655 = vsel %vm2447, %v2046, %v2654
        %v2656 = vsel %vm2449, %v2053, %v2655
        %v2657 = vsel %vm2451, %v2060, %v2656
        %v2658 = vsel %vm2453, %v2067, %v2657
        %v2659 = vsel %vm2455, %v2074, %v2658
        %v2660 = vsel %vm2443, %v2088, %v2081
        %v2661 = vsel %vm2445, %v2095, %v2660
        %v2662 = vsel %vm2447, %v2102, %v2661
        %v2663 = vsel %vm2449, %v2109, %v2662
        %v2664 = vsel %vm2451, %v2116, %v2663
        %v2665 = vsel %vm2453, %v2123, %v2664
        %v2666 = vsel %vm2455, %v2130, %v2665
        %v2667 = vsel %vm2443, %v2144, %v2137
        %v2668 = vsel %vm2445, %v2151, %v2667
        %v2669 = vsel %vm2447, %v2158, %v2668
        %v2670 = vsel %vm2449, %v2165, %v2669
        %v2671 = vsel %vm2451, %v2172, %v2670
        %v2672 = vsel %vm2453, %v2179, %v2671
        %v2673 = vsel %vm2455, %v2186, %v2672
        %2706 = vst [vmem:[%s118] sm:$0xff] %v2456
        %2707 = vst [vmem:[%s118 + $0x8] sm:$0xff] %v2463
        %2708 = vst [vmem:[%s118 + $0x10] sm:$0xff] %v2470
        %2709 = vst [vmem:[%s118 + $0x18] sm:$0xff] %v2477
        %2710 = vst [vmem:[%s118 + $0x20] sm:$0xff] %v2484
        %2711 = vst [vmem:[%s118 + $0x28] sm:$0xff] %v2491
        %2712 = vst [vmem:[%s118 + $0x30] sm:$0xff] %v2498
        %2713 = vst [vmem:[%s118 + $0x38] sm:$0xff] %v2505
        %2714 = vst [vmem:[%s118 + $0x40] sm:$0xff] %v2512
        %2715 = vst [vmem:[%s118 + $0x48] sm:$0xff] %v2519
        %2716 = vst [vmem:[%s118 + $0x50] sm:$0xff] %v2526
        %2717 = vst [vmem:[%s118 + $0x58] sm:$0xff] %v2533
        %2718 = vst [vmem:[%s118 + $0x60] sm:$0xff] %v2540
        %2719 = vst [vmem:[%s118 + $0x68] sm:$0xff] %v2547
        %2720 = vst [vmem:[%s118 + $0x70] sm:$0xff] %v2554
        %2721 = vst [vmem:[%s118 + $0x78] sm:$0xff] %v2561
        %2722 = vst [vmem:[%s118 + $0x80] sm:$0xff] %v2568
        %2723 = vst [vmem:[%s118 + $0x88] sm:$0xff] %v2575
        %2724 = vst [vmem:[%s118 + $0x90] sm:$0xff] %v2582
        %2725 = vst [vmem:[%s118 + $0x98] sm:$0xff] %v2589
        %2726 = vst [vmem:[%s118 + $0xa0] sm:$0xff] %v2596
        %2727 = vst [vmem:[%s118 + $0xa8] sm:$0xff] %v2603
        %2728 = vst [vmem:[%s118 + $0xb0] sm:$0xff] %v2610
        %2729 = vst [vmem:[%s118 + $0xb8] sm:$0xff] %v2617
        %2730 = vst [vmem:[%s118 + $0xc0] sm:$0xff] %v2624
        %2731 = vst [vmem:[%s118 + $0xc8] sm:$0xff] %v2631
        %2732 = vst [vmem:[%s118 + $0xd0] sm:$0xff] %v2638
        %2733 = vst [vmem:[%s118 + $0xd8] sm:$0xff] %v2645
        %2734 = vst [vmem:[%s118 + $0xe0] sm:$0xff] %v2652
        %2735 = vst [vmem:[%s118 + $0xe8] sm:$0xff] %v2659
        %2736 = vst [vmem:[%s118 + $0xf0] sm:$0xff] %v2666
        %2737 = vst [vmem:[%s118 + $0xf8] sm:$0xff] %v2673
        %s2738 = sand.u32 %s46, 1
        %s2739 = sand.u32 %s46, 1
        %s2740 = smul.addr %s2739, 256
        %s2741 = scalar_lea.vmem [#allocation2], %s2740
        // Predicated region
        $region25: #{convnet_forward.6} parent=23 // pred_check
          %p2742 = pneg %p56
        $region26: #{convnet_forward.6} parent=23 // pred_check_branch
          %2744 = sbr.rel (%p2742) target = $region28
        $region27: #{convnet_forward.6} parent=23 // pred_region
          %s2745 = smul.u32 32, %s12
          %s2746 = ssub.s32 49, %s2745
          %p2747 = scmp.lt.s32.totalorder %s2746, 32
          %s2748 = scalar_select %p2747, %s2746, 32
          %s2749 = smul.u32 128, %s2748
          %p2750 = scmp.ne.s32.totalorder 0, %s2749
          %s2751 = smul.addr %s2745, 8
          %s2752 = scalar_lea.vmem %s1, %s2751
          // Predicated region
          $region29: #{convnet_forward.6} parent=27 // pred_check
            %p2753 = pneg %p2750
          $region30: #{convnet_forward.6} parent=27 // pred_check_branch
            %2755 = sbr.rel (%p2753) target = $region32
          $region31: #{convnet_forward.6} parent=27 // pred_region
            // Predicated region
            $region33: #{convnet_forward.6} parent=31 // pred_check
              _
            $region34: #{convnet_forward.6} parent=31 // pred_check_branch
              %2757 = sbr.rel (0) target = $region36
            $region35: #{convnet_forward.6} parent=31 // pred_region
              // Predicated region
              $region55: #{convnet_forward.6} parent=35 // pred_check
                _
              $region56: #{convnet_forward.6} parent=35 // pred_check_branch
                %2869 = sbr.rel (0) target = $region58
              $region57: #{convnet_forward.6} parent=35 // pred_region
                %s2870 = sshrl.u32 %s2748, 5
                // While loop
                $region59: #{convnet_forward.6} parent=57 // loop_pre_header
                  _
                $region60: #{convnet_forward.6} parent=57 // loop_header
                  %s2872 = sphi 0, %s2874
                  %p2873 = scmp.ge.s32.totalorder %s2872, %s2870
                  %s2877 = sphi 0, %s2946
                  %s2878 = sphi %s2741, %s2949
                  %s2879 = sphi %s2752, %s2950
                $region61: #{convnet_forward.6} parent=57 // loop_header_branch
                  %2876 = sbr.rel (%p2873) target = $region65
                $region62: #{convnet_forward.6} parent=57 // loop_body
                  %v2880 = vld [vmem:[%s2878] sm:$0xff]
                  %2881 = vst [vmem:[%s2879] sm:$0xff] %v2880
                  %v2882 = vld [vmem:[%s2878 + $0x8] sm:$0xff]
                  %2883 = vst [vmem:[%s2879 + $0x8] sm:$0xff] %v2882
                  %v2884 = vld [vmem:[%s2878 + $0x10] sm:$0xff]
                  %2885 = vst [vmem:[%s2879 + $0x10] sm:$0xff] %v2884
                  %v2886 = vld [vmem:[%s2878 + $0x18] sm:$0xff]
                  %2887 = vst [vmem:[%s2879 + $0x18] sm:$0xff] %v2886
                  %v2888 = vld [vmem:[%s2878 + $0x20] sm:$0xff]
                  %2889 = vst [vmem:[%s2879 + $0x20] sm:$0xff] %v2888
                  %v2890 = vld [vmem:[%s2878 + $0x28] sm:$0xff]
                  %2891 = vst [vmem:[%s2879 + $0x28] sm:$0xff] %v2890
                  %v2892 = vld [vmem:[%s2878 + $0x30] sm:$0xff]
                  %2893 = vst [vmem:[%s2879 + $0x30] sm:$0xff] %v2892
                  %v2894 = vld [vmem:[%s2878 + $0x38] sm:$0xff]
                  %2895 = vst [vmem:[%s2879 + $0x38] sm:$0xff] %v2894
                  %v2896 = vld [vmem:[%s2878 + $0x40] sm:$0xff]
                  %2897 = vst [vmem:[%s2879 + $0x40] sm:$0xff] %v2896
                  %v2898 = vld [vmem:[%s2878 + $0x48] sm:$0xff]
                  %2899 = vst [vmem:[%s2879 + $0x48] sm:$0xff] %v2898
                  %v2900 = vld [vmem:[%s2878 + $0x50] sm:$0xff]
                  %2901 = vst [vmem:[%s2879 + $0x50] sm:$0xff] %v2900
                  %v2902 = vld [vmem:[%s2878 + $0x58] sm:$0xff]
                  %2903 = vst [vmem:[%s2879 + $0x58] sm:$0xff] %v2902
                  %v2904 = vld [vmem:[%s2878 + $0x60] sm:$0xff]
                  %2905 = vst [vmem:[%s2879 + $0x60] sm:$0xff] %v2904
                  %v2906 = vld [vmem:[%s2878 + $0x68] sm:$0xff]
                  %2907 = vst [vmem:[%s2879 + $0x68] sm:$0xff] %v2906
                  %v2908 = vld [vmem:[%s2878 + $0x70] sm:$0xff]
                  %2909 = vst [vmem:[%s2879 + $0x70] sm:$0xff] %v2908
                  %v2910 = vld [vmem:[%s2878 + $0x78] sm:$0xff]
                  %2911 = vst [vmem:[%s2879 + $0x78] sm:$0xff] %v2910
                  %v2912 = vld [vmem:[%s2878 + $0x80] sm:$0xff]
                  %2913 = vst [vmem:[%s2879 + $0x80] sm:$0xff] %v2912
                  %v2914 = vld [vmem:[%s2878 + $0x88] sm:$0xff]
                  %2915 = vst [vmem:[%s2879 + $0x88] sm:$0xff] %v2914
                  %v2916 = vld [vmem:[%s2878 + $0x90] sm:$0xff]
                  %2917 = vst [vmem:[%s2879 + $0x90] sm:$0xff] %v2916
                  %v2918 = vld [vmem:[%s2878 + $0x98] sm:$0xff]
                  %2919 = vst [vmem:[%s2879 + $0x98] sm:$0xff] %v2918
                  %v2920 = vld [vmem:[%s2878 + $0xa0] sm:$0xff]
                  %2921 = vst [vmem:[%s2879 + $0xa0] sm:$0xff] %v2920
                  %v2922 = vld [vmem:[%s2878 + $0xa8] sm:$0xff]
                  %2923 = vst [vmem:[%s2879 + $0xa8] sm:$0xff] %v2922
                  %v2924 = vld [vmem:[%s2878 + $0xb0] sm:$0xff]
                  %2925 = vst [vmem:[%s2879 + $0xb0] sm:$0xff] %v2924
                  %v2926 = vld [vmem:[%s2878 + $0xb8] sm:$0xff]
                  %2927 = vst [vmem:[%s2879 + $0xb8] sm:$0xff] %v2926
                  %v2928 = vld [vmem:[%s2878 + $0xc0] sm:$0xff]
                  %2929 = vst [vmem:[%s2879 + $0xc0] sm:$0xff] %v2928
                  %v2930 = vld [vmem:[%s2878 + $0xc8] sm:$0xff]
                  %2931 = vst [vmem:[%s2879 + $0xc8] sm:$0xff] %v2930
                  %v2932 = vld [vmem:[%s2878 + $0xd0] sm:$0xff]
                  %2933 = vst [vmem:[%s2879 + $0xd0] sm:$0xff] %v2932
                  %v2934 = vld [vmem:[%s2878 + $0xd8] sm:$0xff]
                  %2935 = vst [vmem:[%s2879 + $0xd8] sm:$0xff] %v2934
                  %v2936 = vld [vmem:[%s2878 + $0xe0] sm:$0xff]
                  %2937 = vst [vmem:[%s2879 + $0xe0] sm:$0xff] %v2936
                  %v2938 = vld [vmem:[%s2878 + $0xe8] sm:$0xff]
                  %2939 = vst [vmem:[%s2879 + $0xe8] sm:$0xff] %v2938
                  %v2940 = vld [vmem:[%s2878 + $0xf0] sm:$0xff]
                  %2941 = vst [vmem:[%s2879 + $0xf0] sm:$0xff] %v2940
                  %v2942 = vld [vmem:[%s2878 + $0xf8] sm:$0xff]
                  %2943 = vst [vmem:[%s2879 + $0xf8] sm:$0xff] %v2942
                  %s2944 = sadd.s32 1, %s2877
                  %p2945 = scmp.ge.s32.totalorder %s2944, %s2870
                  %s2946 = scalar_select %p2945, 0, %s2944
                  %s2947 = smul.u32 %s2946, 256
                  %s2948 = smul.u32 %s2946, 256
                  %s2949 = scalar_lea.vmem %s2741, %s2947 [#allocation2]
                  %s2950 = scalar_lea.vmem %s2752, %s2948
                $region63: #{convnet_forward.6} parent=57 // loop_footer
                  %s2874 = sadd.s32 %s2872, 1
                $region64: #{convnet_forward.6} parent=57 // loop_footer_branch
                  %2871 = sbr.rel target = $region60
                $region65: #{convnet_forward.6} parent=57 // loop_exit
                  _
                %s2951 = sshrl.u32 %s2748, 5
                %s2952 = sand.u32 %s2748, 31
                %s2953 = smul.u32 %s2951, 32
                %s2954 = smul.u32 8, %s2953
                %s2955 = scalar_lea.vmem %s2741, %s2954 [#allocation2]
                %s2956 = smul.u32 8, %s2953
                %s2957 = scalar_lea.vmem %s2752, %s2956
                // While loop
                $region66: #{convnet_forward.6} parent=57 // loop_pre_header
                  _
                $region67: #{convnet_forward.6} parent=57 // loop_header
                  %s2959 = sphi 0, %s2961
                  %p2960 = scmp.ge.s32.totalorder %s2959, %s2952
                  %s2964 = sphi 0, %s2971
                  %s2965 = sphi %s2955, %s2974
                  %s2966 = sphi %s2957, %s2975
                $region68: #{convnet_forward.6} parent=57 // loop_header_branch
                  %2963 = sbr.rel (%p2960) target = $region72
                $region69: #{convnet_forward.6} parent=57 // loop_body
                  %v2967 = vld [vmem:[%s2965] sm:$0xff]
                  %2968 = vst [vmem:[%s2966] sm:$0xff] %v2967
                  %s2969 = sadd.s32 1, %s2964
                  %p2970 = scmp.ge.s32.totalorder %s2969, %s2952
                  %s2971 = scalar_select %p2970, 0, %s2969
                  %s2972 = smul.u32 %s2971, 8
                  %s2973 = smul.u32 %s2971, 8
                  %s2974 = scalar_lea.vmem %s2955, %s2972 [#allocation2]
                  %s2975 = scalar_lea.vmem %s2957, %s2973
                $region70: #{convnet_forward.6} parent=57 // loop_footer
                  %s2961 = sadd.s32 %s2959, 1
                $region71: #{convnet_forward.6} parent=57 // loop_footer_branch
                  %2958 = sbr.rel target = $region67
                $region72: #{convnet_forward.6} parent=57 // loop_exit
                  _
              $region58: #{convnet_forward.6} parent=35 // pred_fallthru
                _
              // Predicated region
              $region73: #{convnet_forward.6} parent=35 // pred_check
                _
              $region74: #{convnet_forward.6} parent=35 // pred_check_branch
                %2977 = sbr.rel target = $region76
              $region75: #{convnet_forward.6} parent=35 // pred_region
                _
              $region76: #{convnet_forward.6} parent=35 // pred_fallthru
                _
            $region36: #{convnet_forward.6} parent=31 // pred_fallthru
              _
            // Predicated region
            $region37: #{convnet_forward.6} parent=31 // pred_check
              _
            $region38: #{convnet_forward.6} parent=31 // pred_check_branch
              %2759 = sbr.rel target = $region40
            $region39: #{convnet_forward.6} parent=31 // pred_region
              %s2761 = ssub.s32 256, 1
              %s2762 = sshrl.u32 %s2748, 5
              // While loop
              $region41: #{convnet_forward.6} parent=39 // loop_pre_header
                _
              $region42: #{convnet_forward.6} parent=39 // loop_header
                %s2764 = sphi 0, %s2766
                %p2765 = scmp.ge.s32.totalorder %s2764, %s2762
                %s2769 = sphi 0, %s2838
                %s2770 = sphi %s2741, %s2841
                %s2771 = sphi %s2752, %s2842
              $region43: #{convnet_forward.6} parent=39 // loop_header_branch
                %2768 = sbr.rel (%p2765) target = $region47
              $region44: #{convnet_forward.6} parent=39 // loop_body
                %v2772 = vld [vmem:[%s2770] sm:%s2761]
                %2773 = vst [vmem:[%s2771] sm:%s2761] %v2772
                %v2774 = vld [vmem:[%s2770 + $0x8] sm:%s2761]
                %2775 = vst [vmem:[%s2771 + $0x8] sm:%s2761] %v2774
                %v2776 = vld [vmem:[%s2770 + $0x10] sm:%s2761]
                %2777 = vst [vmem:[%s2771 + $0x10] sm:%s2761] %v2776
                %v2778 = vld [vmem:[%s2770 + $0x18] sm:%s2761]
                %2779 = vst [vmem:[%s2771 + $0x18] sm:%s2761] %v2778
                %v2780 = vld [vmem:[%s2770 + $0x20] sm:%s2761]
                %2781 = vst [vmem:[%s2771 + $0x20] sm:%s2761] %v2780
                %v2782 = vld [vmem:[%s2770 + $0x28] sm:%s2761]
                %2783 = vst [vmem:[%s2771 + $0x28] sm:%s2761] %v2782
                %v2784 = vld [vmem:[%s2770 + $0x30] sm:%s2761]
                %2785 = vst [vmem:[%s2771 + $0x30] sm:%s2761] %v2784
                %v2786 = vld [vmem:[%s2770 + $0x38] sm:%s2761]
                %2787 = vst [vmem:[%s2771 + $0x38] sm:%s2761] %v2786
                %v2788 = vld [vmem:[%s2770 + $0x40] sm:%s2761]
                %2789 = vst [vmem:[%s2771 + $0x40] sm:%s2761] %v2788
                %v2790 = vld [vmem:[%s2770 + $0x48] sm:%s2761]
                %2791 = vst [vmem:[%s2771 + $0x48] sm:%s2761] %v2790
                %v2792 = vld [vmem:[%s2770 + $0x50] sm:%s2761]
                %2793 = vst [vmem:[%s2771 + $0x50] sm:%s2761] %v2792
                %v2794 = vld [vmem:[%s2770 + $0x58] sm:%s2761]
                %2795 = vst [vmem:[%s2771 + $0x58] sm:%s2761] %v2794
                %v2796 = vld [vmem:[%s2770 + $0x60] sm:%s2761]
                %2797 = vst [vmem:[%s2771 + $0x60] sm:%s2761] %v2796
                %v2798 = vld [vmem:[%s2770 + $0x68] sm:%s2761]
                %2799 = vst [vmem:[%s2771 + $0x68] sm:%s2761] %v2798
                %v2800 = vld [vmem:[%s2770 + $0x70] sm:%s2761]
                %2801 = vst [vmem:[%s2771 + $0x70] sm:%s2761] %v2800
                %v2802 = vld [vmem:[%s2770 + $0x78] sm:%s2761]
                %2803 = vst [vmem:[%s2771 + $0x78] sm:%s2761] %v2802
                %v2804 = vld [vmem:[%s2770 + $0x80] sm:%s2761]
                %2805 = vst [vmem:[%s2771 + $0x80] sm:%s2761] %v2804
                %v2806 = vld [vmem:[%s2770 + $0x88] sm:%s2761]
                %2807 = vst [vmem:[%s2771 + $0x88] sm:%s2761] %v2806
                %v2808 = vld [vmem:[%s2770 + $0x90] sm:%s2761]
                %2809 = vst [vmem:[%s2771 + $0x90] sm:%s2761] %v2808
                %v2810 = vld [vmem:[%s2770 + $0x98] sm:%s2761]
                %2811 = vst [vmem:[%s2771 + $0x98] sm:%s2761] %v2810
                %v2812 = vld [vmem:[%s2770 + $0xa0] sm:%s2761]
                %2813 = vst [vmem:[%s2771 + $0xa0] sm:%s2761] %v2812
                %v2814 = vld [vmem:[%s2770 + $0xa8] sm:%s2761]
                %2815 = vst [vmem:[%s2771 + $0xa8] sm:%s2761] %v2814
                %v2816 = vld [vmem:[%s2770 + $0xb0] sm:%s2761]
                %2817 = vst [vmem:[%s2771 + $0xb0] sm:%s2761] %v2816
                %v2818 = vld [vmem:[%s2770 + $0xb8] sm:%s2761]
                %2819 = vst [vmem:[%s2771 + $0xb8] sm:%s2761] %v2818
                %v2820 = vld [vmem:[%s2770 + $0xc0] sm:%s2761]
                %2821 = vst [vmem:[%s2771 + $0xc0] sm:%s2761] %v2820
                %v2822 = vld [vmem:[%s2770 + $0xc8] sm:%s2761]
                %2823 = vst [vmem:[%s2771 + $0xc8] sm:%s2761] %v2822
                %v2824 = vld [vmem:[%s2770 + $0xd0] sm:%s2761]
                %2825 = vst [vmem:[%s2771 + $0xd0] sm:%s2761] %v2824
                %v2826 = vld [vmem:[%s2770 + $0xd8] sm:%s2761]
                %2827 = vst [vmem:[%s2771 + $0xd8] sm:%s2761] %v2826
                %v2828 = vld [vmem:[%s2770 + $0xe0] sm:%s2761]
                %2829 = vst [vmem:[%s2771 + $0xe0] sm:%s2761] %v2828
                %v2830 = vld [vmem:[%s2770 + $0xe8] sm:%s2761]
                %2831 = vst [vmem:[%s2771 + $0xe8] sm:%s2761] %v2830
                %v2832 = vld [vmem:[%s2770 + $0xf0] sm:%s2761]
                %2833 = vst [vmem:[%s2771 + $0xf0] sm:%s2761] %v2832
                %v2834 = vld [vmem:[%s2770 + $0xf8] sm:%s2761]
                %2835 = vst [vmem:[%s2771 + $0xf8] sm:%s2761] %v2834
                %s2836 = sadd.s32 1, %s2769
                %p2837 = scmp.ge.s32.totalorder %s2836, %s2762
                %s2838 = scalar_select %p2837, 0, %s2836
                %s2839 = smul.u32 %s2838, 256
                %s2840 = smul.u32 %s2838, 256
                %s2841 = scalar_lea.vmem %s2741, %s2839 [#allocation2]
                %s2842 = scalar_lea.vmem %s2752, %s2840
              $region45: #{convnet_forward.6} parent=39 // loop_footer
                %s2766 = sadd.s32 %s2764, 1
              $region46: #{convnet_forward.6} parent=39 // loop_footer_branch
                %2763 = sbr.rel target = $region42
              $region47: #{convnet_forward.6} parent=39 // loop_exit
                _
              %s2843 = sshrl.u32 %s2748, 5
              %s2844 = sand.u32 %s2748, 31
              %s2845 = smul.u32 %s2843, 32
              %s2846 = smul.u32 8, %s2845
              %s2847 = scalar_lea.vmem %s2741, %s2846 [#allocation2]
              %s2848 = smul.u32 8, %s2845
              %s2849 = scalar_lea.vmem %s2752, %s2848
              // While loop
              $region48: #{convnet_forward.6} parent=39 // loop_pre_header
                _
              $region49: #{convnet_forward.6} parent=39 // loop_header
                %s2851 = sphi 0, %s2853
                %p2852 = scmp.ge.s32.totalorder %s2851, %s2844
                %s2856 = sphi 0, %s2863
                %s2857 = sphi %s2847, %s2866
                %s2858 = sphi %s2849, %s2867
              $region50: #{convnet_forward.6} parent=39 // loop_header_branch
                %2855 = sbr.rel (%p2852) target = $region54
              $region51: #{convnet_forward.6} parent=39 // loop_body
                %v2859 = vld [vmem:[%s2857] sm:%s2761]
                %2860 = vst [vmem:[%s2858] sm:%s2761] %v2859
                %s2861 = sadd.s32 1, %s2856
                %p2862 = scmp.ge.s32.totalorder %s2861, %s2844
                %s2863 = scalar_select %p2862, 0, %s2861
                %s2864 = smul.u32 %s2863, 8
                %s2865 = smul.u32 %s2863, 8
                %s2866 = scalar_lea.vmem %s2847, %s2864 [#allocation2]
                %s2867 = scalar_lea.vmem %s2849, %s2865
              $region52: #{convnet_forward.6} parent=39 // loop_footer
                %s2853 = sadd.s32 %s2851, 1
              $region53: #{convnet_forward.6} parent=39 // loop_footer_branch
                %2850 = sbr.rel target = $region49
              $region54: #{convnet_forward.6} parent=39 // loop_exit
                _
            $region40: #{convnet_forward.6} parent=31 // pred_fallthru
              _
          $region32: #{convnet_forward.6} parent=27 // pred_fallthru
            _
          %2978 = vnop
        $region28: #{convnet_forward.6} parent=23 // pred_fallthru
          _
      $region24: #{convnet_forward.6} parent=5 // pred_fallthru
        _
      %p2979 = scmp.le.s32.totalorder 2, %s7
      // Predicated region
      $region77: #{convnet_forward.6} parent=5 // pred_check
        %p2980 = pneg %p2979
      $region78: #{convnet_forward.6} parent=5 // pred_check_branch
        %2982 = sbr.rel (%p2980) target = $region80
      $region79: #{convnet_forward.6} parent=5 // pred_region
        %s2983 = ssub.s32 %s7, 2
        // Predicated region
        $region81: #{convnet_forward.6} parent=79 // pred_check
          %p2984 = pneg %p62
        $region82: #{convnet_forward.6} parent=79 // pred_check_branch
          %2986 = sbr.rel (%p2984) target = $region84
        $region83: #{convnet_forward.6} parent=79 // pred_region
          %s2987 = sand.u32 %s47, 1
          %s2988 = sand.u32 %s47, 1
          %s2989 = smul.addr %s2988, 256
          %s2990 = scalar_lea.vmem [#allocation2], %s2989
        $region84: #{convnet_forward.6} parent=79 // pred_fallthru
          _
      $region80: #{convnet_forward.6} parent=5 // pred_fallthru
        _
    $region6: #{convnet_forward.6} parent=1 // loop_footer
      %s11 = sadd.s32 1, %s7
    $region7: #{convnet_forward.6} parent=1 // loop_footer_branch
      %6 = sbr.rel target = $region3
    $region8: #{convnet_forward.6} parent=1 // loop_exit
      _

// kernel: convnet_forward.7
$region0: #{convnet_forward.7}
  #allocation0 [shape = 'u32[]', space=smem, size = 0x4, offset = 0x4, fixed_abs, tag = 'smem constant byte address 0x4 - core index']
  #allocation1 [shape = 'u32[144,128]{1,0:T(1,128)}', space=vmem, size = 0x12000, scoped, tag = 'internal scratch']
  %s0 = inlined_call_operand.vmem [shape: bf16[200,150], index: 0, kind: input, shape index: {}]
  %s1 = inlined_call_operand.vmem [shape: bf16[150,128], index: 1, kind: input, shape index: {}]
  %s2 = inlined_call_operand.vmem [shape: f32[1,128], index: 2, kind: input, shape index: {}]
  %s3 = inlined_call_operand.vmem [shape: f32[200,128], index: 3, kind: output, shape index: {}]
  %s4 = sld [smem:[#allocation0]]
  $region22: #{convnet_forward.7} parent=0
    _
  %s6 = ssub.s32 1, %s4
  %s7 = scalar_select 0, %s6, %s4
  // Predicated region
  $region2: #{convnet_forward.7} parent=0 // pred_check
    _
  $region3: #{convnet_forward.7} parent=0 // pred_check_branch
    %9 = sbr.rel (0) target = $region5
  $region4: #{convnet_forward.7} parent=0 // pred_region
    _
  $region5: #{convnet_forward.7} parent=0 // pred_fallthru
    _
  // Predicated region
  $region6: #{convnet_forward.7} parent=0 // pred_check
    _
  $region7: #{convnet_forward.7} parent=0 // pred_check_branch
    %11 = sbr.rel (0) target = $region9
  $region8: #{convnet_forward.7} parent=0 // pred_region
    _
  $region9: #{convnet_forward.7} parent=0 // pred_fallthru
    _
  // Predicated region
  $region10: #{convnet_forward.7} parent=0 // pred_check
    _
  $region11: #{convnet_forward.7} parent=0 // pred_check_branch
    %13 = sbr.rel (0) target = $region13
  $region12: #{convnet_forward.7} parent=0 // pred_region
    _
  $region13: #{convnet_forward.7} parent=0 // pred_fallthru
    _
  %v15 = vld [vmem:[%s0] sm:$0xff]
  %v16 = vld [vmem:[%s0 + $0x8] sm:$0xff]
  %v17 = vld [vmem:[%s0 + $0x10] sm:$0xff]
  %v18 = vld [vmem:[%s0 + $0x18] sm:$0xff]
  %v19 = vld [vmem:[%s0 + $0x20] sm:$0xff]
  %v20 = vld [vmem:[%s0 + $0x28] sm:$0xff]
  %v21 = vld [vmem:[%s0 + $0x30] sm:$0xff]
  %v22 = vld [vmem:[%s0 + $0x38] sm:$0xff]
  %v23 = vld [vmem:[%s0 + $0x40] sm:$0xff]
  %v24 = vld [vmem:[%s0 + $0x48] sm:$0xff]
  %v25 = vld [vmem:[%s0 + $0x50] sm:$0xff]
  %v26 = vld [vmem:[%s0 + $0x58] sm:$0xff]
  %v27 = vld [vmem:[%s0 + $0x60] sm:$0xff]
  %v28 = vld [vmem:[%s0 + $0x68] sm:$0xff]
  %v29 = vld [vmem:[%s0 + $0x70] sm:$0xff]
  %v30 = vld [vmem:[%s0 + $0x78] sm:$0xff]
  %v31 = vld [vmem:[%s0 + $0x80] sm:$0xff]
  %v32 = vld [vmem:[%s0 + $0x88] sm:$0xff]
  %v33 = vld [vmem:[%s0 + $0x90] sm:$0xff]
  %v34 = vld [vmem:[%s0 + $0x98] sm:$0xff]
  %v35 = vld [vmem:[%s0 + $0xa0] sm:$0xff]
  %v36 = vld [vmem:[%s0 + $0xa8] sm:$0xff]
  %v37 = vld [vmem:[%s0 + $0xb0] sm:$0xff]
  %v38 = vld [vmem:[%s0 + $0xb8] sm:$0xff]
  %v39 = vld [vmem:[%s0 + $0xc0] sm:$0xff]
  %v40 = vld [vmem:[%s1] sm:$0xf]
  %v41 = vld [vmem:[%s1 + $0x4] sm:$0xf]
  %v42 = vld [vmem:[%s1 + $0x8] sm:$0xf]
  %v43 = vld [vmem:[%s1 + $0xc] sm:$0xf]
  %v44 = vld [vmem:[%s1 + $0x10] sm:$0xf]
  %v45 = vld [vmem:[%s1 + $0x14] sm:$0xf]
  %v46 = vld [vmem:[%s1 + $0x18] sm:$0xf]
  %v47 = vld [vmem:[%s1 + $0x1c] sm:$0xf]
  %v48 = vld [vmem:[%s1 + $0x20] sm:$0xf]
  %v49 = vld [vmem:[%s1 + $0x24] sm:$0xf]
  %v50 = vld [vmem:[%s1 + $0x28] sm:$0xf]
  %v51 = vld [vmem:[%s1 + $0x2c] sm:$0xf]
  %v52 = vld [vmem:[%s1 + $0x30] sm:$0xf]
  %v53 = vld [vmem:[%s1 + $0x34] sm:$0xf]
  %v54 = vld [vmem:[%s1 + $0x38] sm:$0xf]
  %v55 = vld [vmem:[%s1 + $0x3c] sm:$0xf]
  %v56 = vld [vmem:[%s1 + $0x40] sm:$0xf]
  %v57 = vld [vmem:[%s1 + $0x44] sm:$0xf]
  %v58 = vld [vmem:[%s1 + $0x48] sm:$0x7]
  %v59 = vld [vmem:[%s2] sm:$0x1]
  %v61 = vlaneseq
  %v62 = vshrl.u32 %v61, 7
  %v63 = vsub.s32 0, %v62
  %v64 = vrot.slane %v59, %v63
  %v91 = vunpack.c.l.b16 %v15
  %v92 = vunpack.c.h.b16 %v15
  %v93 = vunpack.c.l.b16 %v16
  %v94 = vunpack.c.h.b16 %v16
  %v95 = vunpack.c.l.b16 %v17
  %v96 = vunpack.c.h.b16 %v17
  %v97 = vunpack.c.l.b16 %v18
  %v98 = vunpack.c.h.b16 %v18
  %v99 = vunpack.c.l.b16 %v19
  %v100 = vunpack.c.h.b16 %v19
  %v101 = vunpack.c.l.b16 %v20
  %v102 = vunpack.c.h.b16 %v20
  %v103 = vunpack.c.l.b16 %v21
  %v104 = vunpack.c.h.b16 %v21
  %v105 = vunpack.c.l.b16 %v22
  %v106 = vunpack.c.h.b16 %v22
  %v107 = vunpack.c.l.b16 %v23
  %v108 = vunpack.c.h.b16 %v23
  %v109 = vunpack.c.l.b16 %v24
  %v110 = vunpack.c.h.b16 %v24
  %v111 = vunpack.c.l.b16 %v25
  %v112 = vunpack.c.h.b16 %v25
  %v113 = vunpack.c.l.b16 %v26
  %v114 = vunpack.c.h.b16 %v26
  %v115 = vunpack.c.l.b16 %v27
  %v116 = vunpack.c.h.b16 %v27
  %v117 = vunpack.c.l.b16 %v28
  %v118 = vunpack.c.h.b16 %v28
  %v119 = vunpack.c.l.b16 %v29
  %v120 = vunpack.c.h.b16 %v29
  %v121 = vunpack.c.l.b16 %v30
  %v122 = vunpack.c.h.b16 %v30
  %v123 = vunpack.c.l.b16 %v31
  %v124 = vunpack.c.h.b16 %v31
  %v125 = vunpack.c.l.b16 %v32
  %v126 = vunpack.c.h.b16 %v32
  %v127 = vunpack.c.l.b16 %v33
  %v128 = vunpack.c.h.b16 %v33
  %v129 = vunpack.c.l.b16 %v34
  %v130 = vunpack.c.h.b16 %v34
  %v131 = vunpack.c.l.b16 %v35
  %v132 = vunpack.c.h.b16 %v35
  %v133 = vunpack.c.l.b16 %v36
  %v134 = vunpack.c.h.b16 %v36
  %v135 = vunpack.c.l.b16 %v37
  %v136 = vunpack.c.h.b16 %v37
  %v137 = vunpack.c.l.b16 %v38
  %v138 = vunpack.c.h.b16 %v38
  %v139 = vunpack.c.l.b16 %v39
  %v140 = vunpack.c.h.b16 %v39
  %v141 = vpack.c.b16 %v93, %v91
  %v142 = vpack.c.b16 %v94, %v92
  %v143 = vpack.c.b16 %v97, %v95
  %v144 = vpack.c.b16 %v98, %v96
  %v145 = vpack.c.b16 %v101, %v99
  %v146 = vpack.c.b16 %v102, %v100
  %v147 = vpack.c.b16 %v105, %v103
  %v148 = vpack.c.b16 %v106, %v104
  %v149 = vpack.c.b16 %v109, %v107
  %v150 = vpack.c.b16 %v110, %v108
  %v151 = vpack.c.b16 %v113, %v111
  %v152 = vpack.c.b16 %v114, %v112
  %v153 = vpack.c.b16 %v117, %v115
  %v154 = vpack.c.b16 %v118, %v116
  %v155 = vpack.c.b16 %v121, %v119
  %v156 = vpack.c.b16 %v122, %v120
  %v157 = vpack.c.b16 %v125, %v123
  %v158 = vpack.c.b16 %v126, %v124
  %v159 = vpack.c.b16 %v129, %v127
  %v160 = vpack.c.b16 %v130, %v128
  %v161 = vpack.c.b16 %v133, %v131
  %v162 = vpack.c.b16 %v134, %v132
  %v163 = vpack.c.b16 %v137, %v135
  %v164 = vpack.c.b16 %v138, %v136
  %v165 = vpack.c.b16 %v139, %v139
  %v166 = vpack.c.b16 %v140, %v140
  %v199 = vunpack.c.l.b16 %v40
  %v200 = vunpack.c.l.b16 %v41
  %v201 = vunpack.c.l.b16 %v42
  %v202 = vunpack.c.l.b16 %v43
  %v203 = vunpack.c.l.b16 %v44
  %v204 = vunpack.c.l.b16 %v45
  %v205 = vunpack.c.l.b16 %v46
  %v206 = vunpack.c.l.b16 %v47
  %v207 = vunpack.c.l.b16 %v48
  %v208 = vunpack.c.l.b16 %v49
  %v209 = vunpack.c.l.b16 %v50
  %v210 = vunpack.c.l.b16 %v51
  %v211 = vunpack.c.l.b16 %v52
  %v212 = vunpack.c.l.b16 %v53
  %v213 = vunpack.c.l.b16 %v54
  %v214 = vunpack.c.l.b16 %v55
  %v215 = vunpack.c.l.b16 %v56
  %v216 = vunpack.c.l.b16 %v57
  %v217 = vunpack.c.l.b16 %v58
  %v218 = vpack.c.b16 %v200, %v199
  %v219 = vpack.c.b16 %v202, %v201
  %v220 = vpack.c.b16 %v204, %v203
  %v221 = vpack.c.b16 %v206, %v205
  %v222 = vpack.c.b16 %v208, %v207
  %v223 = vpack.c.b16 %v210, %v209
  %v224 = vpack.c.b16 %v212, %v211
  %v225 = vpack.c.b16 %v214, %v213
  %v226 = vpack.c.b16 %v216, %v215
  %v227 = vpack.c.b16 %v217, %v217
  %vm237 = vcmask 179200
  %v239 = vsel %vm237, %v142, 0
  %v242 = vsel %vm237, %v144, 0
  %v245 = vsel %vm237, %v146, 0
  %v248 = vsel %vm237, %v148, 0
  %v251 = vsel %vm237, %v150, 0
  %v254 = vsel %vm237, %v152, 0
  %v257 = vsel %vm237, %v154, 0
  %v260 = vsel %vm237, %v156, 0
  %v263 = vsel %vm237, %v158, 0
  %v266 = vsel %vm237, %v160, 0
  %v269 = vsel %vm237, %v162, 0
  %v272 = vsel %vm237, %v164, 0
  %v275 = vsel %vm237, %v166, 0
  %vm277 = vcmask 1042432
  %v279 = vsel %vm277, %v227, 0
  %281 = vmatprep.subr.bf16.mxu0 0
  %282 = vmatpush1.bf16.msra.mxu0 %v225
  %283 = vmatprep.subr.bf16.mxu0 0
  %284 = vmatpush1.bf16.msra.mxu0 %v224
  %285 = vmatprep.subr.bf16.mxu0 0
  %286 = vmatpush1.bf16.msra.mxu0 %v223
  %287 = vmatprep.subr.bf16.mxu0 0
  %288 = vmatpush1.bf16.msra.mxu0 %v222
  %289 = vmatprep.subr.bf16.mxu0 0
  %290 = vmatpush1.bf16.msra.mxu0 %v221
  %291 = vmatprep.subr.bf16.mxu0 0
  %292 = vmatpush1.bf16.msra.mxu0 %v220
  %293 = vmatprep.subr.bf16.mxu0 0
  %294 = vmatpush1.bf16.msra.mxu0 %v219
  %295 = vmatprep.subr.bf16.mxu0 0
  %296 = vmatpush1.bf16.msra.mxu0 %v218
  %297 = vmatprep.subr.bf16.mxu0 0
  %298 = vmatpush2.bf16.msra.mxu0 0
  %299 = vmatprep.subr.bf16.mxu0 0
  %300 = vmatpush2.bf16.msra.mxu0 0
  %301 = vmatprep.subr.bf16.mxu0 0
  %302 = vmatpush2.bf16.msra.mxu0 0
  %303 = vmatprep.subr.bf16.mxu0 0
  %304 = vmatpush2.bf16.msra.mxu0 0
  %305 = vmatprep.subr.bf16.mxu0 0
  %306 = vmatpush2.bf16.msra.mxu0 0
  %307 = vmatprep.subr.bf16.mxu0 0
  %308 = vmatpush2.bf16.msra.mxu0 0
  %309 = vmatprep.subr.bf16.mxu0 0
  %310 = vmatpush2.bf16.msra.mxu0 %v279
  %311 = vmatprep.subr.bf16.mxu0 0
  %312 = vmatpush2.bf16.msra.mxu0 %v226
  %313 = vmatprep.mubr.bf16.mxu0 %v239
  %314 = vmatmul.mubr.bf16.gmra.mxu0 %v141
  %v315 = vpop.f32.mrf.mxu0
  %v316 = vadd.f32 %v64, %v315
  %v317 = vpop.f32.mrf.mxu0
  %v318 = vpop.f32.mrf.mxu0
  %v319 = vadd.f32 %v64, %v318
  %v320 = vpop.f32.mrf.mxu0
  %321 = vmatprep.mubr.bf16.mxu0 %v242
  %322 = vmatmul.mubr.bf16.gmra.mxu0 %v143
  %v323 = vpop.f32.mrf.mxu0
  %v324 = vadd.f32 %v64, %v323
  %v325 = vpop.f32.mrf.mxu0
  %v326 = vpop.f32.mrf.mxu0
  %v327 = vadd.f32 %v64, %v326
  %v328 = vpop.f32.mrf.mxu0
  %329 = vmatprep.mubr.bf16.mxu0 %v245
  %330 = vmatmul.mubr.bf16.gmra.mxu0 %v145
  %v331 = vpop.f32.mrf.mxu0
  %v332 = vadd.f32 %v64, %v331
  %v333 = vpop.f32.mrf.mxu0
  %v334 = vpop.f32.mrf.mxu0
  %v335 = vadd.f32 %v64, %v334
  %v336 = vpop.f32.mrf.mxu0
  %337 = vmatprep.mubr.bf16.mxu0 %v248
  %338 = vmatmul.mubr.bf16.gmra.mxu0 %v147
  %v339 = vpop.f32.mrf.mxu0
  %v340 = vadd.f32 %v64, %v339
  %v341 = vpop.f32.mrf.mxu0
  %v342 = vpop.f32.mrf.mxu0
  %v343 = vadd.f32 %v64, %v342
  %v344 = vpop.f32.mrf.mxu0
  %345 = vmatprep.mubr.bf16.mxu0 %v251
  %346 = vmatmul.mubr.bf16.gmra.mxu0 %v149
  %v347 = vpop.f32.mrf.mxu0
  %v348 = vadd.f32 %v64, %v347
  %v349 = vpop.f32.mrf.mxu0
  %v350 = vpop.f32.mrf.mxu0
  %v351 = vadd.f32 %v64, %v350
  %v352 = vpop.f32.mrf.mxu0
  %353 = vmatprep.mubr.bf16.mxu0 %v254
  %354 = vmatmul.mubr.bf16.gmra.mxu0 %v151
  %v355 = vpop.f32.mrf.mxu0
  %v356 = vadd.f32 %v64, %v355
  %v357 = vpop.f32.mrf.mxu0
  %v358 = vpop.f32.mrf.mxu0
  %v359 = vadd.f32 %v64, %v358
  %v360 = vpop.f32.mrf.mxu0
  %361 = vmatprep.mubr.bf16.mxu0 %v257
  %362 = vmatmul.mubr.bf16.gmra.mxu0 %v153
  %v363 = vpop.f32.mrf.mxu0
  %v364 = vadd.f32 %v64, %v363
  %v365 = vpop.f32.mrf.mxu0
  %v366 = vpop.f32.mrf.mxu0
  %v367 = vadd.f32 %v64, %v366
  %v368 = vpop.f32.mrf.mxu0
  %369 = vmatprep.mubr.bf16.mxu0 %v260
  %370 = vmatmul.mubr.bf16.gmra.mxu0 %v155
  %v371 = vpop.f32.mrf.mxu0
  %v372 = vadd.f32 %v64, %v371
  %v373 = vpop.f32.mrf.mxu0
  %v374 = vpop.f32.mrf.mxu0
  %v375 = vadd.f32 %v64, %v374
  %v376 = vpop.f32.mrf.mxu0
  %377 = vmatprep.mubr.bf16.mxu0 %v263
  %378 = vmatmul.mubr.bf16.gmra.mxu0 %v157
  %v379 = vpop.f32.mrf.mxu0
  %v380 = vadd.f32 %v64, %v379
  %v381 = vpop.f32.mrf.mxu0
  %v382 = vpop.f32.mrf.mxu0
  %v383 = vadd.f32 %v64, %v382
  %v384 = vpop.f32.mrf.mxu0
  %385 = vmatprep.mubr.bf16.mxu0 %v266
  %386 = vmatmul.mubr.bf16.gmra.mxu0 %v159
  %v387 = vpop.f32.mrf.mxu0
  %v388 = vadd.f32 %v64, %v387
  %v389 = vpop.f32.mrf.mxu0
  %v390 = vpop.f32.mrf.mxu0
  %v391 = vadd.f32 %v64, %v390
  %v392 = vpop.f32.mrf.mxu0
  %393 = vmatprep.mubr.bf16.mxu0 %v269
  %394 = vmatmul.mubr.bf16.gmra.mxu0 %v161
  %v395 = vpop.f32.mrf.mxu0
  %v396 = vadd.f32 %v64, %v395
  %v397 = vpop.f32.mrf.mxu0
  %v398 = vpop.f32.mrf.mxu0
  %v399 = vadd.f32 %v64, %v398
  %v400 = vpop.f32.mrf.mxu0
  %401 = vmatprep.mubr.bf16.mxu0 %v272
  %402 = vmatmul.mubr.bf16.gmra.mxu0 %v163
  %v403 = vpop.f32.mrf.mxu0
  %v404 = vadd.f32 %v64, %v403
  %v405 = vpop.f32.mrf.mxu0
  %v406 = vpop.f32.mrf.mxu0
  %v407 = vadd.f32 %v64, %v406
  %v408 = vpop.f32.mrf.mxu0
  %409 = vmatprep.mubr.bf16.mxu0 %v275
  %410 = vmatmul.mubr.bf16.gmra.mxu0 %v165
  %v411 = vpop.f32.mrf.mxu0
  %v412 = vadd.f32 %v64, %v411
  %v413 = vpop.f32.mrf.mxu0
  %v414 = vpop.f32.mrf.mxu0
  %v415 = vpop.f32.mrf.mxu0
  %416 = vdwg.mxu0
  %v417 = vmax.f32 %v316, 0.0
  %v418 = vmax.f32 %v319, 0.0
  %v419 = vmax.f32 %v324, 0.0
  %v420 = vmax.f32 %v327, 0.0
  %v421 = vmax.f32 %v332, 0.0
  %v422 = vmax.f32 %v335, 0.0
  %v423 = vmax.f32 %v340, 0.0
  %v424 = vmax.f32 %v343, 0.0
  %v425 = vmax.f32 %v348, 0.0
  %v426 = vmax.f32 %v351, 0.0
  %v427 = vmax.f32 %v356, 0.0
  %v428 = vmax.f32 %v359, 0.0
  %v429 = vmax.f32 %v364, 0.0
  %v430 = vmax.f32 %v367, 0.0
  %v431 = vmax.f32 %v372, 0.0
  %v432 = vmax.f32 %v375, 0.0
  %v433 = vmax.f32 %v380, 0.0
  %v434 = vmax.f32 %v383, 0.0
  %v435 = vmax.f32 %v388, 0.0
  %v436 = vmax.f32 %v391, 0.0
  %v437 = vmax.f32 %v396, 0.0
  %v438 = vmax.f32 %v399, 0.0
  %v439 = vmax.f32 %v404, 0.0
  %v440 = vmax.f32 %v407, 0.0
  %v441 = vmax.f32 %v412, 0.0
  %442 = vst [vmem:[%s3] sm:$0xff] %v417
  %443 = vst [vmem:[%s3 + $0x8] sm:$0xff] %v418
  %444 = vst [vmem:[%s3 + $0x10] sm:$0xff] %v419
  %445 = vst [vmem:[%s3 + $0x18] sm:$0xff] %v420
  %446 = vst [vmem:[%s3 + $0x20] sm:$0xff] %v421
  %447 = vst [vmem:[%s3 + $0x28] sm:$0xff] %v422
  %448 = vst [vmem:[%s3 + $0x30] sm:$0xff] %v423
  %449 = vst [vmem:[%s3 + $0x38] sm:$0xff] %v424
  %450 = vst [vmem:[%s3 + $0x40] sm:$0xff] %v425
  %451 = vst [vmem:[%s3 + $0x48] sm:$0xff] %v426
  %452 = vst [vmem:[%s3 + $0x50] sm:$0xff] %v427
  %453 = vst [vmem:[%s3 + $0x58] sm:$0xff] %v428
  %454 = vst [vmem:[%s3 + $0x60] sm:$0xff] %v429
  %455 = vst [vmem:[%s3 + $0x68] sm:$0xff] %v430
  %456 = vst [vmem:[%s3 + $0x70] sm:$0xff] %v431
  %457 = vst [vmem:[%s3 + $0x78] sm:$0xff] %v432
  %458 = vst [vmem:[%s3 + $0x80] sm:$0xff] %v433
  %459 = vst [vmem:[%s3 + $0x88] sm:$0xff] %v434
  %460 = vst [vmem:[%s3 + $0x90] sm:$0xff] %v435
  %461 = vst [vmem:[%s3 + $0x98] sm:$0xff] %v436
  %462 = vst [vmem:[%s3 + $0xa0] sm:$0xff] %v437
  %463 = vst [vmem:[%s3 + $0xa8] sm:$0xff] %v438
  %464 = vst [vmem:[%s3 + $0xb0] sm:$0xff] %v439
  %465 = vst [vmem:[%s3 + $0xb8] sm:$0xff] %v440
  %466 = vst [vmem:[%s3 + $0xc0] sm:$0xff] %v441
  // Predicated region
  $region14: #{convnet_forward.7} parent=0 // pred_check
    _
  $region15: #{convnet_forward.7} parent=0 // pred_check_branch
    %468 = sbr.rel (0) target = $region17
  $region16: #{convnet_forward.7} parent=0 // pred_region
    _
  $region17: #{convnet_forward.7} parent=0 // pred_fallthru
    _
  // Predicated region
  $region18: #{convnet_forward.7} parent=0 // pred_check
    _
  $region19: #{convnet_forward.7} parent=0 // pred_check_branch
    %470 = sbr.rel (0) target = $region21
  $region20: #{convnet_forward.7} parent=0 // pred_region
    _
  $region21: #{convnet_forward.7} parent=0 // pred_fallthru
    _

// kernel: convnet_forward.8
$region0: #{convnet_forward.8}
  #allocation0 [shape = 'u32[]', space=smem, size = 0x4, offset = 0x4, fixed_abs, tag = 'smem constant byte address 0x4 - core index']
  #allocation1 [shape = 'u32[144,128]{1,0:T(1,128)}', space=vmem, size = 0x12000, scoped, tag = 'internal scratch']
  %s0 = inlined_call_operand.vmem [shape: f32[56,4,128], index: 0, kind: input, shape index: {}]
  %s1 = inlined_call_operand.vmem [shape: f32[56,128], index: 1, kind: output, shape index: {}]
  %s2 = sld [smem:[#allocation0]]
  $region14: #{convnet_forward.8} parent=0
    _
  %s4 = ssub.s32 1, %s2
  %s5 = scalar_select 0, %s4, %s2
  // Predicated region
  $region2: #{convnet_forward.8} parent=0 // pred_check
    _
  $region3: #{convnet_forward.8} parent=0 // pred_check_branch
    %7 = sbr.rel (0) target = $region5
  $region4: #{convnet_forward.8} parent=0 // pred_region
    _
  $region5: #{convnet_forward.8} parent=0 // pred_fallthru
    _
  %v8 = vld [vmem:[%s0] sm:$0xf]
  %v9 = vld [vmem:[%s0 + $0x4] sm:$0xf]
  %v10 = vld [vmem:[%s0 + $0x8] sm:$0xf]
  %v11 = vld [vmem:[%s0 + $0xc] sm:$0xf]
  %v12 = vld [vmem:[%s0 + $0x10] sm:$0xf]
  %v13 = vld [vmem:[%s0 + $0x14] sm:$0xf]
  %v14 = vld [vmem:[%s0 + $0x18] sm:$0xf]
  %v15 = vld [vmem:[%s0 + $0x1c] sm:$0xf]
  %v16 = vld [vmem:[%s0 + $0x20] sm:$0xf]
  %v17 = vld [vmem:[%s0 + $0x24] sm:$0xf]
  %v18 = vld [vmem:[%s0 + $0x28] sm:$0xf]
  %v19 = vld [vmem:[%s0 + $0x2c] sm:$0xf]
  %v20 = vld [vmem:[%s0 + $0x30] sm:$0xf]
  %v21 = vld [vmem:[%s0 + $0x34] sm:$0xf]
  %v22 = vld [vmem:[%s0 + $0x38] sm:$0xf]
  %v23 = vld [vmem:[%s0 + $0x3c] sm:$0xf]
  %v24 = vld [vmem:[%s0 + $0x40] sm:$0xf]
  %v25 = vld [vmem:[%s0 + $0x44] sm:$0xf]
  %v26 = vld [vmem:[%s0 + $0x48] sm:$0xf]
  %v27 = vld [vmem:[%s0 + $0x4c] sm:$0xf]
  %v28 = vld [vmem:[%s0 + $0x50] sm:$0xf]
  %v29 = vld [vmem:[%s0 + $0x54] sm:$0xf]
  %v30 = vld [vmem:[%s0 + $0x58] sm:$0xf]
  %v31 = vld [vmem:[%s0 + $0x5c] sm:$0xf]
  %v32 = vld [vmem:[%s0 + $0x60] sm:$0xf]
  %v33 = vld [vmem:[%s0 + $0x64] sm:$0xf]
  %v34 = vld [vmem:[%s0 + $0x68] sm:$0xf]
  %v35 = vld [vmem:[%s0 + $0x6c] sm:$0xf]
  %v36 = vld [vmem:[%s0 + $0x70] sm:$0xf]
  %v37 = vld [vmem:[%s0 + $0x74] sm:$0xf]
  %v38 = vld [vmem:[%s0 + $0x78] sm:$0xf]
  %v39 = vld [vmem:[%s0 + $0x7c] sm:$0xf]
  %v40 = vld [vmem:[%s0 + $0x80] sm:$0xf]
  %v41 = vld [vmem:[%s0 + $0x84] sm:$0xf]
  %v42 = vld [vmem:[%s0 + $0x88] sm:$0xf]
  %v43 = vld [vmem:[%s0 + $0x8c] sm:$0xf]
  %v44 = vld [vmem:[%s0 + $0x90] sm:$0xf]
  %v45 = vld [vmem:[%s0 + $0x94] sm:$0xf]
  %v46 = vld [vmem:[%s0 + $0x98] sm:$0xf]
  %v47 = vld [vmem:[%s0 + $0x9c] sm:$0xf]
  %v48 = vld [vmem:[%s0 + $0xa0] sm:$0xf]
  %v49 = vld [vmem:[%s0 + $0xa4] sm:$0xf]
  %v50 = vld [vmem:[%s0 + $0xa8] sm:$0xf]
  %v51 = vld [vmem:[%s0 + $0xac] sm:$0xf]
  %v52 = vld [vmem:[%s0 + $0xb0] sm:$0xf]
  %v53 = vld [vmem:[%s0 + $0xb4] sm:$0xf]
  %v54 = vld [vmem:[%s0 + $0xb8] sm:$0xf]
  %v55 = vld [vmem:[%s0 + $0xbc] sm:$0xf]
  %v56 = vld [vmem:[%s0 + $0xc0] sm:$0xf]
  %v57 = vld [vmem:[%s0 + $0xc4] sm:$0xf]
  %v58 = vld [vmem:[%s0 + $0xc8] sm:$0xf]
  %v59 = vld [vmem:[%s0 + $0xcc] sm:$0xf]
  %v60 = vld [vmem:[%s0 + $0xd0] sm:$0xf]
  %v61 = vld [vmem:[%s0 + $0xd4] sm:$0xf]
  %v62 = vld [vmem:[%s0 + $0xd8] sm:$0xf]
  %v63 = vld [vmem:[%s0 + $0xdc] sm:$0xf]
  %vm64 = vcmask 1043456
  %v65 = vsel %vm64, %v8, -inf
  %v66 = vrot.slane %v65, 4
  %v67 = vmax.f32 %v65, %v66
  %v68 = vrot.slane %v67, 2
  %v69 = vmax.f32 %v67, %v68
  %v70 = vrot.slane %v69, 1
  %v71 = vmax.f32 %v69, %v70
  %v72 = vsel %vm64, %v9, -inf
  %v73 = vrot.slane %v72, 4
  %v74 = vmax.f32 %v72, %v73
  %v75 = vrot.slane %v74, 2
  %v76 = vmax.f32 %v74, %v75
  %v77 = vrot.slane %v76, 1
  %v78 = vmax.f32 %v76, %v77
  %v79 = vsel %vm64, %v10, -inf
  %v80 = vrot.slane %v79, 4
  %v81 = vmax.f32 %v79, %v80
  %v82 = vrot.slane %v81, 2
  %v83 = vmax.f32 %v81, %v82
  %v84 = vrot.slane %v83, 1
  %v85 = vmax.f32 %v83, %v84
  %v86 = vsel %vm64, %v11, -inf
  %v87 = vrot.slane %v86, 4
  %v88 = vmax.f32 %v86, %v87
  %v89 = vrot.slane %v88, 2
  %v90 = vmax.f32 %v88, %v89
  %v91 = vrot.slane %v90, 1
  %v92 = vmax.f32 %v90, %v91
  %v93 = vsel %vm64, %v12, -inf
  %v94 = vrot.slane %v93, 4
  %v95 = vmax.f32 %v93, %v94
  %v96 = vrot.slane %v95, 2
  %v97 = vmax.f32 %v95, %v96
  %v98 = vrot.slane %v97, 1
  %v99 = vmax.f32 %v97, %v98
  %v100 = vsel %vm64, %v13, -inf
  %v101 = vrot.slane %v100, 4
  %v102 = vmax.f32 %v100, %v101
  %v103 = vrot.slane %v102, 2
  %v104 = vmax.f32 %v102, %v103
  %v105 = vrot.slane %v104, 1
  %v106 = vmax.f32 %v104, %v105
  %v107 = vsel %vm64, %v14, -inf
  %v108 = vrot.slane %v107, 4
  %v109 = vmax.f32 %v107, %v108
  %v110 = vrot.slane %v109, 2
  %v111 = vmax.f32 %v109, %v110
  %v112 = vrot.slane %v111, 1
  %v113 = vmax.f32 %v111, %v112
  %v114 = vsel %vm64, %v15, -inf
  %v115 = vrot.slane %v114, 4
  %v116 = vmax.f32 %v114, %v115
  %v117 = vrot.slane %v116, 2
  %v118 = vmax.f32 %v116, %v117
  %v119 = vrot.slane %v118, 1
  %v120 = vmax.f32 %v118, %v119
  %v121 = vsel %vm64, %v16, -inf
  %v122 = vrot.slane %v121, 4
  %v123 = vmax.f32 %v121, %v122
  %v124 = vrot.slane %v123, 2
  %v125 = vmax.f32 %v123, %v124
  %v126 = vrot.slane %v125, 1
  %v127 = vmax.f32 %v125, %v126
  %v128 = vsel %vm64, %v17, -inf
  %v129 = vrot.slane %v128, 4
  %v130 = vmax.f32 %v128, %v129
  %v131 = vrot.slane %v130, 2
  %v132 = vmax.f32 %v130, %v131
  %v133 = vrot.slane %v132, 1
  %v134 = vmax.f32 %v132, %v133
  %v135 = vsel %vm64, %v18, -inf
  %v136 = vrot.slane %v135, 4
  %v137 = vmax.f32 %v135, %v136
  %v138 = vrot.slane %v137, 2
  %v139 = vmax.f32 %v137, %v138
  %v140 = vrot.slane %v139, 1
  %v141 = vmax.f32 %v139, %v140
  %v142 = vsel %vm64, %v19, -inf
  %v143 = vrot.slane %v142, 4
  %v144 = vmax.f32 %v142, %v143
  %v145 = vrot.slane %v144, 2
  %v146 = vmax.f32 %v144, %v145
  %v147 = vrot.slane %v146, 1
  %v148 = vmax.f32 %v146, %v147
  %v149 = vsel %vm64, %v20, -inf
  %v150 = vrot.slane %v149, 4
  %v151 = vmax.f32 %v149, %v150
  %v152 = vrot.slane %v151, 2
  %v153 = vmax.f32 %v151, %v152
  %v154 = vrot.slane %v153, 1
  %v155 = vmax.f32 %v153, %v154
  %v156 = vsel %vm64, %v21, -inf
  %v157 = vrot.slane %v156, 4
  %v158 = vmax.f32 %v156, %v157
  %v159 = vrot.slane %v158, 2
  %v160 = vmax.f32 %v158, %v159
  %v161 = vrot.slane %v160, 1
  %v162 = vmax.f32 %v160, %v161
  %v163 = vsel %vm64, %v22, -inf
  %v164 = vrot.slane %v163, 4
  %v165 = vmax.f32 %v163, %v164
  %v166 = vrot.slane %v165, 2
  %v167 = vmax.f32 %v165, %v166
  %v168 = vrot.slane %v167, 1
  %v169 = vmax.f32 %v167, %v168
  %v170 = vsel %vm64, %v23, -inf
  %v171 = vrot.slane %v170, 4
  %v172 = vmax.f32 %v170, %v171
  %v173 = vrot.slane %v172, 2
  %v174 = vmax.f32 %v172, %v173
  %v175 = vrot.slane %v174, 1
  %v176 = vmax.f32 %v174, %v175
  %v177 = vsel %vm64, %v24, -inf
  %v178 = vrot.slane %v177, 4
  %v179 = vmax.f32 %v177, %v178
  %v180 = vrot.slane %v179, 2
  %v181 = vmax.f32 %v179, %v180
  %v182 = vrot.slane %v181, 1
  %v183 = vmax.f32 %v181, %v182
  %v184 = vsel %vm64, %v25, -inf
  %v185 = vrot.slane %v184, 4
  %v186 = vmax.f32 %v184, %v185
  %v187 = vrot.slane %v186, 2
  %v188 = vmax.f32 %v186, %v187
  %v189 = vrot.slane %v188, 1
  %v190 = vmax.f32 %v188, %v189
  %v191 = vsel %vm64, %v26, -inf
  %v192 = vrot.slane %v191, 4
  %v193 = vmax.f32 %v191, %v192
  %v194 = vrot.slane %v193, 2
  %v195 = vmax.f32 %v193, %v194
  %v196 = vrot.slane %v195, 1
  %v197 = vmax.f32 %v195, %v196
  %v198 = vsel %vm64, %v27, -inf
  %v199 = vrot.slane %v198, 4
  %v200 = vmax.f32 %v198, %v199
  %v201 = vrot.slane %v200, 2
  %v202 = vmax.f32 %v200, %v201
  %v203 = vrot.slane %v202, 1
  %v204 = vmax.f32 %v202, %v203
  %v205 = vsel %vm64, %v28, -inf
  %v206 = vrot.slane %v205, 4
  %v207 = vmax.f32 %v205, %v206
  %v208 = vrot.slane %v207, 2
  %v209 = vmax.f32 %v207, %v208
  %v210 = vrot.slane %v209, 1
  %v211 = vmax.f32 %v209, %v210
  %v212 = vsel %vm64, %v29, -inf
  %v213 = vrot.slane %v212, 4
  %v214 = vmax.f32 %v212, %v213
  %v215 = vrot.slane %v214, 2
  %v216 = vmax.f32 %v214, %v215
  %v217 = vrot.slane %v216, 1
  %v218 = vmax.f32 %v216, %v217
  %v219 = vsel %vm64, %v30, -inf
  %v220 = vrot.slane %v219, 4
  %v221 = vmax.f32 %v219, %v220
  %v222 = vrot.slane %v221, 2
  %v223 = vmax.f32 %v221, %v222
  %v224 = vrot.slane %v223, 1
  %v225 = vmax.f32 %v223, %v224
  %v226 = vsel %vm64, %v31, -inf
  %v227 = vrot.slane %v226, 4
  %v228 = vmax.f32 %v226, %v227
  %v229 = vrot.slane %v228, 2
  %v230 = vmax.f32 %v228, %v229
  %v231 = vrot.slane %v230, 1
  %v232 = vmax.f32 %v230, %v231
  %v233 = vsel %vm64, %v32, -inf
  %v234 = vrot.slane %v233, 4
  %v235 = vmax.f32 %v233, %v234
  %v236 = vrot.slane %v235, 2
  %v237 = vmax.f32 %v235, %v236
  %v238 = vrot.slane %v237, 1
  %v239 = vmax.f32 %v237, %v238
  %v240 = vsel %vm64, %v33, -inf
  %v241 = vrot.slane %v240, 4
  %v242 = vmax.f32 %v240, %v241
  %v243 = vrot.slane %v242, 2
  %v244 = vmax.f32 %v242, %v243
  %v245 = vrot.slane %v244, 1
  %v246 = vmax.f32 %v244, %v245
  %v247 = vsel %vm64, %v34, -inf
  %v248 = vrot.slane %v247, 4
  %v249 = vmax.f32 %v247, %v248
  %v250 = vrot.slane %v249, 2
  %v251 = vmax.f32 %v249, %v250
  %v252 = vrot.slane %v251, 1
  %v253 = vmax.f32 %v251, %v252
  %v254 = vsel %vm64, %v35, -inf
  %v255 = vrot.slane %v254, 4
  %v256 = vmax.f32 %v254, %v255
  %v257 = vrot.slane %v256, 2
  %v258 = vmax.f32 %v256, %v257
  %v259 = vrot.slane %v258, 1
  %v260 = vmax.f32 %v258, %v259
  %v261 = vsel %vm64, %v36, -inf
  %v262 = vrot.slane %v261, 4
  %v263 = vmax.f32 %v261, %v262
  %v264 = vrot.slane %v263, 2
  %v265 = vmax.f32 %v263, %v264
  %v266 = vrot.slane %v265, 1
  %v267 = vmax.f32 %v265, %v266
  %v268 = vsel %vm64, %v37, -inf
  %v269 = vrot.slane %v268, 4
  %v270 = vmax.f32 %v268, %v269
  %v271 = vrot.slane %v270, 2
  %v272 = vmax.f32 %v270, %v271
  %v273 = vrot.slane %v272, 1
  %v274 = vmax.f32 %v272, %v273
  %v275 = vsel %vm64, %v38, -inf
  %v276 = vrot.slane %v275, 4
  %v277 = vmax.f32 %v275, %v276
  %v278 = vrot.slane %v277, 2
  %v279 = vmax.f32 %v277, %v278
  %v280 = vrot.slane %v279, 1
  %v281 = vmax.f32 %v279, %v280
  %v282 = vsel %vm64, %v39, -inf
  %v283 = vrot.slane %v282, 4
  %v284 = vmax.f32 %v282, %v283
  %v285 = vrot.slane %v284, 2
  %v286 = vmax.f32 %v284, %v285
  %v287 = vrot.slane %v286, 1
  %v288 = vmax.f32 %v286, %v287
  %v289 = vsel %vm64, %v40, -inf
  %v290 = vrot.slane %v289, 4
  %v291 = vmax.f32 %v289, %v290
  %v292 = vrot.slane %v291, 2
  %v293 = vmax.f32 %v291, %v292
  %v294 = vrot.slane %v293, 1
  %v295 = vmax.f32 %v293, %v294
  %v296 = vsel %vm64, %v41, -inf
  %v297 = vrot.slane %v296, 4
  %v298 = vmax.f32 %v296, %v297
  %v299 = vrot.slane %v298, 2
  %v300 = vmax.f32 %v298, %v299
  %v301 = vrot.slane %v300, 1
  %v302 = vmax.f32 %v300, %v301
  %v303 = vsel %vm64, %v42, -inf
  %v304 = vrot.slane %v303, 4
  %v305 = vmax.f32 %v303, %v304
  %v306 = vrot.slane %v305, 2
  %v307 = vmax.f32 %v305, %v306
  %v308 = vrot.slane %v307, 1
  %v309 = vmax.f32 %v307, %v308
  %v310 = vsel %vm64, %v43, -inf
  %v311 = vrot.slane %v310, 4
  %v312 = vmax.f32 %v310, %v311
  %v313 = vrot.slane %v312, 2
  %v314 = vmax.f32 %v312, %v313
  %v315 = vrot.slane %v314, 1
  %v316 = vmax.f32 %v314, %v315
  %v317 = vsel %vm64, %v44, -inf
  %v318 = vrot.slane %v317, 4
  %v319 = vmax.f32 %v317, %v318
  %v320 = vrot.slane %v319, 2
  %v321 = vmax.f32 %v319, %v320
  %v322 = vrot.slane %v321, 1
  %v323 = vmax.f32 %v321, %v322
  %v324 = vsel %vm64, %v45, -inf
  %v325 = vrot.slane %v324, 4
  %v326 = vmax.f32 %v324, %v325
  %v327 = vrot.slane %v326, 2
  %v328 = vmax.f32 %v326, %v327
  %v329 = vrot.slane %v328, 1
  %v330 = vmax.f32 %v328, %v329
  %v331 = vsel %vm64, %v46, -inf
  %v332 = vrot.slane %v331, 4
  %v333 = vmax.f32 %v331, %v332
  %v334 = vrot.slane %v333, 2
  %v335 = vmax.f32 %v333, %v334
  %v336 = vrot.slane %v335, 1
  %v337 = vmax.f32 %v335, %v336
  %v338 = vsel %vm64, %v47, -inf
  %v339 = vrot.slane %v338, 4
  %v340 = vmax.f32 %v338, %v339
  %v341 = vrot.slane %v340, 2
  %v342 = vmax.f32 %v340, %v341
  %v343 = vrot.slane %v342, 1
  %v344 = vmax.f32 %v342, %v343
  %v345 = vsel %vm64, %v48, -inf
  %v346 = vrot.slane %v345, 4
  %v347 = vmax.f32 %v345, %v346
  %v348 = vrot.slane %v347, 2
  %v349 = vmax.f32 %v347, %v348
  %v350 = vrot.slane %v349, 1
  %v351 = vmax.f32 %v349, %v350
  %v352 = vsel %vm64, %v49, -inf
  %v353 = vrot.slane %v352, 4
  %v354 = vmax.f32 %v352, %v353
  %v355 = vrot.slane %v354, 2
  %v356 = vmax.f32 %v354, %v355
  %v357 = vrot.slane %v356, 1
  %v358 = vmax.f32 %v356, %v357
  %v359 = vsel %vm64, %v50, -inf
  %v360 = vrot.slane %v359, 4
  %v361 = vmax.f32 %v359, %v360
  %v362 = vrot.slane %v361, 2
  %v363 = vmax.f32 %v361, %v362
  %v364 = vrot.slane %v363, 1
  %v365 = vmax.f32 %v363, %v364
  %v366 = vsel %vm64, %v51, -inf
  %v367 = vrot.slane %v366, 4
  %v368 = vmax.f32 %v366, %v367
  %v369 = vrot.slane %v368, 2
  %v370 = vmax.f32 %v368, %v369
  %v371 = vrot.slane %v370, 1
  %v372 = vmax.f32 %v370, %v371
  %v373 = vsel %vm64, %v52, -inf
  %v374 = vrot.slane %v373, 4
  %v375 = vmax.f32 %v373, %v374
  %v376 = vrot.slane %v375, 2
  %v377 = vmax.f32 %v375, %v376
  %v378 = vrot.slane %v377, 1
  %v379 = vmax.f32 %v377, %v378
  %v380 = vsel %vm64, %v53, -inf
  %v381 = vrot.slane %v380, 4
  %v382 = vmax.f32 %v380, %v381
  %v383 = vrot.slane %v382, 2
  %v384 = vmax.f32 %v382, %v383
  %v385 = vrot.slane %v384, 1
  %v386 = vmax.f32 %v384, %v385
  %v387 = vsel %vm64, %v54, -inf
  %v388 = vrot.slane %v387, 4
  %v389 = vmax.f32 %v387, %v388
  %v390 = vrot.slane %v389, 2
  %v391 = vmax.f32 %v389, %v390
  %v392 = vrot.slane %v391, 1
  %v393 = vmax.f32 %v391, %v392
  %v394 = vsel %vm64, %v55, -inf
  %v395 = vrot.slane %v394, 4
  %v396 = vmax.f32 %v394, %v395
  %v397 = vrot.slane %v396, 2
  %v398 = vmax.f32 %v396, %v397
  %v399 = vrot.slane %v398, 1
  %v400 = vmax.f32 %v398, %v399
  %v401 = vsel %vm64, %v56, -inf
  %v402 = vrot.slane %v401, 4
  %v403 = vmax.f32 %v401, %v402
  %v404 = vrot.slane %v403, 2
  %v405 = vmax.f32 %v403, %v404
  %v406 = vrot.slane %v405, 1
  %v407 = vmax.f32 %v405, %v406
  %v408 = vsel %vm64, %v57, -inf
  %v409 = vrot.slane %v408, 4
  %v410 = vmax.f32 %v408, %v409
  %v411 = vrot.slane %v410, 2
  %v412 = vmax.f32 %v410, %v411
  %v413 = vrot.slane %v412, 1
  %v414 = vmax.f32 %v412, %v413
  %v415 = vsel %vm64, %v58, -inf
  %v416 = vrot.slane %v415, 4
  %v417 = vmax.f32 %v415, %v416
  %v418 = vrot.slane %v417, 2
  %v419 = vmax.f32 %v417, %v418
  %v420 = vrot.slane %v419, 1
  %v421 = vmax.f32 %v419, %v420
  %v422 = vsel %vm64, %v59, -inf
  %v423 = vrot.slane %v422, 4
  %v424 = vmax.f32 %v422, %v423
  %v425 = vrot.slane %v424, 2
  %v426 = vmax.f32 %v424, %v425
  %v427 = vrot.slane %v426, 1
  %v428 = vmax.f32 %v426, %v427
  %v429 = vsel %vm64, %v60, -inf
  %v430 = vrot.slane %v429, 4
  %v431 = vmax.f32 %v429, %v430
  %v432 = vrot.slane %v431, 2
  %v433 = vmax.f32 %v431, %v432
  %v434 = vrot.slane %v433, 1
  %v435 = vmax.f32 %v433, %v434
  %v436 = vsel %vm64, %v61, -inf
  %v437 = vrot.slane %v436, 4
  %v438 = vmax.f32 %v436, %v437
  %v439 = vrot.slane %v438, 2
  %v440 = vmax.f32 %v438, %v439
  %v441 = vrot.slane %v440, 1
  %v442 = vmax.f32 %v440, %v441
  %v443 = vsel %vm64, %v62, -inf
  %v444 = vrot.slane %v443, 4
  %v445 = vmax.f32 %v443, %v444
  %v446 = vrot.slane %v445, 2
  %v447 = vmax.f32 %v445, %v446
  %v448 = vrot.slane %v447, 1
  %v449 = vmax.f32 %v447, %v448
  %v450 = vsel %vm64, %v63, -inf
  %v451 = vrot.slane %v450, 4
  %v452 = vmax.f32 %v450, %v451
  %v453 = vrot.slane %v452, 2
  %v454 = vmax.f32 %v452, %v453
  %v455 = vrot.slane %v454, 1
  %v456 = vmax.f32 %v454, %v455
  %vm513 = vcmask 1041409
  %v514 = vsel %vm513, %v78, %v71
  %vm515 = vcmask 1042434
  %v516 = vsel %vm515, %v85, %v514
  %vm517 = vcmask 1043459
  %v518 = vsel %vm517, %v92, %v516
  %vm519 = vcmask 1044484
  %v520 = vsel %vm519, %v99, %v518
  %vm521 = vcmask 1045509
  %v522 = vsel %vm521, %v106, %v520
  %vm523 = vcmask 1046534
  %v524 = vsel %vm523, %v113, %v522
  %vm525 = vcmask 1047559
  %v526 = vsel %vm525, %v120, %v524
  %v527 = vsel %vm513, %v134, %v127
  %v528 = vsel %vm515, %v141, %v527
  %v529 = vsel %vm517, %v148, %v528
  %v530 = vsel %vm519, %v155, %v529
  %v531 = vsel %vm521, %v162, %v530
  %v532 = vsel %vm523, %v169, %v531
  %v533 = vsel %vm525, %v176, %v532
  %v534 = vsel %vm513, %v190, %v183
  %v535 = vsel %vm515, %v197, %v534
  %v536 = vsel %vm517, %v204, %v535
  %v537 = vsel %vm519, %v211, %v536
  %v538 = vsel %vm521, %v218, %v537
  %v539 = vsel %vm523, %v225, %v538
  %v540 = vsel %vm525, %v232, %v539
  %v541 = vsel %vm513, %v246, %v239
  %v542 = vsel %vm515, %v253, %v541
  %v543 = vsel %vm517, %v260, %v542
  %v544 = vsel %vm519, %v267, %v543
  %v545 = vsel %vm521, %v274, %v544
  %v546 = vsel %vm523, %v281, %v545
  %v547 = vsel %vm525, %v288, %v546
  %v548 = vsel %vm513, %v302, %v295
  %v549 = vsel %vm515, %v309, %v548
  %v550 = vsel %vm517, %v316, %v549
  %v551 = vsel %vm519, %v323, %v550
  %v552 = vsel %vm521, %v330, %v551
  %v553 = vsel %vm523, %v337, %v552
  %v554 = vsel %vm525, %v344, %v553
  %v555 = vsel %vm513, %v358, %v351
  %v556 = vsel %vm515, %v365, %v555
  %v557 = vsel %vm517, %v372, %v556
  %v558 = vsel %vm519, %v379, %v557
  %v559 = vsel %vm521, %v386, %v558
  %v560 = vsel %vm523, %v393, %v559
  %v561 = vsel %vm525, %v400, %v560
  %v562 = vsel %vm513, %v414, %v407
  %v563 = vsel %vm515, %v421, %v562
  %v564 = vsel %vm517, %v428, %v563
  %v565 = vsel %vm519, %v435, %v564
  %v566 = vsel %vm521, %v442, %v565
  %v567 = vsel %vm523, %v449, %v566
  %v568 = vsel %vm525, %v456, %v567
  %576 = vst [vmem:[%s1] sm:$0xff] %v526
  %577 = vst [vmem:[%s1 + $0x8] sm:$0xff] %v533
  %578 = vst [vmem:[%s1 + $0x10] sm:$0xff] %v540
  %579 = vst [vmem:[%s1 + $0x18] sm:$0xff] %v547
  %580 = vst [vmem:[%s1 + $0x20] sm:$0xff] %v554
  %581 = vst [vmem:[%s1 + $0x28] sm:$0xff] %v561
  %582 = vst [vmem:[%s1 + $0x30] sm:$0xff] %v568
  // Predicated region
  $region6: #{convnet_forward.8} parent=0 // pred_check
    _
  $region7: #{convnet_forward.8} parent=0 // pred_check_branch
    %584 = sbr.rel (0) target = $region9
  $region8: #{convnet_forward.8} parent=0 // pred_region
    _
  $region9: #{convnet_forward.8} parent=0 // pred_fallthru
    _
  // Predicated region
  $region10: #{convnet_forward.8} parent=0 // pred_check
    _
  $region11: #{convnet_forward.8} parent=0 // pred_check_branch
    %586 = sbr.rel (0) target = $region13
  $region12: #{convnet_forward.8} parent=0 // pred_region
    _
  $region13: #{convnet_forward.8} parent=0 // pred_fallthru
    _

// kernel: convnet_forward.9
$region0: #{convnet_forward.9}
  #allocation0 [shape = 'u32[]', space=smem, size = 0x4, offset = 0x4, fixed_abs, tag = 'smem constant byte address 0x4 - core index']
  #allocation1 [shape = 'u32[144,128]{1,0:T(1,128)}', space=vmem, size = 0x12000, scoped, tag = 'internal scratch']
  %s0 = inlined_call_operand.vmem [shape: f32[8,512], index: 0, kind: input, shape index: {}]
  %s1 = inlined_call_operand.vmem [shape: f32[512,128], index: 1, kind: input, shape index: {}]
  %s2 = inlined_call_operand.vmem [shape: f32[1,128], index: 2, kind: input, shape index: {}]
  %s3 = inlined_call_operand.vmem [shape: f32[128,128], index: 3, kind: input, shape index: {}]
  %s4 = inlined_call_operand.vmem [shape: f32[1,128], index: 4, kind: input, shape index: {}]
  %s5 = inlined_call_operand.vmem [shape: f32[128,128], index: 5, kind: input, shape index: {}]
  %s6 = inlined_call_operand.vmem [shape: f32[1,128], index: 6, kind: input, shape index: {}]
  %s7 = inlined_call_operand.vmem [shape: f32[8,128], index: 7, kind: output, shape index: {}]
  %s8 = sld [smem:[#allocation0]]
  $region38: #{convnet_forward.9} parent=0
    _
  %s10 = ssub.s32 1, %s8
  %s11 = scalar_select 0, %s10, %s8
  // Predicated region
  $region2: #{convnet_forward.9} parent=0 // pred_check
    _
  $region3: #{convnet_forward.9} parent=0 // pred_check_branch
    %13 = sbr.rel (0) target = $region5
  $region4: #{convnet_forward.9} parent=0 // pred_region
    _
  $region5: #{convnet_forward.9} parent=0 // pred_fallthru
    _
  // Predicated region
  $region6: #{convnet_forward.9} parent=0 // pred_check
    _
  $region7: #{convnet_forward.9} parent=0 // pred_check_branch
    %15 = sbr.rel (0) target = $region9
  $region8: #{convnet_forward.9} parent=0 // pred_region
    _
  $region9: #{convnet_forward.9} parent=0 // pred_fallthru
    _
  // Predicated region
  $region10: #{convnet_forward.9} parent=0 // pred_check
    _
  $region11: #{convnet_forward.9} parent=0 // pred_check_branch
    %17 = sbr.rel (0) target = $region13
  $region12: #{convnet_forward.9} parent=0 // pred_region
    _
  $region13: #{convnet_forward.9} parent=0 // pred_fallthru
    _
  // Predicated region
  $region14: #{convnet_forward.9} parent=0 // pred_check
    _
  $region15: #{convnet_forward.9} parent=0 // pred_check_branch
    %19 = sbr.rel (0) target = $region17
  $region16: #{convnet_forward.9} parent=0 // pred_region
    _
  $region17: #{convnet_forward.9} parent=0 // pred_fallthru
    _
  // Predicated region
  $region18: #{convnet_forward.9} parent=0 // pred_check
    _
  $region19: #{convnet_forward.9} parent=0 // pred_check_branch
    %21 = sbr.rel (0) target = $region21
  $region20: #{convnet_forward.9} parent=0 // pred_region
    _
  $region21: #{convnet_forward.9} parent=0 // pred_fallthru
    _
  // Predicated region
  $region22: #{convnet_forward.9} parent=0 // pred_check
    _
  $region23: #{convnet_forward.9} parent=0 // pred_check_branch
    %23 = sbr.rel (0) target = $region25
  $region24: #{convnet_forward.9} parent=0 // pred_region
    _
  $region25: #{convnet_forward.9} parent=0 // pred_fallthru
    _
  // Predicated region
  $region26: #{convnet_forward.9} parent=0 // pred_check
    _
  $region27: #{convnet_forward.9} parent=0 // pred_check_branch
    %25 = sbr.rel (0) target = $region29
  $region28: #{convnet_forward.9} parent=0 // pred_region
    _
  $region29: #{convnet_forward.9} parent=0 // pred_fallthru
    _
  %v26 = vld [vmem:[%s0] sm:$0xff]
  %v27 = vld [vmem:[%s0 + $0x8] sm:$0xff]
  %v28 = vld [vmem:[%s0 + $0x10] sm:$0xff]
  %v29 = vld [vmem:[%s0 + $0x18] sm:$0xff]
  %v30 = vld [vmem:[%s1] sm:$0xff]
  %v31 = vld [vmem:[%s1 + $0x8] sm:$0xff]
  %v32 = vld [vmem:[%s1 + $0x10] sm:$0xff]
  %v33 = vld [vmem:[%s1 + $0x18] sm:$0xff]
  %v34 = vld [vmem:[%s1 + $0x20] sm:$0xff]
  %v35 = vld [vmem:[%s1 + $0x28] sm:$0xff]
  %v36 = vld [vmem:[%s1 + $0x30] sm:$0xff]
  %v37 = vld [vmem:[%s1 + $0x38] sm:$0xff]
  %v38 = vld [vmem:[%s1 + $0x40] sm:$0xff]
  %v39 = vld [vmem:[%s1 + $0x48] sm:$0xff]
  %v40 = vld [vmem:[%s1 + $0x50] sm:$0xff]
  %v41 = vld [vmem:[%s1 + $0x58] sm:$0xff]
  %v42 = vld [vmem:[%s1 + $0x60] sm:$0xff]
  %v43 = vld [vmem:[%s1 + $0x68] sm:$0xff]
  %v44 = vld [vmem:[%s1 + $0x70] sm:$0xff]
  %v45 = vld [vmem:[%s1 + $0x78] sm:$0xff]
  %v46 = vld [vmem:[%s1 + $0x80] sm:$0xff]
  %v47 = vld [vmem:[%s1 + $0x88] sm:$0xff]
  %v48 = vld [vmem:[%s1 + $0x90] sm:$0xff]
  %v49 = vld [vmem:[%s1 + $0x98] sm:$0xff]
  %v50 = vld [vmem:[%s1 + $0xa0] sm:$0xff]
  %v51 = vld [vmem:[%s1 + $0xa8] sm:$0xff]
  %v52 = vld [vmem:[%s1 + $0xb0] sm:$0xff]
  %v53 = vld [vmem:[%s1 + $0xb8] sm:$0xff]
  %v54 = vld [vmem:[%s1 + $0xc0] sm:$0xff]
  %v55 = vld [vmem:[%s1 + $0xc8] sm:$0xff]
  %v56 = vld [vmem:[%s1 + $0xd0] sm:$0xff]
  %v57 = vld [vmem:[%s1 + $0xd8] sm:$0xff]
  %v58 = vld [vmem:[%s1 + $0xe0] sm:$0xff]
  %v59 = vld [vmem:[%s1 + $0xe8] sm:$0xff]
  %v60 = vld [vmem:[%s1 + $0xf0] sm:$0xff]
  %v61 = vld [vmem:[%s1 + $0xf8] sm:$0xff]
  %v62 = vld [vmem:[%s1 + $0x100] sm:$0xff]
  %v63 = vld [vmem:[%s1 + $0x108] sm:$0xff]
  %v64 = vld [vmem:[%s1 + $0x110] sm:$0xff]
  %v65 = vld [vmem:[%s1 + $0x118] sm:$0xff]
  %v66 = vld [vmem:[%s1 + $0x120] sm:$0xff]
  %v67 = vld [vmem:[%s1 + $0x128] sm:$0xff]
  %v68 = vld [vmem:[%s1 + $0x130] sm:$0xff]
  %v69 = vld [vmem:[%s1 + $0x138] sm:$0xff]
  %v70 = vld [vmem:[%s1 + $0x140] sm:$0xff]
  %v71 = vld [vmem:[%s1 + $0x148] sm:$0xff]
  %v72 = vld [vmem:[%s1 + $0x150] sm:$0xff]
  %v73 = vld [vmem:[%s1 + $0x158] sm:$0xff]
  %v74 = vld [vmem:[%s1 + $0x160] sm:$0xff]
  %v75 = vld [vmem:[%s1 + $0x168] sm:$0xff]
  %v76 = vld [vmem:[%s1 + $0x170] sm:$0xff]
  %v77 = vld [vmem:[%s1 + $0x178] sm:$0xff]
  %v78 = vld [vmem:[%s1 + $0x180] sm:$0xff]
  %v79 = vld [vmem:[%s1 + $0x188] sm:$0xff]
  %v80 = vld [vmem:[%s1 + $0x190] sm:$0xff]
  %v81 = vld [vmem:[%s1 + $0x198] sm:$0xff]
  %v82 = vld [vmem:[%s1 + $0x1a0] sm:$0xff]
  %v83 = vld [vmem:[%s1 + $0x1a8] sm:$0xff]
  %v84 = vld [vmem:[%s1 + $0x1b0] sm:$0xff]
  %v85 = vld [vmem:[%s1 + $0x1b8] sm:$0xff]
  %v86 = vld [vmem:[%s1 + $0x1c0] sm:$0xff]
  %v87 = vld [vmem:[%s1 + $0x1c8] sm:$0xff]
  %v88 = vld [vmem:[%s1 + $0x1d0] sm:$0xff]
  %v89 = vld [vmem:[%s1 + $0x1d8] sm:$0xff]
  %v90 = vld [vmem:[%s1 + $0x1e0] sm:$0xff]
  %v91 = vld [vmem:[%s1 + $0x1e8] sm:$0xff]
  %v92 = vld [vmem:[%s1 + $0x1f0] sm:$0xff]
  %v93 = vld [vmem:[%s1 + $0x1f8] sm:$0xff]
  %v94 = vld [vmem:[%s2] sm:$0x1]
  %v96 = vlaneseq
  %v97 = vshrl.u32 %v96, 7
  %v98 = vsub.s32 0, %v97
  %v99 = vrot.slane %v94, %v98
  %101 = vmatprep.subr.mxu0 0.0
  %102 = vmatpush1.msra.mxu0 %v45
  %103 = vmatprep.subr.mxu0 0.0
  %104 = vmatpush1.msra.mxu0 %v44
  %105 = vmatprep.subr.mxu0 0.0
  %106 = vmatpush1.msra.mxu0 %v43
  %107 = vmatprep.subr.mxu0 0.0
  %108 = vmatpush1.msra.mxu0 %v42
  %109 = vmatprep.subr.mxu0 0.0
  %110 = vmatpush1.msra.mxu0 %v41
  %111 = vmatprep.subr.mxu0 0.0
  %112 = vmatpush1.msra.mxu0 %v40
  %113 = vmatprep.subr.mxu0 0.0
  %114 = vmatpush1.msra.mxu0 %v39
  %115 = vmatprep.subr.mxu0 0.0
  %116 = vmatpush1.msra.mxu0 %v38
  %117 = vmatprep.subr.mxu0 0.0
  %118 = vmatpush1.msra.mxu0 %v37
  %119 = vmatprep.subr.mxu0 0.0
  %120 = vmatpush1.msra.mxu0 %v36
  %121 = vmatprep.subr.mxu0 0.0
  %122 = vmatpush1.msra.mxu0 %v35
  %123 = vmatprep.subr.mxu0 0.0
  %124 = vmatpush1.msra.mxu0 %v34
  %125 = vmatprep.subr.mxu0 0.0
  %126 = vmatpush1.msra.mxu0 %v33
  %127 = vmatprep.subr.mxu0 0.0
  %128 = vmatpush1.msra.mxu0 %v32
  %129 = vmatprep.subr.mxu0 0.0
  %130 = vmatpush1.msra.mxu0 %v31
  %131 = vmatprep.subr.mxu0 0.0
  %132 = vmatpush1.msra.mxu0 %v30
  %133 = vmatprep.subr.mxu0 0.0
  %134 = vmatpush2.msra.mxu0 %v61
  %135 = vmatprep.subr.mxu0 0.0
  %136 = vmatpush2.msra.mxu0 %v60
  %137 = vmatprep.subr.mxu0 0.0
  %138 = vmatpush2.msra.mxu0 %v59
  %139 = vmatprep.subr.mxu0 0.0
  %140 = vmatpush2.msra.mxu0 %v58
  %141 = vmatprep.subr.mxu0 0.0
  %142 = vmatpush2.msra.mxu0 %v57
  %143 = vmatprep.subr.mxu0 0.0
  %144 = vmatpush2.msra.mxu0 %v56
  %145 = vmatprep.subr.mxu0 0.0
  %146 = vmatpush2.msra.mxu0 %v55
  %147 = vmatprep.subr.mxu0 0.0
  %148 = vmatpush2.msra.mxu0 %v54
  %149 = vmatprep.subr.mxu0 0.0
  %150 = vmatpush2.msra.mxu0 %v53
  %151 = vmatprep.subr.mxu0 0.0
  %152 = vmatpush2.msra.mxu0 %v52
  %153 = vmatprep.subr.mxu0 0.0
  %154 = vmatpush2.msra.mxu0 %v51
  %155 = vmatprep.subr.mxu0 0.0
  %156 = vmatpush2.msra.mxu0 %v50
  %157 = vmatprep.subr.mxu0 0.0
  %158 = vmatpush2.msra.mxu0 %v49
  %159 = vmatprep.subr.mxu0 0.0
  %160 = vmatpush2.msra.mxu0 %v48
  %161 = vmatprep.subr.mxu0 0.0
  %162 = vmatpush2.msra.mxu0 %v47
  %163 = vmatprep.subr.mxu0 0.0
  %164 = vmatpush2.msra.mxu0 %v46
  %165 = vmatprep.mubr.f32.mxu0 %v27
  %166 = vmatmul.mubr.f32.gmra.mxu0 %v26
  %v167 = vpop.f32.mrf.mxu0
  %v168 = vadd.f32 %v99, %v167
  %v169 = vpop.f32.mrf.mxu0
  %170 = vdwg.mxu0
  %171 = vmatprep.subr.mxu0 0.0
  %172 = vmatpush1.msra.mxu0 %v77
  %173 = vmatprep.subr.mxu0 0.0
  %174 = vmatpush1.msra.mxu0 %v76
  %175 = vmatprep.subr.mxu0 0.0
  %176 = vmatpush1.msra.mxu0 %v75
  %177 = vmatprep.subr.mxu0 0.0
  %178 = vmatpush1.msra.mxu0 %v74
  %179 = vmatprep.subr.mxu0 0.0
  %180 = vmatpush1.msra.mxu0 %v73
  %181 = vmatprep.subr.mxu0 0.0
  %182 = vmatpush1.msra.mxu0 %v72
  %183 = vmatprep.subr.mxu0 0.0
  %184 = vmatpush1.msra.mxu0 %v71
  %185 = vmatprep.subr.mxu0 0.0
  %186 = vmatpush1.msra.mxu0 %v70
  %187 = vmatprep.subr.mxu0 0.0
  %188 = vmatpush1.msra.mxu0 %v69
  %189 = vmatprep.subr.mxu0 0.0
  %190 = vmatpush1.msra.mxu0 %v68
  %191 = vmatprep.subr.mxu0 0.0
  %192 = vmatpush1.msra.mxu0 %v67
  %193 = vmatprep.subr.mxu0 0.0
  %194 = vmatpush1.msra.mxu0 %v66
  %195 = vmatprep.subr.mxu0 0.0
  %196 = vmatpush1.msra.mxu0 %v65
  %197 = vmatprep.subr.mxu0 0.0
  %198 = vmatpush1.msra.mxu0 %v64
  %199 = vmatprep.subr.mxu0 0.0
  %200 = vmatpush1.msra.mxu0 %v63
  %201 = vmatprep.subr.mxu0 0.0
  %202 = vmatpush1.msra.mxu0 %v62
  %203 = vmatprep.subr.mxu0 0.0
  %204 = vmatpush2.msra.mxu0 %v93
  %205 = vmatprep.subr.mxu0 0.0
  %206 = vmatpush2.msra.mxu0 %v92
  %207 = vmatprep.subr.mxu0 0.0
  %208 = vmatpush2.msra.mxu0 %v91
  %209 = vmatprep.subr.mxu0 0.0
  %210 = vmatpush2.msra.mxu0 %v90
  %211 = vmatprep.subr.mxu0 0.0
  %212 = vmatpush2.msra.mxu0 %v89
  %213 = vmatprep.subr.mxu0 0.0
  %214 = vmatpush2.msra.mxu0 %v88
  %215 = vmatprep.subr.mxu0 0.0
  %216 = vmatpush2.msra.mxu0 %v87
  %217 = vmatprep.subr.mxu0 0.0
  %218 = vmatpush2.msra.mxu0 %v86
  %219 = vmatprep.subr.mxu0 0.0
  %220 = vmatpush2.msra.mxu0 %v85
  %221 = vmatprep.subr.mxu0 0.0
  %222 = vmatpush2.msra.mxu0 %v84
  %223 = vmatprep.subr.mxu0 0.0
  %224 = vmatpush2.msra.mxu0 %v83
  %225 = vmatprep.subr.mxu0 0.0
  %226 = vmatpush2.msra.mxu0 %v82
  %227 = vmatprep.subr.mxu0 0.0
  %228 = vmatpush2.msra.mxu0 %v81
  %229 = vmatprep.subr.mxu0 0.0
  %230 = vmatpush2.msra.mxu0 %v80
  %231 = vmatprep.subr.mxu0 0.0
  %232 = vmatpush2.msra.mxu0 %v79
  %233 = vmatprep.subr.mxu0 0.0
  %234 = vmatpush2.msra.mxu0 %v78
  %235 = vmatprep.mubr.f32.mxu0 %v29
  %236 = vmatmul.mubr.f32.gmra.mxu0 %v28
  %v237 = vpop.f32.mrf.mxu0
  %v238 = vadd.f32 %v168, %v237
  %v239 = vpop.f32.mrf.mxu0
  %240 = vdwg.mxu0
  %v241 = vmax.f32 %v238, 0.0
  %v242 = vld [vmem:[%s3] sm:$0xff]
  %v243 = vld [vmem:[%s3 + $0x8] sm:$0xff]
  %v244 = vld [vmem:[%s3 + $0x10] sm:$0xff]
  %v245 = vld [vmem:[%s3 + $0x18] sm:$0xff]
  %v246 = vld [vmem:[%s3 + $0x20] sm:$0xff]
  %v247 = vld [vmem:[%s3 + $0x28] sm:$0xff]
  %v248 = vld [vmem:[%s3 + $0x30] sm:$0xff]
  %v249 = vld [vmem:[%s3 + $0x38] sm:$0xff]
  %v250 = vld [vmem:[%s3 + $0x40] sm:$0xff]
  %v251 = vld [vmem:[%s3 + $0x48] sm:$0xff]
  %v252 = vld [vmem:[%s3 + $0x50] sm:$0xff]
  %v253 = vld [vmem:[%s3 + $0x58] sm:$0xff]
  %v254 = vld [vmem:[%s3 + $0x60] sm:$0xff]
  %v255 = vld [vmem:[%s3 + $0x68] sm:$0xff]
  %v256 = vld [vmem:[%s3 + $0x70] sm:$0xff]
  %v257 = vld [vmem:[%s3 + $0x78] sm:$0xff]
  %v258 = vld [vmem:[%s4] sm:$0x1]
  %v260 = vlaneseq
  %v261 = vshrl.u32 %v260, 7
  %v262 = vsub.s32 0, %v261
  %v263 = vrot.slane %v258, %v262
  %265 = vmatprep.subr.mxu0 0.0
  %266 = vmatpush1.msra.mxu0 %v257
  %267 = vmatprep.subr.mxu0 0.0
  %268 = vmatpush1.msra.mxu0 %v256
  %269 = vmatprep.subr.mxu0 0.0
  %270 = vmatpush1.msra.mxu0 %v255
  %271 = vmatprep.subr.mxu0 0.0
  %272 = vmatpush1.msra.mxu0 %v254
  %273 = vmatprep.subr.mxu0 0.0
  %274 = vmatpush1.msra.mxu0 %v253
  %275 = vmatprep.subr.mxu0 0.0
  %276 = vmatpush1.msra.mxu0 %v252
  %277 = vmatprep.subr.mxu0 0.0
  %278 = vmatpush1.msra.mxu0 %v251
  %279 = vmatprep.subr.mxu0 0.0
  %280 = vmatpush1.msra.mxu0 %v250
  %281 = vmatprep.subr.mxu0 0.0
  %282 = vmatpush1.msra.mxu0 %v249
  %283 = vmatprep.subr.mxu0 0.0
  %284 = vmatpush1.msra.mxu0 %v248
  %285 = vmatprep.subr.mxu0 0.0
  %286 = vmatpush1.msra.mxu0 %v247
  %287 = vmatprep.subr.mxu0 0.0
  %288 = vmatpush1.msra.mxu0 %v246
  %289 = vmatprep.subr.mxu0 0.0
  %290 = vmatpush1.msra.mxu0 %v245
  %291 = vmatprep.subr.mxu0 0.0
  %292 = vmatpush1.msra.mxu0 %v244
  %293 = vmatprep.subr.mxu0 0.0
  %294 = vmatpush1.msra.mxu0 %v243
  %295 = vmatprep.subr.mxu0 0.0
  %296 = vmatpush1.msra.mxu0 %v242
  %297 = vmatprep.subr.mxu0 0.0
  %298 = vmatpush2.msra.mxu0 0.0
  %299 = vmatprep.subr.mxu0 0.0
  %300 = vmatpush2.msra.mxu0 0.0
  %301 = vmatprep.subr.mxu0 0.0
  %302 = vmatpush2.msra.mxu0 0.0
  %303 = vmatprep.subr.mxu0 0.0
  %304 = vmatpush2.msra.mxu0 0.0
  %305 = vmatprep.subr.mxu0 0.0
  %306 = vmatpush2.msra.mxu0 0.0
  %307 = vmatprep.subr.mxu0 0.0
  %308 = vmatpush2.msra.mxu0 0.0
  %309 = vmatprep.subr.mxu0 0.0
  %310 = vmatpush2.msra.mxu0 0.0
  %311 = vmatprep.subr.mxu0 0.0
  %312 = vmatpush2.msra.mxu0 0.0
  %313 = vmatprep.subr.mxu0 0.0
  %314 = vmatpush2.msra.mxu0 0.0
  %315 = vmatprep.subr.mxu0 0.0
  %316 = vmatpush2.msra.mxu0 0.0
  %317 = vmatprep.subr.mxu0 0.0
  %318 = vmatpush2.msra.mxu0 0.0
  %319 = vmatprep.subr.mxu0 0.0
  %320 = vmatpush2.msra.mxu0 0.0
  %321 = vmatprep.subr.mxu0 0.0
  %322 = vmatpush2.msra.mxu0 0.0
  %323 = vmatprep.subr.mxu0 0.0
  %324 = vmatpush2.msra.mxu0 0.0
  %325 = vmatprep.subr.mxu0 0.0
  %326 = vmatpush2.msra.mxu0 0.0
  %327 = vmatprep.subr.mxu0 0.0
  %328 = vmatpush2.msra.mxu0 0.0
  %329 = vmatprep.mubr.f32.mxu0 0.0
  %330 = vmatmul.mubr.f32.gmra.mxu0 %v241
  %v331 = vpop.f32.mrf.mxu0
  %v332 = vadd.f32 %v263, %v331
  %v333 = vpop.f32.mrf.mxu0
  %334 = vdwg.mxu0
  %v335 = vmax.f32 %v332, 0.0
  %v336 = vld [vmem:[%s5] sm:$0xff]
  %v337 = vld [vmem:[%s5 + $0x8] sm:$0xff]
  %v338 = vld [vmem:[%s5 + $0x10] sm:$0xff]
  %v339 = vld [vmem:[%s5 + $0x18] sm:$0xff]
  %v340 = vld [vmem:[%s5 + $0x20] sm:$0xff]
  %v341 = vld [vmem:[%s5 + $0x28] sm:$0xff]
  %v342 = vld [vmem:[%s5 + $0x30] sm:$0xff]
  %v343 = vld [vmem:[%s5 + $0x38] sm:$0xff]
  %v344 = vld [vmem:[%s5 + $0x40] sm:$0xff]
  %v345 = vld [vmem:[%s5 + $0x48] sm:$0xff]
  %v346 = vld [vmem:[%s5 + $0x50] sm:$0xff]
  %v347 = vld [vmem:[%s5 + $0x58] sm:$0xff]
  %v348 = vld [vmem:[%s5 + $0x60] sm:$0xff]
  %v349 = vld [vmem:[%s5 + $0x68] sm:$0xff]
  %v350 = vld [vmem:[%s5 + $0x70] sm:$0xff]
  %v351 = vld [vmem:[%s5 + $0x78] sm:$0xff]
  %v352 = vld [vmem:[%s6] sm:$0x1]
  %v354 = vlaneseq
  %v355 = vshrl.u32 %v354, 7
  %v356 = vsub.s32 0, %v355
  %v357 = vrot.slane %v352, %v356
  %359 = vmatprep.subr.mxu0 0.0
  %360 = vmatpush1.msra.mxu0 %v351
  %361 = vmatprep.subr.mxu0 0.0
  %362 = vmatpush1.msra.mxu0 %v350
  %363 = vmatprep.subr.mxu0 0.0
  %364 = vmatpush1.msra.mxu0 %v349
  %365 = vmatprep.subr.mxu0 0.0
  %366 = vmatpush1.msra.mxu0 %v348
  %367 = vmatprep.subr.mxu0 0.0
  %368 = vmatpush1.msra.mxu0 %v347
  %369 = vmatprep.subr.mxu0 0.0
  %370 = vmatpush1.msra.mxu0 %v346
  %371 = vmatprep.subr.mxu0 0.0
  %372 = vmatpush1.msra.mxu0 %v345
  %373 = vmatprep.subr.mxu0 0.0
  %374 = vmatpush1.msra.mxu0 %v344
  %375 = vmatprep.subr.mxu0 0.0
  %376 = vmatpush1.msra.mxu0 %v343
  %377 = vmatprep.subr.mxu0 0.0
  %378 = vmatpush1.msra.mxu0 %v342
  %379 = vmatprep.subr.mxu0 0.0
  %380 = vmatpush1.msra.mxu0 %v341
  %381 = vmatprep.subr.mxu0 0.0
  %382 = vmatpush1.msra.mxu0 %v340
  %383 = vmatprep.subr.mxu0 0.0
  %384 = vmatpush1.msra.mxu0 %v339
  %385 = vmatprep.subr.mxu0 0.0
  %386 = vmatpush1.msra.mxu0 %v338
  %387 = vmatprep.subr.mxu0 0.0
  %388 = vmatpush1.msra.mxu0 %v337
  %389 = vmatprep.subr.mxu0 0.0
  %390 = vmatpush1.msra.mxu0 %v336
  %391 = vmatprep.subr.mxu0 0.0
  %392 = vmatpush2.msra.mxu0 0.0
  %393 = vmatprep.subr.mxu0 0.0
  %394 = vmatpush2.msra.mxu0 0.0
  %395 = vmatprep.subr.mxu0 0.0
  %396 = vmatpush2.msra.mxu0 0.0
  %397 = vmatprep.subr.mxu0 0.0
  %398 = vmatpush2.msra.mxu0 0.0
  %399 = vmatprep.subr.mxu0 0.0
  %400 = vmatpush2.msra.mxu0 0.0
  %401 = vmatprep.subr.mxu0 0.0
  %402 = vmatpush2.msra.mxu0 0.0
  %403 = vmatprep.subr.mxu0 0.0
  %404 = vmatpush2.msra.mxu0 0.0
  %405 = vmatprep.subr.mxu0 0.0
  %406 = vmatpush2.msra.mxu0 0.0
  %407 = vmatprep.subr.mxu0 0.0
  %408 = vmatpush2.msra.mxu0 0.0
  %409 = vmatprep.subr.mxu0 0.0
  %410 = vmatpush2.msra.mxu0 0.0
  %411 = vmatprep.subr.mxu0 0.0
  %412 = vmatpush2.msra.mxu0 0.0
  %413 = vmatprep.subr.mxu0 0.0
  %414 = vmatpush2.msra.mxu0 0.0
  %415 = vmatprep.subr.mxu0 0.0
  %416 = vmatpush2.msra.mxu0 0.0
  %417 = vmatprep.subr.mxu0 0.0
  %418 = vmatpush2.msra.mxu0 0.0
  %419 = vmatprep.subr.mxu0 0.0
  %420 = vmatpush2.msra.mxu0 0.0
  %421 = vmatprep.subr.mxu0 0.0
  %422 = vmatpush2.msra.mxu0 0.0
  %423 = vmatprep.mubr.f32.mxu0 0.0
  %424 = vmatmul.mubr.f32.gmra.mxu0 %v335
  %v425 = vpop.f32.mrf.mxu0
  %v426 = vadd.f32 %v357, %v425
  %v427 = vpop.f32.mrf.mxu0
  %428 = vdwg.mxu0
  %429 = vst [vmem:[%s7] sm:$0xff] %v426
  // Predicated region
  $region30: #{convnet_forward.9} parent=0 // pred_check
    _
  $region31: #{convnet_forward.9} parent=0 // pred_check_branch
    %431 = sbr.rel (0) target = $region33
  $region32: #{convnet_forward.9} parent=0 // pred_region
    _
  $region33: #{convnet_forward.9} parent=0 // pred_fallthru
    _
  // Predicated region
  $region34: #{convnet_forward.9} parent=0 // pred_check
    _
  $region35: #{convnet_forward.9} parent=0 // pred_check_branch
    %433 = sbr.rel (0) target = $region37
  $region36: #{convnet_forward.9} parent=0 // pred_region
    _
  $region37: #{convnet_forward.9} parent=0 // pred_fallthru
    _

</llo_original>
